<compile_context>
chip_gen: v5e
topology: v5e:2x2
jax: 0.10.0
libtpu: 0.0.40
codegen_flags: <defaults>
</compile_context>

<pallas_src>
import functools

import jax
import jax.numpy as jnp
from jax.experimental import pallas as pl
from jax.experimental.pallas import tpu as pltpu

_KSIZE = 4
_PAD = 2


def _round_up(x, m):
    return ((x + m - 1) // m) * m


# ------------- Pallas kernel: W @ patches (+ bias / InstanceNorm / LReLU) ---
def _conv_block_kernel(w_ref, b_ref, a_ref, o_ref, *, hw, fuse_norm,
                       fuse_lrelu, eps, slope):
    """One batch element: out = W (Cout_p, K) @ patches (K, M_pad) + epilogue.

    Output rows are (channel) instances, so InstanceNorm statistics are plain
    per-row reductions.  Padded lanes/rows of `patches`/`W` are zero, hence
    lane sums over the padded block equal the sums over the `hw` real lanes.
    """
    acc = jnp.dot(w_ref[...], a_ref[...], preferred_element_type=jnp.float32)
    if fuse_norm:
        # InstanceNorm (biased variance, no affine).  The conv bias is a
        # per-row constant and cancels exactly under mean subtraction.
        inv_hw = jnp.float32(1.0 / hw)
        mu = jnp.sum(acc, axis=-1, keepdims=True) * inv_hw
        var = jnp.sum(acc * acc, axis=-1, keepdims=True) * inv_hw - mu * mu
        y = (acc - mu) * jax.lax.rsqrt(var + jnp.float32(eps))
    else:
        y = acc + b_ref[...]
    if fuse_lrelu:
        y = jnp.maximum(y, y * jnp.float32(slope))
    o_ref[...] = y.astype(o_ref.dtype)


def conv3d_block(x, w, b, *, stride, fuse_norm=False, fuse_lrelu=False,
                 eps=1e-5, negative_slope=0.01, matmul_dtype=jnp.bfloat16):
    """Conv3d(k=4, reflect pad=2, stride) [+ InstanceNorm] [+ LeakyReLU].

    x: (B, Cin, D, H, W); w: (Cout, Cin, 4, 4, 4); b: (Cout,).
    Lowered to reflect-pad + im2col (pure XLA slicing glue, zero FLOPs) and a
    single Pallas kernel per network block, oriented (Cout, M) so the spatial
    dim is lane-dense.
    """
    bsz, cin, d, h, wd = x.shape
    cout = w.shape[0]
    xp = jnp.pad(x, ((0, 0), (0, 0), (_PAD, _PAD), (_PAD, _PAD), (_PAD, _PAD)),
                 mode="reflect")
    do = (d + 2 * _PAD - _KSIZE) // stride + 1
    ho = (h + 2 * _PAD - _KSIZE) // stride + 1
    wo = (wd + 2 * _PAD - _KSIZE) // stride + 1

    # TODO(synk): for realistic (64^3+) volumes, fuse the patch gather into the
    # kernel (implicit GEMM over the 64 taps) instead of materialising im2col.
    cols = []
    for kd in range(_KSIZE):
        for kh in range(_KSIZE):
            for kw in range(_KSIZE):
                cols.append(xp[:, :,
                               kd:kd + stride * (do - 1) + 1:stride,
                               kh:kh + stride * (ho - 1) + 1:stride,
                               kw:kw + stride * (wo - 1) + 1:stride])
    k = cin * _KSIZE ** 3
    m = do * ho * wo
    patches = jnp.stack(cols, axis=2).reshape(bsz, k, m)       # (B, K, M)

    k_pad = _round_up(k, 128)     # K = Cin*64 is already 128-aligned here
    m_pad = _round_up(m, 128)     # lane-dense output
    cout_p = _round_up(cout, 8)   # sublane-aligned output rows

    patches = jnp.pad(patches.astype(matmul_dtype),
                      ((0, 0), (0, k_pad - k), (0, m_pad - m)))
    w_mat = jnp.pad(w.reshape(cout, k).astype(matmul_dtype),
                    ((0, cout_p - cout), (0, k_pad - k)))
    b_mat = jnp.pad(b.astype(jnp.float32).reshape(cout, 1),
                    ((0, cout_p - cout), (0, 0)))

    kernel = functools.partial(_conv_block_kernel, hw=m, fuse_norm=fuse_norm,
                               fuse_lrelu=fuse_lrelu, eps=eps,
                               slope=negative_slope)
    bytes_in = (patches.size * patches.dtype.itemsize
                + w_mat.size * w_mat.dtype.itemsize + b_mat.size * 4)
    bytes_out = bsz * cout_p * m_pad * 4
    out = pl.pallas_call(
        kernel,
        out_shape=jax.ShapeDtypeStruct((bsz, cout_p, m_pad), jnp.float32),
        grid_spec=pltpu.PrefetchScalarGridSpec(
            num_scalar_prefetch=0,
            grid=(bsz,),
            in_specs=[
                pl.BlockSpec((cout_p, k_pad), lambda i: (0, 0)),
                pl.BlockSpec((cout_p, 1), lambda i: (0, 0)),
                pl.BlockSpec((None, k_pad, m_pad), lambda i: (i, 0, 0)),
            ],
            out_specs=pl.BlockSpec((None, cout_p, m_pad), lambda i: (i, 0, 0)),
        ),
        compiler_params=pltpu.CompilerParams(
            dimension_semantics=("parallel",)),
        cost_estimate=pl.CostEstimate(
            flops=2 * bsz * cout_p * k_pad * m_pad,
            transcendentals=0,
            bytes_accessed=int(bytes_in + bytes_out)),
    )(w_mat, b_mat, patches)
    return out[:, :cout, :m].reshape(bsz, cout, do, ho, wo)


# ---------------- Network definition (matches the PyTorch module) -----------
def build_end_activation(x, activation=None, alpha=None):
    if activation == "softmax":
        return jax.nn.softmax(x, axis=1)
    if activation == "sigmoid":
        return jax.nn.sigmoid(x)
    if activation == "elu":
        return jax.nn.elu(x, alpha=0.01 if alpha is None else alpha)
    if activation == "lrelu":
        a = 0.01 if alpha is None else alpha
        return jnp.where(x >= 0, x, a * x)
    if activation == "relu":
        return jax.nn.relu(x)
    if activation == "tanh":
        return jnp.tanh(x)
    return x


def init_params(key, in_channel, basedim=8, depth=2):
    chans = [(in_channel, basedim)]
    for dpt in range(depth):
        chans.append((basedim * 2 ** dpt, basedim * 2 ** (dpt + 1)))
    chans.append((basedim * 2 ** depth, 1))
    params = []
    for cin, cout in chans:
        key, k_w, k_b = jax.random.split(key, 3)
        fan_in = cin * _KSIZE ** 3
        w = jax.random.normal(k_w, (cout, cin, _KSIZE, _KSIZE, _KSIZE),
                              jnp.float32) / jnp.sqrt(jnp.float32(fan_in))
        b = jax.random.normal(k_b, (cout,), jnp.float32) * 0.01
        params.append((w, b))
    return params


def adverserial_forward(params, x, *, activation_function=None,
                        matmul_dtype=jnp.bfloat16):
    """Mirrors AdverserialNetwork.forward: returns (prob, features)."""
    features = []
    # Block 0: Conv(stride 2, reflect) + LeakyReLU (fused).
    w, b = params[0]
    x = conv3d_block(x, w, b, stride=2, fuse_norm=False, fuse_lrelu=True,
                     matmul_dtype=matmul_dtype)
    features.append(x)
    # Middle blocks: Conv(stride 2, reflect) + InstanceNorm + LeakyReLU (fused).
    for w, b in params[1:-1]:
        x = conv3d_block(x, w, b, stride=2, fuse_norm=True, fuse_lrelu=True,
                         matmul_dtype=matmul_dtype)
        features.append(x)
    # Final: Conv(stride 1, reflect), no norm / activation.
    w, b = params[-1]
    x = conv3d_block(x, w, b, stride=1, fuse_norm=False, fuse_lrelu=False,
                     matmul_dtype=matmul_dtype)
    features.append(x)
    prob = build_end_activation(x, activation_function)
    return prob, features
# TODO(synk): the torch.optim.Adam optimizer attached in __init__ is training
# state, not part of the forward pass, and is not translated.


# ---------------- Pure-JAX reference (independent path, for validation) -----
# The reference uses lax.conv_general_dilated with the SAME bf16 operand
# precision (f32 accumulation) so the comparison isolates kernel correctness;
# the bf16 cast itself is the documented MXU-native deviation from f32 torch.
def _conv3d_ref(x, w, b, stride, matmul_dtype):
    xp = jnp.pad(x, ((0, 0), (0, 0), (2, 2), (2, 2), (2, 2)), mode="reflect")
    out = jax.lax.conv_general_dilated(
        xp.astype(matmul_dtype), w.astype(matmul_dtype),
        window_strides=(stride, stride, stride), padding="VALID",
        dimension_numbers=("NCDHW", "OIDHW", "NCDHW"),
        preferred_element_type=jnp.float32)
    return out + b.reshape(1, -1, 1, 1, 1).astype(jnp.float32)


def _lrelu_ref(v, a=0.01):
    return jnp.where(v >= 0, v, a * v)


def _inorm_ref(v, eps=1e-5):
    mu = jnp.mean(v, axis=(2, 3, 4), keepdims=True)
    var = jnp.mean((v - mu) ** 2, axis=(2, 3, 4), keepdims=True)
    return (v - mu) / jnp.sqrt(var + eps)


def reference_forward(params, x, activation_function=None,
                      matmul_dtype=jnp.bfloat16):
    feats = []
    w, b = params[0]
    x = _lrelu_ref(_conv3d_ref(x, w, b, 2, matmul_dtype))
    feats.append(x)
    for w, b in params[1:-1]:
        x = _lrelu_ref(_inorm_ref(_conv3d_ref(x, w, b, 2, matmul_dtype)))
        feats.append(x)
    w, b = params[-1]
    x = _conv3d_ref(x, w, b, 1, matmul_dtype)
    feats.append(x)
    return build_end_activation(x, activation_function), feats


if __name__ == "__main__":
    key = jax.random.PRNGKey(0)
    k_params, k_x = jax.random.split(key)

    B, C_IN, S = 2, 4, 16
    x = jax.random.normal(k_x, (B, C_IN, S, S, S), dtype=jnp.float32)
    params = init_params(k_params, C_IN, basedim=8, depth=2)

    fwd = jax.jit(functools.partial(adverserial_forward,
                                    activation_function=None))
    prob, features = fwd(params, x)
    prob = jax.block_until_ready(prob)
    features = jax.block_until_ready(features)

    # Shape / sanity checks (16 -> 9 -> 5 -> 3 -> 4 spatial).
    assert prob.shape == (B, 1, 4, 4, 4), prob.shape
    assert len(features) == 4
    assert all(bool(jnp.all(jnp.isfinite(f))) for f in features)

    # Validate against an independent pure-JAX implementation at matched
    # (bf16-operand, f32-accumulate) precision.
    prob_ref, feats_ref = reference_forward(params, x, None)
    for got, want in zip(features + [prob], feats_ref + [prob_ref]):
        assert got.shape == want.shape, (got.shape, want.shape)
        assert bool(jnp.allclose(got, want, atol=2e-3, rtol=2e-3)), (
            "max abs diff %g" % float(jnp.max(jnp.abs(got - want))))

    print("KERNEL_OK")
</pallas_src>

<mosaic_0001>
module attributes {stable_mosaic.version = 11 : i64} {
  func.func @_conv_block_kernel(%arg0: i32, %arg1: memref<8x256xbf16, #tpu.memory_space<vmem>>, %arg2: memref<8x1xf32, #tpu.memory_space<vmem>>, %arg3: memref<1x256x768xbf16, #tpu.memory_space<vmem>>, %arg4: memref<1x8x768xf32, #tpu.memory_space<vmem>>) attributes {dimension_semantics = [#tpu.dimension_semantics<parallel>], iteration_bounds = array<i64: 2>, scalar_prefetch = 0 : i64, scratch_operands = 0 : i64, tpu.core_type = #tpu.core_type<tc>, window_params = [{pipeline_mode = #tpu.pipeline_mode<synchronous>, transform_indices = @transform_0, window_bounds = array<i64: 8, 256>}, {pipeline_mode = #tpu.pipeline_mode<synchronous>, transform_indices = @transform_1, window_bounds = array<i64: 8, 1>}, {transform_indices = @transform_2, window_bounds = array<i64: 1, 256, 768>}, {transform_indices = @transform_3, window_bounds = array<i64: 1, 8, 768>}]} {
    %c0 = arith.constant 0 : index
    %c0_0 = arith.constant 0 : index
    %0 = vector.load %arg1[%c0, %c0_0] : memref<8x256xbf16, #tpu.memory_space<vmem>>, vector<8x256xbf16>
    %c0_1 = arith.constant 0 : index
    %c0_2 = arith.constant 0 : index
    %c0_3 = arith.constant 0 : index
    %1 = vector.load %arg3[%c0_1, %c0_2, %c0_3] : memref<1x256x768xbf16, #tpu.memory_space<vmem>>, vector<1x256x768xbf16>
    %2 = vector.shape_cast %1 : vector<1x256x768xbf16> to vector<256x768xbf16>
    %cst = arith.constant dense<0.000000e+00> : vector<8x768xf32>
    %3 = tpu.matmul %0, %2, %cst {dimension_numbers = #tpu.dot_dimension_numbers<[1], [0], [0], [1], [0, 0, 1, 1], [], []>} : vector<8x256xbf16>, vector<256x768xbf16>, vector<8x768xf32> -> vector<8x768xf32>
    %c0_4 = arith.constant 0 : index
    %c0_5 = arith.constant 0 : index
    %4 = vector.load %arg2[%c0_4, %c0_5] : memref<8x1xf32, #tpu.memory_space<vmem>>, vector<8x1xf32>
    %5 = vector.broadcast %4 : vector<8x1xf32> to vector<8x768xf32>
    %6 = arith.addf %3, %5 : vector<8x768xf32>
    %cst_6 = arith.constant 0.00999999977 : f32
    %7 = vector.broadcast %cst_6 : f32 to vector<8x768xf32>
    %8 = arith.mulf %6, %7 : vector<8x768xf32>
    %9 = arith.maximumf %6, %8 : vector<8x768xf32>
    %c0_7 = arith.constant 0 : index
    %c0_8 = arith.constant 0 : index
    %c0_9 = arith.constant 0 : index
    %10 = vector.load %arg4[%c0_7, %c0_8, %c0_9] : memref<1x8x768xf32, #tpu.memory_space<vmem>>, vector<1x8x768xf32>
    %11 = vector.shape_cast %10 : vector<1x8x768xf32> to vector<8x768xf32>
    %12 = vector.shape_cast %9 : vector<8x768xf32> to vector<1x8x768xf32>
    tpu.vector_store %arg4[%c0_7, %c0_8, %c0_9], %12 {strides = array<i32>} : memref<1x8x768xf32, #tpu.memory_space<vmem>>, vector<1x8x768xf32>,
    return
  }
  func.func @transform_0(%arg0: i32) -> (i32, i32) {
    %c0_i32 = arith.constant 0 : i32
    %c0_i32_0 = arith.constant 0 : i32
    %c0_i32_1 = arith.constant 0 : i32
    return %c0_i32, %c0_i32_0 : i32, i32
  }
  func.func @transform_1(%arg0: i32) -> (i32, i32) {
    %c0_i32 = arith.constant 0 : i32
    %c0_i32_0 = arith.constant 0 : i32
    %c0_i32_1 = arith.constant 0 : i32
    return %c0_i32, %c0_i32_0 : i32, i32
  }
  func.func @transform_2(%arg0: i32) -> (i32, i32, i32) {
    %c0_i32 = arith.constant 0 : i32
    %c0_i32_0 = arith.constant 0 : i32
    %c0_i32_1 = arith.constant 0 : i32
    return %arg0, %c0_i32, %c0_i32_0 : i32, i32, i32
  }
  func.func @transform_3(%arg0: i32) -> (i32, i32, i32) {
    %c0_i32 = arith.constant 0 : i32
    %c0_i32_0 = arith.constant 0 : i32
    %c0_i32_1 = arith.constant 0 : i32
    return %arg0, %c0_i32, %c0_i32_0 : i32, i32, i32
  }
}

module attributes {stable_mosaic.version = 11 : i64} {
  func.func @_conv_block_kernel(%arg0: i32, %arg1: memref<16x512xbf16, #tpu.memory_space<vmem>>, %arg2: memref<16x1xf32, #tpu.memory_space<vmem>>, %arg3: memref<1x512x128xbf16, #tpu.memory_space<vmem>>, %arg4: memref<1x16x128xf32, #tpu.memory_space<vmem>>) attributes {dimension_semantics = [#tpu.dimension_semantics<parallel>], iteration_bounds = array<i64: 2>, scalar_prefetch = 0 : i64, scratch_operands = 0 : i64, tpu.core_type = #tpu.core_type<tc>, window_params = [{pipeline_mode = #tpu.pipeline_mode<synchronous>, transform_indices = @transform_0, window_bounds = array<i64: 16, 512>}, {pipeline_mode = #tpu.pipeline_mode<synchronous>, transform_indices = @transform_1, window_bounds = array<i64: 16, 1>}, {transform_indices = @transform_2, window_bounds = array<i64: 1, 512, 128>}, {transform_indices = @transform_3, window_bounds = array<i64: 1, 16, 128>}]} {
    %c0 = arith.constant 0 : index
    %c0_0 = arith.constant 0 : index
    %0 = vector.load %arg1[%c0, %c0_0] : memref<16x512xbf16, #tpu.memory_space<vmem>>, vector<16x512xbf16>
    %c0_1 = arith.constant 0 : index
    %c0_2 = arith.constant 0 : index
    %c0_3 = arith.constant 0 : index
    %1 = vector.load %arg3[%c0_1, %c0_2, %c0_3] : memref<1x512x128xbf16, #tpu.memory_space<vmem>>, vector<1x512x128xbf16>
    %2 = vector.shape_cast %1 : vector<1x512x128xbf16> to vector<512x128xbf16>
    %cst = arith.constant dense<0.000000e+00> : vector<16x128xf32>
    %3 = tpu.matmul %0, %2, %cst {dimension_numbers = #tpu.dot_dimension_numbers<[1], [0], [0], [1], [0, 0, 1, 1], [], []>} : vector<16x512xbf16>, vector<512x128xbf16>, vector<16x128xf32> -> vector<16x128xf32>
    %cst_4 = arith.constant dense<0.000000e+00> : vector<16xf32>
    %4 = vector.multi_reduction <add>, %3, %cst_4 [1] : vector<16x128xf32> to vector<16xf32>
    %5 = vector.shape_cast %4 : vector<16xf32> to vector<16x1xf32>
    %cst_5 = arith.constant 8.000000e-03 : f32
    %6 = vector.broadcast %cst_5 : f32 to vector<16x1xf32>
    %7 = arith.mulf %5, %6 : vector<16x1xf32>
    %8 = arith.mulf %3, %3 : vector<16x128xf32>
    %cst_6 = arith.constant dense<0.000000e+00> : vector<16xf32>
    %9 = vector.multi_reduction <add>, %8, %cst_6 [1] : vector<16x128xf32> to vector<16xf32>
    %10 = vector.shape_cast %9 : vector<16xf32> to vector<16x1xf32>
    %cst_7 = arith.constant 8.000000e-03 : f32
    %11 = vector.broadcast %cst_7 : f32 to vector<16x1xf32>
    %12 = arith.mulf %10, %11 : vector<16x1xf32>
    %13 = arith.mulf %7, %7 : vector<16x1xf32>
    %14 = arith.subf %12, %13 : vector<16x1xf32>
    %15 = vector.broadcast %7 : vector<16x1xf32> to vector<16x128xf32>
    %16 = arith.subf %3, %15 : vector<16x128xf32>
    %cst_8 = arith.constant 9.99999974E-6 : f32
    %17 = vector.broadcast %cst_8 : f32 to vector<16x1xf32>
    %18 = arith.addf %14, %17 : vector<16x1xf32>
    %19 = math.rsqrt %18 : vector<16x1xf32>
    %20 = vector.broadcast %19 : vector<16x1xf32> to vector<16x128xf32>
    %21 = arith.mulf %16, %20 : vector<16x128xf32>
    %cst_9 = arith.constant 0.00999999977 : f32
    %22 = vector.broadcast %cst_9 : f32 to vector<16x128xf32>
    %23 = arith.mulf %21, %22 : vector<16x128xf32>
    %24 = arith.maximumf %21, %23 : vector<16x128xf32>
    %c0_10 = arith.constant 0 : index
    %c0_11 = arith.constant 0 : index
    %c0_12 = arith.constant 0 : index
    %25 = vector.load %arg4[%c0_10, %c0_11, %c0_12] : memref<1x16x128xf32, #tpu.memory_space<vmem>>, vector<1x16x128xf32>
    %26 = vector.shape_cast %25 : vector<1x16x128xf32> to vector<16x128xf32>
    %27 = vector.shape_cast %24 : vector<16x128xf32> to vector<1x16x128xf32>
    tpu.vector_store %arg4[%c0_10, %c0_11, %c0_12], %27 {strides = array<i32>} : memref<1x16x128xf32, #tpu.memory_space<vmem>>, vector<1x16x128xf32>,
    return
  }
  func.func @transform_0(%arg0: i32) -> (i32, i32) {
    %c0_i32 = arith.constant 0 : i32
    %c0_i32_0 = arith.constant 0 : i32
    %c0_i32_1 = arith.constant 0 : i32
    return %c0_i32, %c0_i32_0 : i32, i32
  }
  func.func @transform_1(%arg0: i32) -> (i32, i32) {
    %c0_i32 = arith.constant 0 : i32
    %c0_i32_0 = arith.constant 0 : i32
    %c0_i32_1 = arith.constant 0 : i32
    return %c0_i32, %c0_i32_0 : i32, i32
  }
  func.func @transform_2(%arg0: i32) -> (i32, i32, i32) {
    %c0_i32 = arith.constant 0 : i32
    %c0_i32_0 = arith.constant 0 : i32
    %c0_i32_1 = arith.constant 0 : i32
    return %arg0, %c0_i32, %c0_i32_0 : i32, i32, i32
  }
  func.func @transform_3(%arg0: i32) -> (i32, i32, i32) {
    %c0_i32 = arith.constant 0 : i32
    %c0_i32_0 = arith.constant 0 : i32
    %c0_i32_1 = arith.constant 0 : i32
    return %arg0, %c0_i32, %c0_i32_0 : i32, i32, i32
  }
}

module attributes {stable_mosaic.version = 11 : i64} {
  func.func @_conv_block_kernel(%arg0: i32, %arg1: memref<32x1024xbf16, #tpu.memory_space<vmem>>, %arg2: memref<32x1xf32, #tpu.memory_space<vmem>>, %arg3: memref<1x1024x128xbf16, #tpu.memory_space<vmem>>, %arg4: memref<1x32x128xf32, #tpu.memory_space<vmem>>) attributes {dimension_semantics = [#tpu.dimension_semantics<parallel>], iteration_bounds = array<i64: 2>, scalar_prefetch = 0 : i64, scratch_operands = 0 : i64, tpu.core_type = #tpu.core_type<tc>, window_params = [{pipeline_mode = #tpu.pipeline_mode<synchronous>, transform_indices = @transform_0, window_bounds = array<i64: 32, 1024>}, {pipeline_mode = #tpu.pipeline_mode<synchronous>, transform_indices = @transform_1, window_bounds = array<i64: 32, 1>}, {transform_indices = @transform_2, window_bounds = array<i64: 1, 1024, 128>}, {transform_indices = @transform_3, window_bounds = array<i64: 1, 32, 128>}]} {
    %c0 = arith.constant 0 : index
    %c0_0 = arith.constant 0 : index
    %0 = vector.load %arg1[%c0, %c0_0] : memref<32x1024xbf16, #tpu.memory_space<vmem>>, vector<32x1024xbf16>
    %c0_1 = arith.constant 0 : index
    %c0_2 = arith.constant 0 : index
    %c0_3 = arith.constant 0 : index
    %1 = vector.load %arg3[%c0_1, %c0_2, %c0_3] : memref<1x1024x128xbf16, #tpu.memory_space<vmem>>, vector<1x1024x128xbf16>
    %2 = vector.shape_cast %1 : vector<1x1024x128xbf16> to vector<1024x128xbf16>
    %cst = arith.constant dense<0.000000e+00> : vector<32x128xf32>
    %3 = tpu.matmul %0, %2, %cst {dimension_numbers = #tpu.dot_dimension_numbers<[1], [0], [0], [1], [0, 0, 1, 1], [], []>} : vector<32x1024xbf16>, vector<1024x128xbf16>, vector<32x128xf32> -> vector<32x128xf32>
    %cst_4 = arith.constant dense<0.000000e+00> : vector<32xf32>
    %4 = vector.multi_reduction <add>, %3, %cst_4 [1] : vector<32x128xf32> to vector<32xf32>
    %5 = vector.shape_cast %4 : vector<32xf32> to vector<32x1xf32>
    %cst_5 = arith.constant 0.0370370373 : f32
    %6 = vector.broadcast %cst_5 : f32 to vector<32x1xf32>
    %7 = arith.mulf %5, %6 : vector<32x1xf32>
    %8 = arith.mulf %3, %3 : vector<32x128xf32>
    %cst_6 = arith.constant dense<0.000000e+00> : vector<32xf32>
    %9 = vector.multi_reduction <add>, %8, %cst_6 [1] : vector<32x128xf32> to vector<32xf32>
    %10 = vector.shape_cast %9 : vector<32xf32> to vector<32x1xf32>
    %cst_7 = arith.constant 0.0370370373 : f32
    %11 = vector.broadcast %cst_7 : f32 to vector<32x1xf32>
    %12 = arith.mulf %10, %11 : vector<32x1xf32>
    %13 = arith.mulf %7, %7 : vector<32x1xf32>
    %14 = arith.subf %12, %13 : vector<32x1xf32>
    %15 = vector.broadcast %7 : vector<32x1xf32> to vector<32x128xf32>
    %16 = arith.subf %3, %15 : vector<32x128xf32>
    %cst_8 = arith.constant 9.99999974E-6 : f32
    %17 = vector.broadcast %cst_8 : f32 to vector<32x1xf32>
    %18 = arith.addf %14, %17 : vector<32x1xf32>
    %19 = math.rsqrt %18 : vector<32x1xf32>
    %20 = vector.broadcast %19 : vector<32x1xf32> to vector<32x128xf32>
    %21 = arith.mulf %16, %20 : vector<32x128xf32>
    %cst_9 = arith.constant 0.00999999977 : f32
    %22 = vector.broadcast %cst_9 : f32 to vector<32x128xf32>
    %23 = arith.mulf %21, %22 : vector<32x128xf32>
    %24 = arith.maximumf %21, %23 : vector<32x128xf32>
    %c0_10 = arith.constant 0 : index
    %c0_11 = arith.constant 0 : index
    %c0_12 = arith.constant 0 : index
    %25 = vector.load %arg4[%c0_10, %c0_11, %c0_12] : memref<1x32x128xf32, #tpu.memory_space<vmem>>, vector<1x32x128xf32>
    %26 = vector.shape_cast %25 : vector<1x32x128xf32> to vector<32x128xf32>
    %27 = vector.shape_cast %24 : vector<32x128xf32> to vector<1x32x128xf32>
    tpu.vector_store %arg4[%c0_10, %c0_11, %c0_12], %27 {strides = array<i32>} : memref<1x32x128xf32, #tpu.memory_space<vmem>>, vector<1x32x128xf32>,
    return
  }
  func.func @transform_0(%arg0: i32) -> (i32, i32) {
    %c0_i32 = arith.constant 0 : i32
    %c0_i32_0 = arith.constant 0 : i32
    %c0_i32_1 = arith.constant 0 : i32
    return %c0_i32, %c0_i32_0 : i32, i32
  }
  func.func @transform_1(%arg0: i32) -> (i32, i32) {
    %c0_i32 = arith.constant 0 : i32
    %c0_i32_0 = arith.constant 0 : i32
    %c0_i32_1 = arith.constant 0 : i32
    return %c0_i32, %c0_i32_0 : i32, i32
  }
  func.func @transform_2(%arg0: i32) -> (i32, i32, i32) {
    %c0_i32 = arith.constant 0 : i32
    %c0_i32_0 = arith.constant 0 : i32
    %c0_i32_1 = arith.constant 0 : i32
    return %arg0, %c0_i32, %c0_i32_0 : i32, i32, i32
  }
  func.func @transform_3(%arg0: i32) -> (i32, i32, i32) {
    %c0_i32 = arith.constant 0 : i32
    %c0_i32_0 = arith.constant 0 : i32
    %c0_i32_1 = arith.constant 0 : i32
    return %arg0, %c0_i32, %c0_i32_0 : i32, i32, i32
  }
}

module attributes {stable_mosaic.version = 11 : i64} {
  func.func @_conv_block_kernel(%arg0: i32, %arg1: memref<8x2048xbf16, #tpu.memory_space<vmem>>, %arg2: memref<8x1xf32, #tpu.memory_space<vmem>>, %arg3: memref<1x2048x128xbf16, #tpu.memory_space<vmem>>, %arg4: memref<1x8x128xf32, #tpu.memory_space<vmem>>) attributes {dimension_semantics = [#tpu.dimension_semantics<parallel>], iteration_bounds = array<i64: 2>, scalar_prefetch = 0 : i64, scratch_operands = 0 : i64, tpu.core_type = #tpu.core_type<tc>, window_params = [{pipeline_mode = #tpu.pipeline_mode<synchronous>, transform_indices = @transform_0, window_bounds = array<i64: 8, 2048>}, {pipeline_mode = #tpu.pipeline_mode<synchronous>, transform_indices = @transform_1, window_bounds = array<i64: 8, 1>}, {transform_indices = @transform_2, window_bounds = array<i64: 1, 2048, 128>}, {transform_indices = @transform_3, window_bounds = array<i64: 1, 8, 128>}]} {
    %c0 = arith.constant 0 : index
    %c0_0 = arith.constant 0 : index
    %0 = vector.load %arg1[%c0, %c0_0] : memref<8x2048xbf16, #tpu.memory_space<vmem>>, vector<8x2048xbf16>
    %c0_1 = arith.constant 0 : index
    %c0_2 = arith.constant 0 : index
    %c0_3 = arith.constant 0 : index
    %1 = vector.load %arg3[%c0_1, %c0_2, %c0_3] : memref<1x2048x128xbf16, #tpu.memory_space<vmem>>, vector<1x2048x128xbf16>
    %2 = vector.shape_cast %1 : vector<1x2048x128xbf16> to vector<2048x128xbf16>
    %cst = arith.constant dense<0.000000e+00> : vector<8x128xf32>
    %3 = tpu.matmul %0, %2, %cst {dimension_numbers = #tpu.dot_dimension_numbers<[1], [0], [0], [1], [0, 0, 1, 1], [], []>} : vector<8x2048xbf16>, vector<2048x128xbf16>, vector<8x128xf32> -> vector<8x128xf32>
    %c0_4 = arith.constant 0 : index
    %c0_5 = arith.constant 0 : index
    %4 = vector.load %arg2[%c0_4, %c0_5] : memref<8x1xf32, #tpu.memory_space<vmem>>, vector<8x1xf32>
    %5 = vector.broadcast %4 : vector<8x1xf32> to vector<8x128xf32>
    %6 = arith.addf %3, %5 : vector<8x128xf32>
    %c0_6 = arith.constant 0 : index
    %c0_7 = arith.constant 0 : index
    %c0_8 = arith.constant 0 : index
    %7 = vector.load %arg4[%c0_6, %c0_7, %c0_8] : memref<1x8x128xf32, #tpu.memory_space<vmem>>, vector<1x8x128xf32>
    %8 = vector.shape_cast %7 : vector<1x8x128xf32> to vector<8x128xf32>
    %9 = vector.shape_cast %6 : vector<8x128xf32> to vector<1x8x128xf32>
    tpu.vector_store %arg4[%c0_6, %c0_7, %c0_8], %9 {strides = array<i32>} : memref<1x8x128xf32, #tpu.memory_space<vmem>>, vector<1x8x128xf32>,
    return
  }
  func.func @transform_0(%arg0: i32) -> (i32, i32) {
    %c0_i32 = arith.constant 0 : i32
    %c0_i32_0 = arith.constant 0 : i32
    %c0_i32_1 = arith.constant 0 : i32
    return %c0_i32, %c0_i32_0 : i32, i32
  }
  func.func @transform_1(%arg0: i32) -> (i32, i32) {
    %c0_i32 = arith.constant 0 : i32
    %c0_i32_0 = arith.constant 0 : i32
    %c0_i32_1 = arith.constant 0 : i32
    return %c0_i32, %c0_i32_0 : i32, i32
  }
  func.func @transform_2(%arg0: i32) -> (i32, i32, i32) {
    %c0_i32 = arith.constant 0 : i32
    %c0_i32_0 = arith.constant 0 : i32
    %c0_i32_1 = arith.constant 0 : i32
    return %arg0, %c0_i32, %c0_i32_0 : i32, i32, i32
  }
  func.func @transform_3(%arg0: i32) -> (i32, i32, i32) {
    %c0_i32 = arith.constant 0 : i32
    %c0_i32_0 = arith.constant 0 : i32
    %c0_i32_1 = arith.constant 0 : i32
    return %arg0, %c0_i32, %c0_i32_0 : i32, i32, i32
  }
}

</mosaic_0001>

<llo_original>
// kernel: adverserial_forward.4
$region0: #{adverserial_forward.4}
  #allocation0 [shape = 'u32[]', space=smem, size = 0x4, offset = 0x4, fixed_abs, tag = 'smem constant byte address 0x4 - core index']
  #allocation1 [shape = 'u32[72,128]{1,0:T(1,128)}', space=vmem, size = 0x9000, scoped, tag = 'internal scratch']
  %s0 = inlined_call_operand.vmem [shape: bf16[8,256], index: 0, kind: input, shape index: {}]
  %s1 = inlined_call_operand.vmem [shape: f32[8,1], index: 1, kind: input, shape index: {}]
  %s2 = inlined_call_operand.vmem [shape: bf16[2,256,768], index: 2, kind: input, shape index: {}]
  %s3 = inlined_call_operand.vmem [shape: f32[2,8,768], index: 3, kind: output, shape index: {}]
  %s4 = sld [smem:[#allocation0]]
  $region45: #{adverserial_forward.4} parent=0
    _
  %s6 = ssub.s32 1, %s4
  %s7 = scalar_select 0, %s6, %s4
  loop: start=0, step=1, limit=4
  $region2: #{adverserial_forward.4} parent=0 // loop_pre_header
    _
  $region3: #{adverserial_forward.4} parent=0 // loop_header
    %s9 = sphi 0, %s13
    %p10 = scmp.ge.s32.totalorder %s9, 4
    %s17 = sphi 0, %s17
    %s19 = sphi 0, %s17
    %s20 = sphi 0, %s19
    %s34 = sphi 0, %s20
    %s38 = sphi 0, %s38
    %s40 = sphi 0, %s38
    %s41 = sphi 0, %s40
    %s55 = sphi 0, %s41
    %s61 = sphi 0, %s63
    %s64 = sphi 0, %s61
    %s65 = sphi 0, %s64
    %s81 = sphi 0, %s65
    %s87 = sphi 0, %s89
    %s90 = sphi 0, %s87
    %s91 = sphi 0, %s90
    %s107 = sphi 0, %s91
  $region4: #{adverserial_forward.4} parent=0 // loop_header_branch
    %12 = sbr.rel (%p10) target = $region8
  $region5: #{adverserial_forward.4} parent=0 // loop_body
    %s14 = ssub.s32 %s9, 1
    %s15 = ssub.s32 %s9, 2
    %s16 = sadd.s32 %s9, 1
    %s18 = sadd.s32 %s17, 1
    %p21 = scmp.eq.s32.totalorder %s9, 1
    %p22 = scmp.ne.s32.totalorder %s17, %s19
    %p23 = scmp.eq.s32.totalorder %s9, 0
    %p24 = por %p22, %p23
    %p25 = scmp.ne.s32.totalorder %s17, %s19
    %p26 = scmp.eq.s32.totalorder %s14, 1
    %p27 = por %p25, %p26
    %p28 = scmp.ne.s32.totalorder %s19, %s20
    %p29 = scmp.eq.s32.totalorder %s14, 0
    %p30 = por %p28, %p29
    %p31 = scmp.ne.s32.totalorder %s19, %s20
    %p32 = scmp.eq.s32.totalorder %s15, 1
    %p33 = por %p31, %p32
    %p35 = scmp.ne.s32.totalorder %s20, %s34
    %p36 = scmp.eq.s32.totalorder %s15, 0
    %p37 = por %p35, %p36
    %s39 = sadd.s32 %s38, 1
    %p42 = scmp.eq.s32.totalorder %s9, 1
    %p43 = scmp.ne.s32.totalorder %s38, %s40
    %p44 = scmp.eq.s32.totalorder %s9, 0
    %p45 = por %p43, %p44
    %p46 = scmp.ne.s32.totalorder %s38, %s40
    %p47 = scmp.eq.s32.totalorder %s14, 1
    %p48 = por %p46, %p47
    %p49 = scmp.ne.s32.totalorder %s40, %s41
    %p50 = scmp.eq.s32.totalorder %s14, 0
    %p51 = por %p49, %p50
    %p52 = scmp.ne.s32.totalorder %s40, %s41
    %p53 = scmp.eq.s32.totalorder %s15, 1
    %p54 = por %p52, %p53
    %p56 = scmp.ne.s32.totalorder %s41, %s55
    %p57 = scmp.eq.s32.totalorder %s15, 0
    %p58 = por %p56, %p57
    %s59 = ssub.s32 %s9, %s16
    %p60 = scmp.eq.s32.totalorder %s59, 0
    %s62 = sadd.s32 %s61, 1
    %s63 = scalar_select %p60, %s61, %s62
    %p66 = pneg %p60
    %p67 = scmp.eq.s32.totalorder %s9, 1
    %p68 = por %p66, %p67
    %p69 = scmp.ne.s32.totalorder %s61, %s64
    %p70 = scmp.eq.s32.totalorder %s9, 0
    %p71 = por %p69, %p70
    %p72 = scmp.ne.s32.totalorder %s61, %s64
    %p73 = scmp.eq.s32.totalorder %s14, 1
    %p74 = por %p72, %p73
    %p75 = scmp.ne.s32.totalorder %s64, %s65
    %p76 = scmp.eq.s32.totalorder %s14, 0
    %p77 = por %p75, %p76
    %p78 = scmp.ne.s32.totalorder %s64, %s65
    %p79 = scmp.eq.s32.totalorder %s15, 1
    %p80 = por %p78, %p79
    %p82 = scmp.ne.s32.totalorder %s65, %s81
    %p83 = scmp.eq.s32.totalorder %s15, 0
    %p84 = por %p82, %p83
    %s85 = ssub.s32 %s9, %s16
    %p86 = scmp.eq.s32.totalorder %s85, 0
    %s88 = sadd.s32 %s87, 1
    %s89 = scalar_select %p86, %s87, %s88
    %p92 = pneg %p86
    %p93 = scmp.eq.s32.totalorder %s9, 1
    %p94 = por %p92, %p93
    %p95 = scmp.ne.s32.totalorder %s87, %s90
    %p96 = scmp.eq.s32.totalorder %s9, 0
    %p97 = por %p95, %p96
    %p98 = scmp.ne.s32.totalorder %s87, %s90
    %p99 = scmp.eq.s32.totalorder %s14, 1
    %p100 = por %p98, %p99
    %p101 = scmp.ne.s32.totalorder %s90, %s91
    %p102 = scmp.eq.s32.totalorder %s14, 0
    %p103 = por %p101, %p102
    %p104 = scmp.ne.s32.totalorder %s90, %s91
    %p105 = scmp.eq.s32.totalorder %s15, 1
    %p106 = por %p104, %p105
    %p108 = scmp.ne.s32.totalorder %s91, %s107
    %p109 = scmp.eq.s32.totalorder %s15, 0
    %p110 = por %p108, %p109
    %p111 = scmp.le.s32.totalorder 1, %s9
    %p112 = scmp.lt.s32.totalorder %s9, 3
    %p113 = pnand %p111, %p112
    %p114 = pneg %p113
    // Predicated region
    $region9: #{adverserial_forward.4} parent=5 // pred_check
      _
    $region10: #{adverserial_forward.4} parent=5 // pred_check_branch
      %116 = sbr.rel (%p113) target = $region12
    $region11: #{adverserial_forward.4} parent=5 // pred_region
      %s117 = ssub.s32 %s9, 1
      // Predicated region
      $region13: #{adverserial_forward.4} parent=11 // pred_check
        %p118 = pneg %p30
      $region14: #{adverserial_forward.4} parent=11 // pred_check_branch
        %120 = sbr.rel (%p118) target = $region16
      $region15: #{adverserial_forward.4} parent=11 // pred_region
        _
      $region16: #{adverserial_forward.4} parent=11 // pred_fallthru
        _
      // Predicated region
      $region17: #{adverserial_forward.4} parent=11 // pred_check
        %p121 = pneg %p51
      $region18: #{adverserial_forward.4} parent=11 // pred_check_branch
        %123 = sbr.rel (%p121) target = $region20
      $region19: #{adverserial_forward.4} parent=11 // pred_region
        _
      $region20: #{adverserial_forward.4} parent=11 // pred_fallthru
        _
    $region12: #{adverserial_forward.4} parent=5 // pred_fallthru
      _
    %p124 = scmp.lt.s32.totalorder %s9, 2
    // Predicated region
    $region21: #{adverserial_forward.4} parent=5 // pred_check
      %p125 = pneg %p124
    $region22: #{adverserial_forward.4} parent=5 // pred_check_branch
      %127 = sbr.rel (%p125) target = $region24
    $region23: #{adverserial_forward.4} parent=5 // pred_region
      // Predicated region
      $region25: #{adverserial_forward.4} parent=23 // pred_check
        %p128 = pneg %p71
      $region26: #{adverserial_forward.4} parent=23 // pred_check_branch
        %130 = sbr.rel (%p128) target = $region28
      $region27: #{adverserial_forward.4} parent=23 // pred_region
        %p131 = scmp.lt.s32.totalorder %s9, 1
        %s132 = scalar_select %p131, %s9, 1
        %s133 = smul.addr %s132, 192
        %s134 = smul.addr %s133, 4
        %s135 = scalar_lea.vmem %s2, %s134
      $region28: #{adverserial_forward.4} parent=23 // pred_fallthru
        _
    $region24: #{adverserial_forward.4} parent=5 // pred_fallthru
      _
    %p136 = scmp.le.s32.totalorder 1, %s9
    %p137 = scmp.lt.s32.totalorder %s9, 3
    %p138 = pnand %p136, %p137
    %p139 = pneg %p138
    // Predicated region
    $region29: #{adverserial_forward.4} parent=5 // pred_check
      _
    $region30: #{adverserial_forward.4} parent=5 // pred_check_branch
      %141 = sbr.rel (%p138) target = $region32
    $region31: #{adverserial_forward.4} parent=5 // pred_region
      %s142 = ssub.s32 %s9, 1
      %p143 = pneg %p30
      %p144 = pneg %p27
      %p145 = pneg %p51
      %p146 = pneg %p48
      %p147 = scmp.lt.s32.totalorder %s14, 1
      %s148 = scalar_select %p147, %s14, 1
      %s149 = smul.addr %s148, 192
      %s150 = smul.addr %s149, 4
      %s151 = scalar_lea.vmem %s2, %s150
      %p152 = pneg %p77
      %p153 = pneg %p74
      %p154 = pneg %p103
      %p155 = pneg %p100
      %p156 = scmp.lt.s32.totalorder %s14, 1
      %s157 = scalar_select %p156, %s14, 1
      %s158 = smul.addr %s157, 6
      %s159 = smul.addr %s158, 8
      %s160 = scalar_lea.vmem %s3, %s159
      %p161 = scmp.lt.s32.totalorder %s14, 1
      %s162 = scalar_select %p161, %s14, 1
      %s163 = smul.addr %s162, 192
      %s164 = smul.addr %s163, 4
      %s165 = scalar_lea.vmem %s2, %s164
      %p166 = scmp.lt.s32.totalorder %s14, 1
      %s167 = scalar_select %p166, %s14, 1
      %s168 = smul.addr %s167, 6
      %s169 = smul.addr %s168, 8
      %s170 = scalar_lea.vmem %s3, %s169
      %v171 = vld [vmem:[%s0] sm:$0xff]
      %v172 = vld [vmem:[%s165] sm:$0xff]
      %v173 = vld [vmem:[%s165 + $0x8] sm:$0xff]
      %v174 = vld [vmem:[%s165 + $0x10] sm:$0xff]
      %v175 = vld [vmem:[%s165 + $0x18] sm:$0xff]
      %v176 = vld [vmem:[%s165 + $0x20] sm:$0xff]
      %v177 = vld [vmem:[%s165 + $0x28] sm:$0xff]
      %v178 = vld [vmem:[%s165 + $0x30] sm:$0xff]
      %v179 = vld [vmem:[%s165 + $0x38] sm:$0xff]
      %v180 = vld [vmem:[%s165 + $0x40] sm:$0xff]
      %v181 = vld [vmem:[%s165 + $0x48] sm:$0xff]
      %v182 = vld [vmem:[%s165 + $0x50] sm:$0xff]
      %v183 = vld [vmem:[%s165 + $0x58] sm:$0xff]
      %v184 = vld [vmem:[%s165 + $0x60] sm:$0xff]
      %v185 = vld [vmem:[%s165 + $0x68] sm:$0xff]
      %v186 = vld [vmem:[%s165 + $0x70] sm:$0xff]
      %v187 = vld [vmem:[%s165 + $0x78] sm:$0xff]
      %v188 = vld [vmem:[%s165 + $0x80] sm:$0xff]
      %v189 = vld [vmem:[%s165 + $0x88] sm:$0xff]
      %v190 = vld [vmem:[%s165 + $0x90] sm:$0xff]
      %v191 = vld [vmem:[%s165 + $0x98] sm:$0xff]
      %v192 = vld [vmem:[%s165 + $0xa0] sm:$0xff]
      %v193 = vld [vmem:[%s165 + $0xa8] sm:$0xff]
      %v194 = vld [vmem:[%s165 + $0xb0] sm:$0xff]
      %v195 = vld [vmem:[%s165 + $0xb8] sm:$0xff]
      %v196 = vld [vmem:[%s165 + $0xc0] sm:$0xff]
      %v197 = vld [vmem:[%s165 + $0xc8] sm:$0xff]
      %v198 = vld [vmem:[%s165 + $0xd0] sm:$0xff]
      %v199 = vld [vmem:[%s165 + $0xd8] sm:$0xff]
      %v200 = vld [vmem:[%s165 + $0xe0] sm:$0xff]
      %v201 = vld [vmem:[%s165 + $0xe8] sm:$0xff]
      %v202 = vld [vmem:[%s165 + $0xf0] sm:$0xff]
      %v203 = vld [vmem:[%s165 + $0xf8] sm:$0xff]
      %v204 = vld [vmem:[%s165 + $0x100] sm:$0xff]
      %v205 = vld [vmem:[%s165 + $0x108] sm:$0xff]
      %v206 = vld [vmem:[%s165 + $0x110] sm:$0xff]
      %v207 = vld [vmem:[%s165 + $0x118] sm:$0xff]
      %v208 = vld [vmem:[%s165 + $0x120] sm:$0xff]
      %v209 = vld [vmem:[%s165 + $0x128] sm:$0xff]
      %v210 = vld [vmem:[%s165 + $0x130] sm:$0xff]
      %v211 = vld [vmem:[%s165 + $0x138] sm:$0xff]
      %v212 = vld [vmem:[%s165 + $0x140] sm:$0xff]
      %v213 = vld [vmem:[%s165 + $0x148] sm:$0xff]
      %v214 = vld [vmem:[%s165 + $0x150] sm:$0xff]
      %v215 = vld [vmem:[%s165 + $0x158] sm:$0xff]
      %v216 = vld [vmem:[%s165 + $0x160] sm:$0xff]
      %v217 = vld [vmem:[%s165 + $0x168] sm:$0xff]
      %v218 = vld [vmem:[%s165 + $0x170] sm:$0xff]
      %v219 = vld [vmem:[%s165 + $0x178] sm:$0xff]
      %v220 = vld [vmem:[%s165 + $0x180] sm:$0xff]
      %v221 = vld [vmem:[%s165 + $0x188] sm:$0xff]
      %v222 = vld [vmem:[%s165 + $0x190] sm:$0xff]
      %v223 = vld [vmem:[%s165 + $0x198] sm:$0xff]
      %v224 = vld [vmem:[%s165 + $0x1a0] sm:$0xff]
      %v225 = vld [vmem:[%s165 + $0x1a8] sm:$0xff]
      %v226 = vld [vmem:[%s165 + $0x1b0] sm:$0xff]
      %v227 = vld [vmem:[%s165 + $0x1b8] sm:$0xff]
      %v228 = vld [vmem:[%s165 + $0x1c0] sm:$0xff]
      %v229 = vld [vmem:[%s165 + $0x1c8] sm:$0xff]
      %v230 = vld [vmem:[%s165 + $0x1d0] sm:$0xff]
      %v231 = vld [vmem:[%s165 + $0x1d8] sm:$0xff]
      %v232 = vld [vmem:[%s165 + $0x1e0] sm:$0xff]
      %v233 = vld [vmem:[%s165 + $0x1e8] sm:$0xff]
      %v234 = vld [vmem:[%s165 + $0x1f0] sm:$0xff]
      %v235 = vld [vmem:[%s165 + $0x1f8] sm:$0xff]
      %v236 = vld [vmem:[%s165 + $0x200] sm:$0xff]
      %v237 = vld [vmem:[%s165 + $0x208] sm:$0xff]
      %v238 = vld [vmem:[%s165 + $0x210] sm:$0xff]
      %v239 = vld [vmem:[%s165 + $0x218] sm:$0xff]
      %v240 = vld [vmem:[%s165 + $0x220] sm:$0xff]
      %v241 = vld [vmem:[%s165 + $0x228] sm:$0xff]
      %v242 = vld [vmem:[%s165 + $0x230] sm:$0xff]
      %v243 = vld [vmem:[%s165 + $0x238] sm:$0xff]
      %v244 = vld [vmem:[%s165 + $0x240] sm:$0xff]
      %v245 = vld [vmem:[%s165 + $0x248] sm:$0xff]
      %v246 = vld [vmem:[%s165 + $0x250] sm:$0xff]
      %v247 = vld [vmem:[%s165 + $0x258] sm:$0xff]
      %v248 = vld [vmem:[%s165 + $0x260] sm:$0xff]
      %v249 = vld [vmem:[%s165 + $0x268] sm:$0xff]
      %v250 = vld [vmem:[%s165 + $0x270] sm:$0xff]
      %v251 = vld [vmem:[%s165 + $0x278] sm:$0xff]
      %v252 = vld [vmem:[%s165 + $0x280] sm:$0xff]
      %v253 = vld [vmem:[%s165 + $0x288] sm:$0xff]
      %v254 = vld [vmem:[%s165 + $0x290] sm:$0xff]
      %v255 = vld [vmem:[%s165 + $0x298] sm:$0xff]
      %v256 = vld [vmem:[%s165 + $0x2a0] sm:$0xff]
      %v257 = vld [vmem:[%s165 + $0x2a8] sm:$0xff]
      %v258 = vld [vmem:[%s165 + $0x2b0] sm:$0xff]
      %v259 = vld [vmem:[%s165 + $0x2b8] sm:$0xff]
      %v260 = vld [vmem:[%s165 + $0x2c0] sm:$0xff]
      %v261 = vld [vmem:[%s165 + $0x2c8] sm:$0xff]
      %v262 = vld [vmem:[%s165 + $0x2d0] sm:$0xff]
      %v263 = vld [vmem:[%s165 + $0x2d8] sm:$0xff]
      %v264 = vld [vmem:[%s165 + $0x2e0] sm:$0xff]
      %v265 = vld [vmem:[%s165 + $0x2e8] sm:$0xff]
      %v266 = vld [vmem:[%s165 + $0x2f0] sm:$0xff]
      %v267 = vld [vmem:[%s165 + $0x2f8] sm:$0xff]
      %v268 = vld [vmem:[%s1] sm:$0xff]
      %270 = vset.pattern.permute.xlu0 0
      %271 = vperm.xlu0 %270, %v268
      %v272 = vpop.permute.xlu0 %271
      %v275 = vunpack.c.l.b16 %v171
      %v276 = vunpack.c.h.b16 %v171
      %v277 = vpack.c.b16 %v275, %v275
      %v278 = vpack.c.b16 %v276, %v276
      %v377 = vunpack.c.l.b16 %v172
      %v378 = vunpack.c.h.b16 %v172
      %v379 = vunpack.c.l.b16 %v173
      %v380 = vunpack.c.h.b16 %v173
      %v381 = vunpack.c.l.b16 %v174
      %v382 = vunpack.c.h.b16 %v174
      %v383 = vunpack.c.l.b16 %v175
      %v384 = vunpack.c.h.b16 %v175
      %v385 = vunpack.c.l.b16 %v176
      %v386 = vunpack.c.h.b16 %v176
      %v387 = vunpack.c.l.b16 %v177
      %v388 = vunpack.c.h.b16 %v177
      %v389 = vunpack.c.l.b16 %v178
      %v390 = vunpack.c.h.b16 %v178
      %v391 = vunpack.c.l.b16 %v179
      %v392 = vunpack.c.h.b16 %v179
      %v393 = vunpack.c.l.b16 %v180
      %v394 = vunpack.c.h.b16 %v180
      %v395 = vunpack.c.l.b16 %v181
      %v396 = vunpack.c.h.b16 %v181
      %v397 = vunpack.c.l.b16 %v182
      %v398 = vunpack.c.h.b16 %v182
      %v399 = vunpack.c.l.b16 %v183
      %v400 = vunpack.c.h.b16 %v183
      %v401 = vunpack.c.l.b16 %v184
      %v402 = vunpack.c.h.b16 %v184
      %v403 = vunpack.c.l.b16 %v185
      %v404 = vunpack.c.h.b16 %v185
      %v405 = vunpack.c.l.b16 %v186
      %v406 = vunpack.c.h.b16 %v186
      %v407 = vunpack.c.l.b16 %v187
      %v408 = vunpack.c.h.b16 %v187
      %v409 = vunpack.c.l.b16 %v188
      %v410 = vunpack.c.h.b16 %v188
      %v411 = vunpack.c.l.b16 %v189
      %v412 = vunpack.c.h.b16 %v189
      %v413 = vunpack.c.l.b16 %v190
      %v414 = vunpack.c.h.b16 %v190
      %v415 = vunpack.c.l.b16 %v191
      %v416 = vunpack.c.h.b16 %v191
      %v417 = vunpack.c.l.b16 %v192
      %v418 = vunpack.c.h.b16 %v192
      %v419 = vunpack.c.l.b16 %v193
      %v420 = vunpack.c.h.b16 %v193
      %v421 = vunpack.c.l.b16 %v194
      %v422 = vunpack.c.h.b16 %v194
      %v423 = vunpack.c.l.b16 %v195
      %v424 = vunpack.c.h.b16 %v195
      %v425 = vunpack.c.l.b16 %v196
      %v426 = vunpack.c.h.b16 %v196
      %v427 = vunpack.c.l.b16 %v197
      %v428 = vunpack.c.h.b16 %v197
      %v429 = vunpack.c.l.b16 %v198
      %v430 = vunpack.c.h.b16 %v198
      %v431 = vunpack.c.l.b16 %v199
      %v432 = vunpack.c.h.b16 %v199
      %v433 = vunpack.c.l.b16 %v200
      %v434 = vunpack.c.h.b16 %v200
      %v435 = vunpack.c.l.b16 %v201
      %v436 = vunpack.c.h.b16 %v201
      %v437 = vunpack.c.l.b16 %v202
      %v438 = vunpack.c.h.b16 %v202
      %v439 = vunpack.c.l.b16 %v203
      %v440 = vunpack.c.h.b16 %v203
      %v441 = vunpack.c.l.b16 %v204
      %v442 = vunpack.c.h.b16 %v204
      %v443 = vunpack.c.l.b16 %v205
      %v444 = vunpack.c.h.b16 %v205
      %v445 = vunpack.c.l.b16 %v206
      %v446 = vunpack.c.h.b16 %v206
      %v447 = vunpack.c.l.b16 %v207
      %v448 = vunpack.c.h.b16 %v207
      %v449 = vunpack.c.l.b16 %v208
      %v450 = vunpack.c.h.b16 %v208
      %v451 = vunpack.c.l.b16 %v209
      %v452 = vunpack.c.h.b16 %v209
      %v453 = vunpack.c.l.b16 %v210
      %v454 = vunpack.c.h.b16 %v210
      %v455 = vunpack.c.l.b16 %v211
      %v456 = vunpack.c.h.b16 %v211
      %v457 = vunpack.c.l.b16 %v212
      %v458 = vunpack.c.h.b16 %v212
      %v459 = vunpack.c.l.b16 %v213
      %v460 = vunpack.c.h.b16 %v213
      %v461 = vunpack.c.l.b16 %v214
      %v462 = vunpack.c.h.b16 %v214
      %v463 = vunpack.c.l.b16 %v215
      %v464 = vunpack.c.h.b16 %v215
      %v465 = vunpack.c.l.b16 %v216
      %v466 = vunpack.c.h.b16 %v216
      %v467 = vunpack.c.l.b16 %v217
      %v468 = vunpack.c.h.b16 %v217
      %v469 = vunpack.c.l.b16 %v218
      %v470 = vunpack.c.h.b16 %v218
      %v471 = vunpack.c.l.b16 %v219
      %v472 = vunpack.c.h.b16 %v219
      %v473 = vunpack.c.l.b16 %v220
      %v474 = vunpack.c.h.b16 %v220
      %v475 = vunpack.c.l.b16 %v221
      %v476 = vunpack.c.h.b16 %v221
      %v477 = vunpack.c.l.b16 %v222
      %v478 = vunpack.c.h.b16 %v222
      %v479 = vunpack.c.l.b16 %v223
      %v480 = vunpack.c.h.b16 %v223
      %v481 = vunpack.c.l.b16 %v224
      %v482 = vunpack.c.h.b16 %v224
      %v483 = vunpack.c.l.b16 %v225
      %v484 = vunpack.c.h.b16 %v225
      %v485 = vunpack.c.l.b16 %v226
      %v486 = vunpack.c.h.b16 %v226
      %v487 = vunpack.c.l.b16 %v227
      %v488 = vunpack.c.h.b16 %v227
      %v489 = vunpack.c.l.b16 %v228
      %v490 = vunpack.c.h.b16 %v228
      %v491 = vunpack.c.l.b16 %v229
      %v492 = vunpack.c.h.b16 %v229
      %v493 = vunpack.c.l.b16 %v230
      %v494 = vunpack.c.h.b16 %v230
      %v495 = vunpack.c.l.b16 %v231
      %v496 = vunpack.c.h.b16 %v231
      %v497 = vunpack.c.l.b16 %v232
      %v498 = vunpack.c.h.b16 %v232
      %v499 = vunpack.c.l.b16 %v233
      %v500 = vunpack.c.h.b16 %v233
      %v501 = vunpack.c.l.b16 %v234
      %v502 = vunpack.c.h.b16 %v234
      %v503 = vunpack.c.l.b16 %v235
      %v504 = vunpack.c.h.b16 %v235
      %v505 = vunpack.c.l.b16 %v236
      %v506 = vunpack.c.h.b16 %v236
      %v507 = vunpack.c.l.b16 %v237
      %v508 = vunpack.c.h.b16 %v237
      %v509 = vunpack.c.l.b16 %v238
      %v510 = vunpack.c.h.b16 %v238
      %v511 = vunpack.c.l.b16 %v239
      %v512 = vunpack.c.h.b16 %v239
      %v513 = vunpack.c.l.b16 %v240
      %v514 = vunpack.c.h.b16 %v240
      %v515 = vunpack.c.l.b16 %v241
      %v516 = vunpack.c.h.b16 %v241
      %v517 = vunpack.c.l.b16 %v242
      %v518 = vunpack.c.h.b16 %v242
      %v519 = vunpack.c.l.b16 %v243
      %v520 = vunpack.c.h.b16 %v243
      %v521 = vunpack.c.l.b16 %v244
      %v522 = vunpack.c.h.b16 %v244
      %v523 = vunpack.c.l.b16 %v245
      %v524 = vunpack.c.h.b16 %v245
      %v525 = vunpack.c.l.b16 %v246
      %v526 = vunpack.c.h.b16 %v246
      %v527 = vunpack.c.l.b16 %v247
      %v528 = vunpack.c.h.b16 %v247
      %v529 = vunpack.c.l.b16 %v248
      %v530 = vunpack.c.h.b16 %v248
      %v531 = vunpack.c.l.b16 %v249
      %v532 = vunpack.c.h.b16 %v249
      %v533 = vunpack.c.l.b16 %v250
      %v534 = vunpack.c.h.b16 %v250
      %v535 = vunpack.c.l.b16 %v251
      %v536 = vunpack.c.h.b16 %v251
      %v537 = vunpack.c.l.b16 %v252
      %v538 = vunpack.c.h.b16 %v252
      %v539 = vunpack.c.l.b16 %v253
      %v540 = vunpack.c.h.b16 %v253
      %v541 = vunpack.c.l.b16 %v254
      %v542 = vunpack.c.h.b16 %v254
      %v543 = vunpack.c.l.b16 %v255
      %v544 = vunpack.c.h.b16 %v255
      %v545 = vunpack.c.l.b16 %v256
      %v546 = vunpack.c.h.b16 %v256
      %v547 = vunpack.c.l.b16 %v257
      %v548 = vunpack.c.h.b16 %v257
      %v549 = vunpack.c.l.b16 %v258
      %v550 = vunpack.c.h.b16 %v258
      %v551 = vunpack.c.l.b16 %v259
      %v552 = vunpack.c.h.b16 %v259
      %v553 = vunpack.c.l.b16 %v260
      %v554 = vunpack.c.h.b16 %v260
      %v555 = vunpack.c.l.b16 %v261
      %v556 = vunpack.c.h.b16 %v261
      %v557 = vunpack.c.l.b16 %v262
      %v558 = vunpack.c.h.b16 %v262
      %v559 = vunpack.c.l.b16 %v263
      %v560 = vunpack.c.h.b16 %v263
      %v561 = vunpack.c.l.b16 %v264
      %v562 = vunpack.c.h.b16 %v264
      %v563 = vunpack.c.l.b16 %v265
      %v564 = vunpack.c.h.b16 %v265
      %v565 = vunpack.c.l.b16 %v266
      %v566 = vunpack.c.h.b16 %v266
      %v567 = vunpack.c.l.b16 %v267
      %v568 = vunpack.c.h.b16 %v267
      %v569 = vpack.c.b16 %v383, %v377
      %v570 = vpack.c.b16 %v384, %v378
      %v571 = vpack.c.b16 %v385, %v379
      %v572 = vpack.c.b16 %v386, %v380
      %v573 = vpack.c.b16 %v387, %v381
      %v574 = vpack.c.b16 %v388, %v382
      %v575 = vpack.c.b16 %v395, %v389
      %v576 = vpack.c.b16 %v396, %v390
      %v577 = vpack.c.b16 %v397, %v391
      %v578 = vpack.c.b16 %v398, %v392
      %v579 = vpack.c.b16 %v399, %v393
      %v580 = vpack.c.b16 %v400, %v394
      %v581 = vpack.c.b16 %v407, %v401
      %v582 = vpack.c.b16 %v408, %v402
      %v583 = vpack.c.b16 %v409, %v403
      %v584 = vpack.c.b16 %v410, %v404
      %v585 = vpack.c.b16 %v411, %v405
      %v586 = vpack.c.b16 %v412, %v406
      %v587 = vpack.c.b16 %v419, %v413
      %v588 = vpack.c.b16 %v420, %v414
      %v589 = vpack.c.b16 %v421, %v415
      %v590 = vpack.c.b16 %v422, %v416
      %v591 = vpack.c.b16 %v423, %v417
      %v592 = vpack.c.b16 %v424, %v418
      %v593 = vpack.c.b16 %v431, %v425
      %v594 = vpack.c.b16 %v432, %v426
      %v595 = vpack.c.b16 %v433, %v427
      %v596 = vpack.c.b16 %v434, %v428
      %v597 = vpack.c.b16 %v435, %v429
      %v598 = vpack.c.b16 %v436, %v430
      %v599 = vpack.c.b16 %v443, %v437
      %v600 = vpack.c.b16 %v444, %v438
      %v601 = vpack.c.b16 %v445, %v439
      %v602 = vpack.c.b16 %v446, %v440
      %v603 = vpack.c.b16 %v447, %v441
      %v604 = vpack.c.b16 %v448, %v442
      %v605 = vpack.c.b16 %v455, %v449
      %v606 = vpack.c.b16 %v456, %v450
      %v607 = vpack.c.b16 %v457, %v451
      %v608 = vpack.c.b16 %v458, %v452
      %v609 = vpack.c.b16 %v459, %v453
      %v610 = vpack.c.b16 %v460, %v454
      %v611 = vpack.c.b16 %v467, %v461
      %v612 = vpack.c.b16 %v468, %v462
      %v613 = vpack.c.b16 %v469, %v463
      %v614 = vpack.c.b16 %v470, %v464
      %v615 = vpack.c.b16 %v471, %v465
      %v616 = vpack.c.b16 %v472, %v466
      %v617 = vpack.c.b16 %v479, %v473
      %v618 = vpack.c.b16 %v480, %v474
      %v619 = vpack.c.b16 %v481, %v475
      %v620 = vpack.c.b16 %v482, %v476
      %v621 = vpack.c.b16 %v483, %v477
      %v622 = vpack.c.b16 %v484, %v478
      %v623 = vpack.c.b16 %v491, %v485
      %v624 = vpack.c.b16 %v492, %v486
      %v625 = vpack.c.b16 %v493, %v487
      %v626 = vpack.c.b16 %v494, %v488
      %v627 = vpack.c.b16 %v495, %v489
      %v628 = vpack.c.b16 %v496, %v490
      %v629 = vpack.c.b16 %v503, %v497
      %v630 = vpack.c.b16 %v504, %v498
      %v631 = vpack.c.b16 %v505, %v499
      %v632 = vpack.c.b16 %v506, %v500
      %v633 = vpack.c.b16 %v507, %v501
      %v634 = vpack.c.b16 %v508, %v502
      %v635 = vpack.c.b16 %v515, %v509
      %v636 = vpack.c.b16 %v516, %v510
      %v637 = vpack.c.b16 %v517, %v511
      %v638 = vpack.c.b16 %v518, %v512
      %v639 = vpack.c.b16 %v519, %v513
      %v640 = vpack.c.b16 %v520, %v514
      %v641 = vpack.c.b16 %v527, %v521
      %v642 = vpack.c.b16 %v528, %v522
      %v643 = vpack.c.b16 %v529, %v523
      %v644 = vpack.c.b16 %v530, %v524
      %v645 = vpack.c.b16 %v531, %v525
      %v646 = vpack.c.b16 %v532, %v526
      %v647 = vpack.c.b16 %v539, %v533
      %v648 = vpack.c.b16 %v540, %v534
      %v649 = vpack.c.b16 %v541, %v535
      %v650 = vpack.c.b16 %v542, %v536
      %v651 = vpack.c.b16 %v543, %v537
      %v652 = vpack.c.b16 %v544, %v538
      %v653 = vpack.c.b16 %v551, %v545
      %v654 = vpack.c.b16 %v552, %v546
      %v655 = vpack.c.b16 %v553, %v547
      %v656 = vpack.c.b16 %v554, %v548
      %v657 = vpack.c.b16 %v555, %v549
      %v658 = vpack.c.b16 %v556, %v550
      %v659 = vpack.c.b16 %v563, %v557
      %v660 = vpack.c.b16 %v564, %v558
      %v661 = vpack.c.b16 %v565, %v559
      %v662 = vpack.c.b16 %v566, %v560
      %v663 = vpack.c.b16 %v567, %v561
      %v664 = vpack.c.b16 %v568, %v562
      %761 = vmatpush.bf16.msra.mxu0 %v611
      %762 = vmatpush.bf16.msra.mxu0 %v605
      %763 = vmatpush.bf16.msra.mxu0 %v599
      %764 = vmatpush.bf16.msra.mxu0 %v593
      %765 = vmatpush.bf16.msra.mxu0 %v587
      %766 = vmatpush.bf16.msra.mxu0 %v581
      %767 = vmatpush.bf16.msra.mxu0 %v575
      %768 = vmatpush.bf16.msra.mxu0 %v569
      %769 = vmatmul.bf16.gmra.mxu0 %v277
      %v770 = vpop.f32.mrf.mxu0
      %v771 = vadd.f32 %v272, %v770
      %v772 = vpop.f32.mrf.mxu0
      %773 = vdwg.mxu0
      %774 = vmatpush.bf16.msra.mxu0 %v659
      %775 = vmatpush.bf16.msra.mxu0 %v653
      %776 = vmatpush.bf16.msra.mxu0 %v647
      %777 = vmatpush.bf16.msra.mxu0 %v641
      %778 = vmatpush.bf16.msra.mxu0 %v635
      %779 = vmatpush.bf16.msra.mxu0 %v629
      %780 = vmatpush.bf16.msra.mxu0 %v623
      %781 = vmatpush.bf16.msra.mxu0 %v617
      %782 = vmatmul.bf16.gmra.mxu0 %v278
      %v783 = vpop.f32.mrf.mxu0
      %v784 = vadd.f32 %v771, %v783
      %v785 = vpop.f32.mrf.mxu0
      %786 = vdwg.mxu0
      %787 = vmatpush.bf16.msra.mxu0 %v612
      %788 = vmatpush.bf16.msra.mxu0 %v606
      %789 = vmatpush.bf16.msra.mxu0 %v600
      %790 = vmatpush.bf16.msra.mxu0 %v594
      %791 = vmatpush.bf16.msra.mxu0 %v588
      %792 = vmatpush.bf16.msra.mxu0 %v582
      %793 = vmatpush.bf16.msra.mxu0 %v576
      %794 = vmatpush.bf16.msra.mxu0 %v570
      %795 = vmatmul.bf16.gmra.mxu0 %v277
      %v796 = vpop.f32.mrf.mxu0
      %v797 = vadd.f32 %v272, %v796
      %v798 = vpop.f32.mrf.mxu0
      %799 = vdwg.mxu0
      %800 = vmatpush.bf16.msra.mxu0 %v660
      %801 = vmatpush.bf16.msra.mxu0 %v654
      %802 = vmatpush.bf16.msra.mxu0 %v648
      %803 = vmatpush.bf16.msra.mxu0 %v642
      %804 = vmatpush.bf16.msra.mxu0 %v636
      %805 = vmatpush.bf16.msra.mxu0 %v630
      %806 = vmatpush.bf16.msra.mxu0 %v624
      %807 = vmatpush.bf16.msra.mxu0 %v618
      %808 = vmatmul.bf16.gmra.mxu0 %v278
      %v809 = vpop.f32.mrf.mxu0
      %v810 = vadd.f32 %v797, %v809
      %v811 = vpop.f32.mrf.mxu0
      %812 = vdwg.mxu0
      %813 = vmatpush.bf16.msra.mxu0 %v613
      %814 = vmatpush.bf16.msra.mxu0 %v607
      %815 = vmatpush.bf16.msra.mxu0 %v601
      %816 = vmatpush.bf16.msra.mxu0 %v595
      %817 = vmatpush.bf16.msra.mxu0 %v589
      %818 = vmatpush.bf16.msra.mxu0 %v583
      %819 = vmatpush.bf16.msra.mxu0 %v577
      %820 = vmatpush.bf16.msra.mxu0 %v571
      %821 = vmatmul.bf16.gmra.mxu0 %v277
      %v822 = vpop.f32.mrf.mxu0
      %v823 = vadd.f32 %v272, %v822
      %v824 = vpop.f32.mrf.mxu0
      %825 = vdwg.mxu0
      %826 = vmatpush.bf16.msra.mxu0 %v661
      %827 = vmatpush.bf16.msra.mxu0 %v655
      %828 = vmatpush.bf16.msra.mxu0 %v649
      %829 = vmatpush.bf16.msra.mxu0 %v643
      %830 = vmatpush.bf16.msra.mxu0 %v637
      %831 = vmatpush.bf16.msra.mxu0 %v631
      %832 = vmatpush.bf16.msra.mxu0 %v625
      %833 = vmatpush.bf16.msra.mxu0 %v619
      %834 = vmatmul.bf16.gmra.mxu0 %v278
      %v835 = vpop.f32.mrf.mxu0
      %v836 = vadd.f32 %v823, %v835
      %v837 = vpop.f32.mrf.mxu0
      %838 = vdwg.mxu0
      %839 = vmatpush.bf16.msra.mxu0 %v614
      %840 = vmatpush.bf16.msra.mxu0 %v608
      %841 = vmatpush.bf16.msra.mxu0 %v602
      %842 = vmatpush.bf16.msra.mxu0 %v596
      %843 = vmatpush.bf16.msra.mxu0 %v590
      %844 = vmatpush.bf16.msra.mxu0 %v584
      %845 = vmatpush.bf16.msra.mxu0 %v578
      %846 = vmatpush.bf16.msra.mxu0 %v572
      %847 = vmatmul.bf16.gmra.mxu0 %v277
      %v848 = vpop.f32.mrf.mxu0
      %v849 = vadd.f32 %v272, %v848
      %v850 = vpop.f32.mrf.mxu0
      %851 = vdwg.mxu0
      %852 = vmatpush.bf16.msra.mxu0 %v662
      %853 = vmatpush.bf16.msra.mxu0 %v656
      %854 = vmatpush.bf16.msra.mxu0 %v650
      %855 = vmatpush.bf16.msra.mxu0 %v644
      %856 = vmatpush.bf16.msra.mxu0 %v638
      %857 = vmatpush.bf16.msra.mxu0 %v632
      %858 = vmatpush.bf16.msra.mxu0 %v626
      %859 = vmatpush.bf16.msra.mxu0 %v620
      %860 = vmatmul.bf16.gmra.mxu0 %v278
      %v861 = vpop.f32.mrf.mxu0
      %v862 = vadd.f32 %v849, %v861
      %v863 = vpop.f32.mrf.mxu0
      %864 = vdwg.mxu0
      %865 = vmatpush.bf16.msra.mxu0 %v615
      %866 = vmatpush.bf16.msra.mxu0 %v609
      %867 = vmatpush.bf16.msra.mxu0 %v603
      %868 = vmatpush.bf16.msra.mxu0 %v597
      %869 = vmatpush.bf16.msra.mxu0 %v591
      %870 = vmatpush.bf16.msra.mxu0 %v585
      %871 = vmatpush.bf16.msra.mxu0 %v579
      %872 = vmatpush.bf16.msra.mxu0 %v573
      %873 = vmatmul.bf16.gmra.mxu0 %v277
      %v874 = vpop.f32.mrf.mxu0
      %v875 = vadd.f32 %v272, %v874
      %v876 = vpop.f32.mrf.mxu0
      %877 = vdwg.mxu0
      %878 = vmatpush.bf16.msra.mxu0 %v663
      %879 = vmatpush.bf16.msra.mxu0 %v657
      %880 = vmatpush.bf16.msra.mxu0 %v651
      %881 = vmatpush.bf16.msra.mxu0 %v645
      %882 = vmatpush.bf16.msra.mxu0 %v639
      %883 = vmatpush.bf16.msra.mxu0 %v633
      %884 = vmatpush.bf16.msra.mxu0 %v627
      %885 = vmatpush.bf16.msra.mxu0 %v621
      %886 = vmatmul.bf16.gmra.mxu0 %v278
      %v887 = vpop.f32.mrf.mxu0
      %v888 = vadd.f32 %v875, %v887
      %v889 = vpop.f32.mrf.mxu0
      %890 = vdwg.mxu0
      %891 = vmatpush.bf16.msra.mxu0 %v616
      %892 = vmatpush.bf16.msra.mxu0 %v610
      %893 = vmatpush.bf16.msra.mxu0 %v604
      %894 = vmatpush.bf16.msra.mxu0 %v598
      %895 = vmatpush.bf16.msra.mxu0 %v592
      %896 = vmatpush.bf16.msra.mxu0 %v586
      %897 = vmatpush.bf16.msra.mxu0 %v580
      %898 = vmatpush.bf16.msra.mxu0 %v574
      %899 = vmatmul.bf16.gmra.mxu0 %v277
      %v900 = vpop.f32.mrf.mxu0
      %v901 = vadd.f32 %v272, %v900
      %v902 = vpop.f32.mrf.mxu0
      %903 = vdwg.mxu0
      %904 = vmatpush.bf16.msra.mxu0 %v664
      %905 = vmatpush.bf16.msra.mxu0 %v658
      %906 = vmatpush.bf16.msra.mxu0 %v652
      %907 = vmatpush.bf16.msra.mxu0 %v646
      %908 = vmatpush.bf16.msra.mxu0 %v640
      %909 = vmatpush.bf16.msra.mxu0 %v634
      %910 = vmatpush.bf16.msra.mxu0 %v628
      %911 = vmatpush.bf16.msra.mxu0 %v622
      %912 = vmatmul.bf16.gmra.mxu0 %v278
      %v913 = vpop.f32.mrf.mxu0
      %v914 = vadd.f32 %v901, %v913
      %v915 = vpop.f32.mrf.mxu0
      %916 = vdwg.mxu0
      %v917 = vmul.f32 %v784, 0.01
      %v918 = vmul.f32 %v810, 0.01
      %v919 = vmul.f32 %v836, 0.01
      %v920 = vmul.f32 %v862, 0.01
      %v921 = vmul.f32 %v888, 0.01
      %v922 = vmul.f32 %v914, 0.01
      %v923 = vmax.f32 %v784, %v917
      %v924 = vmax.f32 %v810, %v918
      %v925 = vmax.f32 %v836, %v919
      %v926 = vmax.f32 %v862, %v920
      %v927 = vmax.f32 %v888, %v921
      %v928 = vmax.f32 %v914, %v922
      %929 = vst [vmem:[%s170] sm:$0xff] %v923
      %930 = vst [vmem:[%s170 + $0x8] sm:$0xff] %v924
      %931 = vst [vmem:[%s170 + $0x10] sm:$0xff] %v925
      %932 = vst [vmem:[%s170 + $0x18] sm:$0xff] %v926
      %933 = vst [vmem:[%s170 + $0x20] sm:$0xff] %v927
      %934 = vst [vmem:[%s170 + $0x28] sm:$0xff] %v928
      %p935 = scmp.lt.s32.totalorder %s14, 1
      %s936 = scalar_select %p935, %s14, 1
      %s937 = smul.addr %s936, 6
      %s938 = smul.addr %s937, 8
      %s939 = scalar_lea.vmem %s3, %s938
      // Predicated region
      $region33: #{adverserial_forward.4} parent=31 // pred_check
        %p940 = pneg %p100
      $region34: #{adverserial_forward.4} parent=31 // pred_check_branch
        %942 = sbr.rel (%p940) target = $region36
      $region35: #{adverserial_forward.4} parent=31 // pred_region
        _
      $region36: #{adverserial_forward.4} parent=31 // pred_fallthru
        _
    $region32: #{adverserial_forward.4} parent=5 // pred_fallthru
      _
    %p943 = scmp.le.s32.totalorder 2, %s9
    // Predicated region
    $region37: #{adverserial_forward.4} parent=5 // pred_check
      %p944 = pneg %p943
    $region38: #{adverserial_forward.4} parent=5 // pred_check_branch
      %946 = sbr.rel (%p944) target = $region40
    $region39: #{adverserial_forward.4} parent=5 // pred_region
      %s947 = ssub.s32 %s9, 2
      // Predicated region
      $region41: #{adverserial_forward.4} parent=39 // pred_check
        %p948 = pneg %p106
      $region42: #{adverserial_forward.4} parent=39 // pred_check_branch
        %950 = sbr.rel (%p948) target = $region44
      $region43: #{adverserial_forward.4} parent=39 // pred_region
        %p951 = scmp.lt.s32.totalorder %s15, 1
        %s952 = scalar_select %p951, %s15, 1
        %s953 = smul.addr %s952, 6
        %s954 = smul.addr %s953, 8
        %s955 = scalar_lea.vmem %s3, %s954
      $region44: #{adverserial_forward.4} parent=39 // pred_fallthru
        _
    $region40: #{adverserial_forward.4} parent=5 // pred_fallthru
      _
  $region6: #{adverserial_forward.4} parent=0 // loop_footer
    %s13 = sadd.s32 1, %s9
  $region7: #{adverserial_forward.4} parent=0 // loop_footer_branch
    %8 = sbr.rel target = $region3
  $region8: #{adverserial_forward.4} parent=0 // loop_exit
    _

// kernel: adverserial_forward.5
$region0: #{adverserial_forward.5}
  #allocation0 [shape = 'u32[]', space=smem, size = 0x4, offset = 0x4, fixed_abs, tag = 'smem constant byte address 0x4 - core index']
  #allocation1 [shape = 'u32[72,128]{1,0:T(1,128)}', space=vmem, size = 0x9000, scoped, tag = 'internal scratch']
  %s0 = inlined_call_operand.vmem [shape: bf16[16,512], index: 0, kind: input, shape index: {}]
  %s1 = inlined_call_operand.vmem [shape: f32[16,1], index: 1, kind: input, shape index: {}]
  %s2 = inlined_call_operand.vmem [shape: bf16[2,512,128], index: 2, kind: input, shape index: {}]
  %s3 = inlined_call_operand.vmem [shape: f32[2,16,128], index: 3, kind: output, shape index: {}]
  %s4 = sld [smem:[#allocation0]]
  $region45: #{adverserial_forward.5} parent=0
    _
  %s6 = ssub.s32 1, %s4
  %s7 = scalar_select 0, %s6, %s4
  loop: start=0, step=1, limit=4
  $region2: #{adverserial_forward.5} parent=0 // loop_pre_header
    _
  $region3: #{adverserial_forward.5} parent=0 // loop_header
    %s9 = sphi 0, %s13
    %p10 = scmp.ge.s32.totalorder %s9, 4
    %s17 = sphi 0, %s17
    %s19 = sphi 0, %s17
    %s20 = sphi 0, %s19
    %s34 = sphi 0, %s20
    %s38 = sphi 0, %s38
    %s40 = sphi 0, %s38
    %s41 = sphi 0, %s40
    %s55 = sphi 0, %s41
    %s61 = sphi 0, %s63
    %s64 = sphi 0, %s61
    %s65 = sphi 0, %s64
    %s81 = sphi 0, %s65
    %s87 = sphi 0, %s89
    %s90 = sphi 0, %s87
    %s91 = sphi 0, %s90
    %s107 = sphi 0, %s91
  $region4: #{adverserial_forward.5} parent=0 // loop_header_branch
    %12 = sbr.rel (%p10) target = $region8
  $region5: #{adverserial_forward.5} parent=0 // loop_body
    %s14 = ssub.s32 %s9, 1
    %s15 = ssub.s32 %s9, 2
    %s16 = sadd.s32 %s9, 1
    %s18 = sadd.s32 %s17, 1
    %p21 = scmp.eq.s32.totalorder %s9, 1
    %p22 = scmp.ne.s32.totalorder %s17, %s19
    %p23 = scmp.eq.s32.totalorder %s9, 0
    %p24 = por %p22, %p23
    %p25 = scmp.ne.s32.totalorder %s17, %s19
    %p26 = scmp.eq.s32.totalorder %s14, 1
    %p27 = por %p25, %p26
    %p28 = scmp.ne.s32.totalorder %s19, %s20
    %p29 = scmp.eq.s32.totalorder %s14, 0
    %p30 = por %p28, %p29
    %p31 = scmp.ne.s32.totalorder %s19, %s20
    %p32 = scmp.eq.s32.totalorder %s15, 1
    %p33 = por %p31, %p32
    %p35 = scmp.ne.s32.totalorder %s20, %s34
    %p36 = scmp.eq.s32.totalorder %s15, 0
    %p37 = por %p35, %p36
    %s39 = sadd.s32 %s38, 1
    %p42 = scmp.eq.s32.totalorder %s9, 1
    %p43 = scmp.ne.s32.totalorder %s38, %s40
    %p44 = scmp.eq.s32.totalorder %s9, 0
    %p45 = por %p43, %p44
    %p46 = scmp.ne.s32.totalorder %s38, %s40
    %p47 = scmp.eq.s32.totalorder %s14, 1
    %p48 = por %p46, %p47
    %p49 = scmp.ne.s32.totalorder %s40, %s41
    %p50 = scmp.eq.s32.totalorder %s14, 0
    %p51 = por %p49, %p50
    %p52 = scmp.ne.s32.totalorder %s40, %s41
    %p53 = scmp.eq.s32.totalorder %s15, 1
    %p54 = por %p52, %p53
    %p56 = scmp.ne.s32.totalorder %s41, %s55
    %p57 = scmp.eq.s32.totalorder %s15, 0
    %p58 = por %p56, %p57
    %s59 = ssub.s32 %s9, %s16
    %p60 = scmp.eq.s32.totalorder %s59, 0
    %s62 = sadd.s32 %s61, 1
    %s63 = scalar_select %p60, %s61, %s62
    %p66 = pneg %p60
    %p67 = scmp.eq.s32.totalorder %s9, 1
    %p68 = por %p66, %p67
    %p69 = scmp.ne.s32.totalorder %s61, %s64
    %p70 = scmp.eq.s32.totalorder %s9, 0
    %p71 = por %p69, %p70
    %p72 = scmp.ne.s32.totalorder %s61, %s64
    %p73 = scmp.eq.s32.totalorder %s14, 1
    %p74 = por %p72, %p73
    %p75 = scmp.ne.s32.totalorder %s64, %s65
    %p76 = scmp.eq.s32.totalorder %s14, 0
    %p77 = por %p75, %p76
    %p78 = scmp.ne.s32.totalorder %s64, %s65
    %p79 = scmp.eq.s32.totalorder %s15, 1
    %p80 = por %p78, %p79
    %p82 = scmp.ne.s32.totalorder %s65, %s81
    %p83 = scmp.eq.s32.totalorder %s15, 0
    %p84 = por %p82, %p83
    %s85 = ssub.s32 %s9, %s16
    %p86 = scmp.eq.s32.totalorder %s85, 0
    %s88 = sadd.s32 %s87, 1
    %s89 = scalar_select %p86, %s87, %s88
    %p92 = pneg %p86
    %p93 = scmp.eq.s32.totalorder %s9, 1
    %p94 = por %p92, %p93
    %p95 = scmp.ne.s32.totalorder %s87, %s90
    %p96 = scmp.eq.s32.totalorder %s9, 0
    %p97 = por %p95, %p96
    %p98 = scmp.ne.s32.totalorder %s87, %s90
    %p99 = scmp.eq.s32.totalorder %s14, 1
    %p100 = por %p98, %p99
    %p101 = scmp.ne.s32.totalorder %s90, %s91
    %p102 = scmp.eq.s32.totalorder %s14, 0
    %p103 = por %p101, %p102
    %p104 = scmp.ne.s32.totalorder %s90, %s91
    %p105 = scmp.eq.s32.totalorder %s15, 1
    %p106 = por %p104, %p105
    %p108 = scmp.ne.s32.totalorder %s91, %s107
    %p109 = scmp.eq.s32.totalorder %s15, 0
    %p110 = por %p108, %p109
    %p111 = scmp.le.s32.totalorder 1, %s9
    %p112 = scmp.lt.s32.totalorder %s9, 3
    %p113 = pnand %p111, %p112
    %p114 = pneg %p113
    // Predicated region
    $region9: #{adverserial_forward.5} parent=5 // pred_check
      _
    $region10: #{adverserial_forward.5} parent=5 // pred_check_branch
      %116 = sbr.rel (%p113) target = $region12
    $region11: #{adverserial_forward.5} parent=5 // pred_region
      %s117 = ssub.s32 %s9, 1
      // Predicated region
      $region13: #{adverserial_forward.5} parent=11 // pred_check
        %p118 = pneg %p30
      $region14: #{adverserial_forward.5} parent=11 // pred_check_branch
        %120 = sbr.rel (%p118) target = $region16
      $region15: #{adverserial_forward.5} parent=11 // pred_region
        _
      $region16: #{adverserial_forward.5} parent=11 // pred_fallthru
        _
      // Predicated region
      $region17: #{adverserial_forward.5} parent=11 // pred_check
        %p121 = pneg %p51
      $region18: #{adverserial_forward.5} parent=11 // pred_check_branch
        %123 = sbr.rel (%p121) target = $region20
      $region19: #{adverserial_forward.5} parent=11 // pred_region
        _
      $region20: #{adverserial_forward.5} parent=11 // pred_fallthru
        _
    $region12: #{adverserial_forward.5} parent=5 // pred_fallthru
      _
    %p124 = scmp.lt.s32.totalorder %s9, 2
    // Predicated region
    $region21: #{adverserial_forward.5} parent=5 // pred_check
      %p125 = pneg %p124
    $region22: #{adverserial_forward.5} parent=5 // pred_check_branch
      %127 = sbr.rel (%p125) target = $region24
    $region23: #{adverserial_forward.5} parent=5 // pred_region
      // Predicated region
      $region25: #{adverserial_forward.5} parent=23 // pred_check
        %p128 = pneg %p71
      $region26: #{adverserial_forward.5} parent=23 // pred_check_branch
        %130 = sbr.rel (%p128) target = $region28
      $region27: #{adverserial_forward.5} parent=23 // pred_region
        %p131 = scmp.lt.s32.totalorder %s9, 1
        %s132 = scalar_select %p131, %s9, 1
        %s133 = smul.addr %s132, 64
        %s134 = smul.addr %s133, 4
        %s135 = scalar_lea.vmem %s2, %s134
      $region28: #{adverserial_forward.5} parent=23 // pred_fallthru
        _
    $region24: #{adverserial_forward.5} parent=5 // pred_fallthru
      _
    %p136 = scmp.le.s32.totalorder 1, %s9
    %p137 = scmp.lt.s32.totalorder %s9, 3
    %p138 = pnand %p136, %p137
    %p139 = pneg %p138
    // Predicated region
    $region29: #{adverserial_forward.5} parent=5 // pred_check
      _
    $region30: #{adverserial_forward.5} parent=5 // pred_check_branch
      %141 = sbr.rel (%p138) target = $region32
    $region31: #{adverserial_forward.5} parent=5 // pred_region
      %s142 = ssub.s32 %s9, 1
      %p143 = pneg %p30
      %p144 = pneg %p27
      %p145 = pneg %p51
      %p146 = pneg %p48
      %p147 = scmp.lt.s32.totalorder %s14, 1
      %s148 = scalar_select %p147, %s14, 1
      %s149 = smul.addr %s148, 64
      %s150 = smul.addr %s149, 4
      %s151 = scalar_lea.vmem %s2, %s150
      %p152 = pneg %p77
      %p153 = pneg %p74
      %p154 = pneg %p103
      %p155 = pneg %p100
      %p156 = scmp.lt.s32.totalorder %s14, 1
      %s157 = scalar_select %p156, %s14, 1
      %s158 = smul.addr %s157, 2
      %s159 = smul.addr %s158, 8
      %s160 = scalar_lea.vmem %s3, %s159
      %p161 = scmp.lt.s32.totalorder %s14, 1
      %s162 = scalar_select %p161, %s14, 1
      %s163 = smul.addr %s162, 64
      %s164 = smul.addr %s163, 4
      %s165 = scalar_lea.vmem %s2, %s164
      %p166 = scmp.lt.s32.totalorder %s14, 1
      %s167 = scalar_select %p166, %s14, 1
      %s168 = smul.addr %s167, 2
      %s169 = smul.addr %s168, 8
      %s170 = scalar_lea.vmem %s3, %s169
      %v171 = vld [vmem:[%s0] sm:$0xff]
      %v172 = vld [vmem:[%s0 + $0x8] sm:$0xff]
      %v173 = vld [vmem:[%s0 + $0x10] sm:$0xff]
      %v174 = vld [vmem:[%s0 + $0x18] sm:$0xff]
      %v175 = vld [vmem:[%s165] sm:$0xf]
      %v176 = vld [vmem:[%s165 + $0x4] sm:$0xf]
      %v177 = vld [vmem:[%s165 + $0x8] sm:$0xf]
      %v178 = vld [vmem:[%s165 + $0xc] sm:$0xf]
      %v179 = vld [vmem:[%s165 + $0x10] sm:$0xf]
      %v180 = vld [vmem:[%s165 + $0x14] sm:$0xf]
      %v181 = vld [vmem:[%s165 + $0x18] sm:$0xf]
      %v182 = vld [vmem:[%s165 + $0x1c] sm:$0xf]
      %v183 = vld [vmem:[%s165 + $0x20] sm:$0xf]
      %v184 = vld [vmem:[%s165 + $0x24] sm:$0xf]
      %v185 = vld [vmem:[%s165 + $0x28] sm:$0xf]
      %v186 = vld [vmem:[%s165 + $0x2c] sm:$0xf]
      %v187 = vld [vmem:[%s165 + $0x30] sm:$0xf]
      %v188 = vld [vmem:[%s165 + $0x34] sm:$0xf]
      %v189 = vld [vmem:[%s165 + $0x38] sm:$0xf]
      %v190 = vld [vmem:[%s165 + $0x3c] sm:$0xf]
      %v191 = vld [vmem:[%s165 + $0x40] sm:$0xf]
      %v192 = vld [vmem:[%s165 + $0x44] sm:$0xf]
      %v193 = vld [vmem:[%s165 + $0x48] sm:$0xf]
      %v194 = vld [vmem:[%s165 + $0x4c] sm:$0xf]
      %v195 = vld [vmem:[%s165 + $0x50] sm:$0xf]
      %v196 = vld [vmem:[%s165 + $0x54] sm:$0xf]
      %v197 = vld [vmem:[%s165 + $0x58] sm:$0xf]
      %v198 = vld [vmem:[%s165 + $0x5c] sm:$0xf]
      %v199 = vld [vmem:[%s165 + $0x60] sm:$0xf]
      %v200 = vld [vmem:[%s165 + $0x64] sm:$0xf]
      %v201 = vld [vmem:[%s165 + $0x68] sm:$0xf]
      %v202 = vld [vmem:[%s165 + $0x6c] sm:$0xf]
      %v203 = vld [vmem:[%s165 + $0x70] sm:$0xf]
      %v204 = vld [vmem:[%s165 + $0x74] sm:$0xf]
      %v205 = vld [vmem:[%s165 + $0x78] sm:$0xf]
      %v206 = vld [vmem:[%s165 + $0x7c] sm:$0xf]
      %v207 = vld [vmem:[%s165 + $0x80] sm:$0xf]
      %v208 = vld [vmem:[%s165 + $0x84] sm:$0xf]
      %v209 = vld [vmem:[%s165 + $0x88] sm:$0xf]
      %v210 = vld [vmem:[%s165 + $0x8c] sm:$0xf]
      %v211 = vld [vmem:[%s165 + $0x90] sm:$0xf]
      %v212 = vld [vmem:[%s165 + $0x94] sm:$0xf]
      %v213 = vld [vmem:[%s165 + $0x98] sm:$0xf]
      %v214 = vld [vmem:[%s165 + $0x9c] sm:$0xf]
      %v215 = vld [vmem:[%s165 + $0xa0] sm:$0xf]
      %v216 = vld [vmem:[%s165 + $0xa4] sm:$0xf]
      %v217 = vld [vmem:[%s165 + $0xa8] sm:$0xf]
      %v218 = vld [vmem:[%s165 + $0xac] sm:$0xf]
      %v219 = vld [vmem:[%s165 + $0xb0] sm:$0xf]
      %v220 = vld [vmem:[%s165 + $0xb4] sm:$0xf]
      %v221 = vld [vmem:[%s165 + $0xb8] sm:$0xf]
      %v222 = vld [vmem:[%s165 + $0xbc] sm:$0xf]
      %v223 = vld [vmem:[%s165 + $0xc0] sm:$0xf]
      %v224 = vld [vmem:[%s165 + $0xc4] sm:$0xf]
      %v225 = vld [vmem:[%s165 + $0xc8] sm:$0xf]
      %v226 = vld [vmem:[%s165 + $0xcc] sm:$0xf]
      %v227 = vld [vmem:[%s165 + $0xd0] sm:$0xf]
      %v228 = vld [vmem:[%s165 + $0xd4] sm:$0xf]
      %v229 = vld [vmem:[%s165 + $0xd8] sm:$0xf]
      %v230 = vld [vmem:[%s165 + $0xdc] sm:$0xf]
      %v231 = vld [vmem:[%s165 + $0xe0] sm:$0xf]
      %v232 = vld [vmem:[%s165 + $0xe4] sm:$0xf]
      %v233 = vld [vmem:[%s165 + $0xe8] sm:$0xf]
      %v234 = vld [vmem:[%s165 + $0xec] sm:$0xf]
      %v235 = vld [vmem:[%s165 + $0xf0] sm:$0xf]
      %v236 = vld [vmem:[%s165 + $0xf4] sm:$0xf]
      %v237 = vld [vmem:[%s165 + $0xf8] sm:$0xf]
      %v238 = vld [vmem:[%s165 + $0xfc] sm:$0xf]
      %v243 = vunpack.c.l.b16 %v171
      %v244 = vunpack.c.h.b16 %v171
      %v245 = vunpack.c.l.b16 %v172
      %v246 = vunpack.c.h.b16 %v172
      %v247 = vunpack.c.l.b16 %v173
      %v248 = vunpack.c.h.b16 %v173
      %v249 = vunpack.c.l.b16 %v174
      %v250 = vunpack.c.h.b16 %v174
      %v251 = vpack.c.b16 %v247, %v243
      %v252 = vpack.c.b16 %v248, %v244
      %v253 = vpack.c.b16 %v249, %v245
      %v254 = vpack.c.b16 %v250, %v246
      %v323 = vunpack.c.l.b16 %v175
      %v324 = vunpack.c.l.b16 %v176
      %v325 = vunpack.c.l.b16 %v177
      %v326 = vunpack.c.l.b16 %v178
      %v327 = vunpack.c.l.b16 %v179
      %v328 = vunpack.c.l.b16 %v180
      %v329 = vunpack.c.l.b16 %v181
      %v330 = vunpack.c.l.b16 %v182
      %v331 = vunpack.c.l.b16 %v183
      %v332 = vunpack.c.l.b16 %v184
      %v333 = vunpack.c.l.b16 %v185
      %v334 = vunpack.c.l.b16 %v186
      %v335 = vunpack.c.l.b16 %v187
      %v336 = vunpack.c.l.b16 %v188
      %v337 = vunpack.c.l.b16 %v189
      %v338 = vunpack.c.l.b16 %v190
      %v339 = vunpack.c.l.b16 %v191
      %v340 = vunpack.c.l.b16 %v192
      %v341 = vunpack.c.l.b16 %v193
      %v342 = vunpack.c.l.b16 %v194
      %v343 = vunpack.c.l.b16 %v195
      %v344 = vunpack.c.l.b16 %v196
      %v345 = vunpack.c.l.b16 %v197
      %v346 = vunpack.c.l.b16 %v198
      %v347 = vunpack.c.l.b16 %v199
      %v348 = vunpack.c.l.b16 %v200
      %v349 = vunpack.c.l.b16 %v201
      %v350 = vunpack.c.l.b16 %v202
      %v351 = vunpack.c.l.b16 %v203
      %v352 = vunpack.c.l.b16 %v204
      %v353 = vunpack.c.l.b16 %v205
      %v354 = vunpack.c.l.b16 %v206
      %v355 = vunpack.c.l.b16 %v207
      %v356 = vunpack.c.l.b16 %v208
      %v357 = vunpack.c.l.b16 %v209
      %v358 = vunpack.c.l.b16 %v210
      %v359 = vunpack.c.l.b16 %v211
      %v360 = vunpack.c.l.b16 %v212
      %v361 = vunpack.c.l.b16 %v213
      %v362 = vunpack.c.l.b16 %v214
      %v363 = vunpack.c.l.b16 %v215
      %v364 = vunpack.c.l.b16 %v216
      %v365 = vunpack.c.l.b16 %v217
      %v366 = vunpack.c.l.b16 %v218
      %v367 = vunpack.c.l.b16 %v219
      %v368 = vunpack.c.l.b16 %v220
      %v369 = vunpack.c.l.b16 %v221
      %v370 = vunpack.c.l.b16 %v222
      %v371 = vunpack.c.l.b16 %v223
      %v372 = vunpack.c.l.b16 %v224
      %v373 = vunpack.c.l.b16 %v225
      %v374 = vunpack.c.l.b16 %v226
      %v375 = vunpack.c.l.b16 %v227
      %v376 = vunpack.c.l.b16 %v228
      %v377 = vunpack.c.l.b16 %v229
      %v378 = vunpack.c.l.b16 %v230
      %v379 = vunpack.c.l.b16 %v231
      %v380 = vunpack.c.l.b16 %v232
      %v381 = vunpack.c.l.b16 %v233
      %v382 = vunpack.c.l.b16 %v234
      %v383 = vunpack.c.l.b16 %v235
      %v384 = vunpack.c.l.b16 %v236
      %v385 = vunpack.c.l.b16 %v237
      %v386 = vunpack.c.l.b16 %v238
      %v387 = vpack.c.b16 %v324, %v323
      %v388 = vpack.c.b16 %v326, %v325
      %v389 = vpack.c.b16 %v328, %v327
      %v390 = vpack.c.b16 %v330, %v329
      %v391 = vpack.c.b16 %v332, %v331
      %v392 = vpack.c.b16 %v334, %v333
      %v393 = vpack.c.b16 %v336, %v335
      %v394 = vpack.c.b16 %v338, %v337
      %v395 = vpack.c.b16 %v340, %v339
      %v396 = vpack.c.b16 %v342, %v341
      %v397 = vpack.c.b16 %v344, %v343
      %v398 = vpack.c.b16 %v346, %v345
      %v399 = vpack.c.b16 %v348, %v347
      %v400 = vpack.c.b16 %v350, %v349
      %v401 = vpack.c.b16 %v352, %v351
      %v402 = vpack.c.b16 %v354, %v353
      %v403 = vpack.c.b16 %v356, %v355
      %v404 = vpack.c.b16 %v358, %v357
      %v405 = vpack.c.b16 %v360, %v359
      %v406 = vpack.c.b16 %v362, %v361
      %v407 = vpack.c.b16 %v364, %v363
      %v408 = vpack.c.b16 %v366, %v365
      %v409 = vpack.c.b16 %v368, %v367
      %v410 = vpack.c.b16 %v370, %v369
      %v411 = vpack.c.b16 %v372, %v371
      %v412 = vpack.c.b16 %v374, %v373
      %v413 = vpack.c.b16 %v376, %v375
      %v414 = vpack.c.b16 %v378, %v377
      %v415 = vpack.c.b16 %v380, %v379
      %v416 = vpack.c.b16 %v382, %v381
      %v417 = vpack.c.b16 %v384, %v383
      %v418 = vpack.c.b16 %v386, %v385
      %451 = vmatpush.bf16.msra.mxu0 %v394
      %452 = vmatpush.bf16.msra.mxu0 %v393
      %453 = vmatpush.bf16.msra.mxu0 %v392
      %454 = vmatpush.bf16.msra.mxu0 %v391
      %455 = vmatpush.bf16.msra.mxu0 %v390
      %456 = vmatpush.bf16.msra.mxu0 %v389
      %457 = vmatpush.bf16.msra.mxu0 %v388
      %458 = vmatpush.bf16.msra.mxu0 %v387
      %459 = vmatmul.bf16.gmra.mxu0 %v251
      %v460 = vpop.f32.mrf.mxu0
      %v461 = vadd.f32 0.0, %v460
      %v462 = vpop.f32.mrf.mxu0
      %v463 = vadd.f32 0.0, %v462
      %464 = vdwg.mxu0
      %465 = vmatpush.bf16.msra.mxu0 %v402
      %466 = vmatpush.bf16.msra.mxu0 %v401
      %467 = vmatpush.bf16.msra.mxu0 %v400
      %468 = vmatpush.bf16.msra.mxu0 %v399
      %469 = vmatpush.bf16.msra.mxu0 %v398
      %470 = vmatpush.bf16.msra.mxu0 %v397
      %471 = vmatpush.bf16.msra.mxu0 %v396
      %472 = vmatpush.bf16.msra.mxu0 %v395
      %473 = vmatmul.bf16.gmra.mxu0 %v252
      %v474 = vpop.f32.mrf.mxu0
      %v475 = vadd.f32 %v461, %v474
      %v476 = vpop.f32.mrf.mxu0
      %v477 = vadd.f32 %v463, %v476
      %478 = vdwg.mxu0
      %479 = vmatpush.bf16.msra.mxu0 %v410
      %480 = vmatpush.bf16.msra.mxu0 %v409
      %481 = vmatpush.bf16.msra.mxu0 %v408
      %482 = vmatpush.bf16.msra.mxu0 %v407
      %483 = vmatpush.bf16.msra.mxu0 %v406
      %484 = vmatpush.bf16.msra.mxu0 %v405
      %485 = vmatpush.bf16.msra.mxu0 %v404
      %486 = vmatpush.bf16.msra.mxu0 %v403
      %487 = vmatmul.bf16.gmra.mxu0 %v253
      %v488 = vpop.f32.mrf.mxu0
      %v489 = vadd.f32 %v475, %v488
      %v490 = vpop.f32.mrf.mxu0
      %v491 = vadd.f32 %v477, %v490
      %492 = vdwg.mxu0
      %493 = vmatpush.bf16.msra.mxu0 %v418
      %494 = vmatpush.bf16.msra.mxu0 %v417
      %495 = vmatpush.bf16.msra.mxu0 %v416
      %496 = vmatpush.bf16.msra.mxu0 %v415
      %497 = vmatpush.bf16.msra.mxu0 %v414
      %498 = vmatpush.bf16.msra.mxu0 %v413
      %499 = vmatpush.bf16.msra.mxu0 %v412
      %500 = vmatpush.bf16.msra.mxu0 %v411
      %501 = vmatmul.bf16.gmra.mxu0 %v254
      %v502 = vpop.f32.mrf.mxu0
      %v503 = vadd.f32 %v489, %v502
      %v504 = vpop.f32.mrf.mxu0
      %v505 = vadd.f32 %v491, %v504
      %506 = vdwg.mxu0
      %507 = vadd.xlane.f32.xlu0 %v503
      %v508 = vpop.xlane.xlu0 %507
      %509 = vadd.xlane.f32.xlu0 %v505
      %v510 = vpop.xlane.xlu0 %509
      %v511 = vmul.f32 %v508, 0.008
      %v512 = vmul.f32 %v510, 0.008
      %v513 = vmul.f32 %v503, %v503
      %v514 = vmul.f32 %v505, %v505
      %515 = vadd.xlane.f32.xlu0 %v513
      %v516 = vpop.xlane.xlu0 %515
      %517 = vadd.xlane.f32.xlu0 %v514
      %v518 = vpop.xlane.xlu0 %517
      %v519 = vmul.f32 %v516, 0.008
      %v520 = vmul.f32 %v518, 0.008
      %v521 = vmul.f32 %v511, %v511
      %v522 = vmul.f32 %v512, %v512
      %v523 = vsub.f32 %v519, %v521
      %v524 = vsub.f32 %v520, %v522
      %v525 = vsub.f32 %v503, %v511
      %v526 = vsub.f32 %v505, %v512
      %v527 = vadd.f32 %v523, 1e-05
      %v528 = vadd.f32 %v524, 1e-05
      %v529 = vrsqrt.pop %v527
      %v530 = vmul.f32 %v529, %v527
      %v531 = vmul.f32 %v530, %v529
      %v532 = vmul.f32 0.5, %v531
      %v533 = vsub.f32 1.5, %v532
      %v534 = vmul.f32 %v529, %v533
      %vm535 = vweird.f32 %v527
      %vm536 = vweird.f32 %v529
      %vm537 = vmor %vm535, %vm536
      %v538 = vsel %vm537, %v529, %v534
      %v539 = vrsqrt.pop %v528
      %v540 = vmul.f32 %v539, %v528
      %v541 = vmul.f32 %v540, %v539
      %v542 = vmul.f32 0.5, %v541
      %v543 = vsub.f32 1.5, %v542
      %v544 = vmul.f32 %v539, %v543
      %vm545 = vweird.f32 %v528
      %vm546 = vweird.f32 %v539
      %vm547 = vmor %vm545, %vm546
      %v548 = vsel %vm547, %v539, %v544
      %v549 = vmul.f32 %v525, %v538
      %v550 = vmul.f32 %v526, %v548
      %v551 = vmul.f32 %v549, 0.01
      %v552 = vmul.f32 %v550, 0.01
      %v553 = vmax.f32 %v549, %v551
      %v554 = vmax.f32 %v550, %v552
      %555 = vst [vmem:[%s170] sm:$0xff] %v553
      %556 = vst [vmem:[%s170 + $0x8] sm:$0xff] %v554
      %p557 = scmp.lt.s32.totalorder %s14, 1
      %s558 = scalar_select %p557, %s14, 1
      %s559 = smul.addr %s558, 2
      %s560 = smul.addr %s559, 8
      %s561 = scalar_lea.vmem %s3, %s560
      // Predicated region
      $region33: #{adverserial_forward.5} parent=31 // pred_check
        %p562 = pneg %p100
      $region34: #{adverserial_forward.5} parent=31 // pred_check_branch
        %564 = sbr.rel (%p562) target = $region36
      $region35: #{adverserial_forward.5} parent=31 // pred_region
        _
      $region36: #{adverserial_forward.5} parent=31 // pred_fallthru
        _
    $region32: #{adverserial_forward.5} parent=5 // pred_fallthru
      _
    %p565 = scmp.le.s32.totalorder 2, %s9
    // Predicated region
    $region37: #{adverserial_forward.5} parent=5 // pred_check
      %p566 = pneg %p565
    $region38: #{adverserial_forward.5} parent=5 // pred_check_branch
      %568 = sbr.rel (%p566) target = $region40
    $region39: #{adverserial_forward.5} parent=5 // pred_region
      %s569 = ssub.s32 %s9, 2
      // Predicated region
      $region41: #{adverserial_forward.5} parent=39 // pred_check
        %p570 = pneg %p106
      $region42: #{adverserial_forward.5} parent=39 // pred_check_branch
        %572 = sbr.rel (%p570) target = $region44
      $region43: #{adverserial_forward.5} parent=39 // pred_region
        %p573 = scmp.lt.s32.totalorder %s15, 1
        %s574 = scalar_select %p573, %s15, 1
        %s575 = smul.addr %s574, 2
        %s576 = smul.addr %s575, 8
        %s577 = scalar_lea.vmem %s3, %s576
      $region44: #{adverserial_forward.5} parent=39 // pred_fallthru
        _
    $region40: #{adverserial_forward.5} parent=5 // pred_fallthru
      _
  $region6: #{adverserial_forward.5} parent=0 // loop_footer
    %s13 = sadd.s32 1, %s9
  $region7: #{adverserial_forward.5} parent=0 // loop_footer_branch
    %8 = sbr.rel target = $region3
  $region8: #{adverserial_forward.5} parent=0 // loop_exit
    _

// kernel: adverserial_forward.6
$region0: #{adverserial_forward.6}
  #allocation0 [shape = 'u32[]', space=smem, size = 0x4, offset = 0x4, fixed_abs, tag = 'smem constant byte address 0x4 - core index']
  #allocation1 [shape = 'u32[72,128]{1,0:T(1,128)}', space=vmem, size = 0x9000, scoped, tag = 'internal scratch']
  %s0 = inlined_call_operand.vmem [shape: bf16[32,1024], index: 0, kind: input, shape index: {}]
  %s1 = inlined_call_operand.vmem [shape: f32[32,1], index: 1, kind: input, shape index: {}]
  %s2 = inlined_call_operand.vmem [shape: bf16[2,1024,128], index: 2, kind: input, shape index: {}]
  %s3 = inlined_call_operand.vmem [shape: f32[2,32,128], index: 3, kind: output, shape index: {}]
  %s4 = sld [smem:[#allocation0]]
  $region45: #{adverserial_forward.6} parent=0
    _
  %s6 = ssub.s32 1, %s4
  %s7 = scalar_select 0, %s6, %s4
  loop: start=0, step=1, limit=4
  $region2: #{adverserial_forward.6} parent=0 // loop_pre_header
    _
  $region3: #{adverserial_forward.6} parent=0 // loop_header
    %s9 = sphi 0, %s13
    %p10 = scmp.ge.s32.totalorder %s9, 4
    %s17 = sphi 0, %s17
    %s19 = sphi 0, %s17
    %s20 = sphi 0, %s19
    %s34 = sphi 0, %s20
    %s38 = sphi 0, %s38
    %s40 = sphi 0, %s38
    %s41 = sphi 0, %s40
    %s55 = sphi 0, %s41
    %s61 = sphi 0, %s63
    %s64 = sphi 0, %s61
    %s65 = sphi 0, %s64
    %s81 = sphi 0, %s65
    %s87 = sphi 0, %s89
    %s90 = sphi 0, %s87
    %s91 = sphi 0, %s90
    %s107 = sphi 0, %s91
  $region4: #{adverserial_forward.6} parent=0 // loop_header_branch
    %12 = sbr.rel (%p10) target = $region8
  $region5: #{adverserial_forward.6} parent=0 // loop_body
    %s14 = ssub.s32 %s9, 1
    %s15 = ssub.s32 %s9, 2
    %s16 = sadd.s32 %s9, 1
    %s18 = sadd.s32 %s17, 1
    %p21 = scmp.eq.s32.totalorder %s9, 1
    %p22 = scmp.ne.s32.totalorder %s17, %s19
    %p23 = scmp.eq.s32.totalorder %s9, 0
    %p24 = por %p22, %p23
    %p25 = scmp.ne.s32.totalorder %s17, %s19
    %p26 = scmp.eq.s32.totalorder %s14, 1
    %p27 = por %p25, %p26
    %p28 = scmp.ne.s32.totalorder %s19, %s20
    %p29 = scmp.eq.s32.totalorder %s14, 0
    %p30 = por %p28, %p29
    %p31 = scmp.ne.s32.totalorder %s19, %s20
    %p32 = scmp.eq.s32.totalorder %s15, 1
    %p33 = por %p31, %p32
    %p35 = scmp.ne.s32.totalorder %s20, %s34
    %p36 = scmp.eq.s32.totalorder %s15, 0
    %p37 = por %p35, %p36
    %s39 = sadd.s32 %s38, 1
    %p42 = scmp.eq.s32.totalorder %s9, 1
    %p43 = scmp.ne.s32.totalorder %s38, %s40
    %p44 = scmp.eq.s32.totalorder %s9, 0
    %p45 = por %p43, %p44
    %p46 = scmp.ne.s32.totalorder %s38, %s40
    %p47 = scmp.eq.s32.totalorder %s14, 1
    %p48 = por %p46, %p47
    %p49 = scmp.ne.s32.totalorder %s40, %s41
    %p50 = scmp.eq.s32.totalorder %s14, 0
    %p51 = por %p49, %p50
    %p52 = scmp.ne.s32.totalorder %s40, %s41
    %p53 = scmp.eq.s32.totalorder %s15, 1
    %p54 = por %p52, %p53
    %p56 = scmp.ne.s32.totalorder %s41, %s55
    %p57 = scmp.eq.s32.totalorder %s15, 0
    %p58 = por %p56, %p57
    %s59 = ssub.s32 %s9, %s16
    %p60 = scmp.eq.s32.totalorder %s59, 0
    %s62 = sadd.s32 %s61, 1
    %s63 = scalar_select %p60, %s61, %s62
    %p66 = pneg %p60
    %p67 = scmp.eq.s32.totalorder %s9, 1
    %p68 = por %p66, %p67
    %p69 = scmp.ne.s32.totalorder %s61, %s64
    %p70 = scmp.eq.s32.totalorder %s9, 0
    %p71 = por %p69, %p70
    %p72 = scmp.ne.s32.totalorder %s61, %s64
    %p73 = scmp.eq.s32.totalorder %s14, 1
    %p74 = por %p72, %p73
    %p75 = scmp.ne.s32.totalorder %s64, %s65
    %p76 = scmp.eq.s32.totalorder %s14, 0
    %p77 = por %p75, %p76
    %p78 = scmp.ne.s32.totalorder %s64, %s65
    %p79 = scmp.eq.s32.totalorder %s15, 1
    %p80 = por %p78, %p79
    %p82 = scmp.ne.s32.totalorder %s65, %s81
    %p83 = scmp.eq.s32.totalorder %s15, 0
    %p84 = por %p82, %p83
    %s85 = ssub.s32 %s9, %s16
    %p86 = scmp.eq.s32.totalorder %s85, 0
    %s88 = sadd.s32 %s87, 1
    %s89 = scalar_select %p86, %s87, %s88
    %p92 = pneg %p86
    %p93 = scmp.eq.s32.totalorder %s9, 1
    %p94 = por %p92, %p93
    %p95 = scmp.ne.s32.totalorder %s87, %s90
    %p96 = scmp.eq.s32.totalorder %s9, 0
    %p97 = por %p95, %p96
    %p98 = scmp.ne.s32.totalorder %s87, %s90
    %p99 = scmp.eq.s32.totalorder %s14, 1
    %p100 = por %p98, %p99
    %p101 = scmp.ne.s32.totalorder %s90, %s91
    %p102 = scmp.eq.s32.totalorder %s14, 0
    %p103 = por %p101, %p102
    %p104 = scmp.ne.s32.totalorder %s90, %s91
    %p105 = scmp.eq.s32.totalorder %s15, 1
    %p106 = por %p104, %p105
    %p108 = scmp.ne.s32.totalorder %s91, %s107
    %p109 = scmp.eq.s32.totalorder %s15, 0
    %p110 = por %p108, %p109
    %p111 = scmp.le.s32.totalorder 1, %s9
    %p112 = scmp.lt.s32.totalorder %s9, 3
    %p113 = pnand %p111, %p112
    %p114 = pneg %p113
    // Predicated region
    $region9: #{adverserial_forward.6} parent=5 // pred_check
      _
    $region10: #{adverserial_forward.6} parent=5 // pred_check_branch
      %116 = sbr.rel (%p113) target = $region12
    $region11: #{adverserial_forward.6} parent=5 // pred_region
      %s117 = ssub.s32 %s9, 1
      // Predicated region
      $region13: #{adverserial_forward.6} parent=11 // pred_check
        %p118 = pneg %p30
      $region14: #{adverserial_forward.6} parent=11 // pred_check_branch
        %120 = sbr.rel (%p118) target = $region16
      $region15: #{adverserial_forward.6} parent=11 // pred_region
        _
      $region16: #{adverserial_forward.6} parent=11 // pred_fallthru
        _
      // Predicated region
      $region17: #{adverserial_forward.6} parent=11 // pred_check
        %p121 = pneg %p51
      $region18: #{adverserial_forward.6} parent=11 // pred_check_branch
        %123 = sbr.rel (%p121) target = $region20
      $region19: #{adverserial_forward.6} parent=11 // pred_region
        _
      $region20: #{adverserial_forward.6} parent=11 // pred_fallthru
        _
    $region12: #{adverserial_forward.6} parent=5 // pred_fallthru
      _
    %p124 = scmp.lt.s32.totalorder %s9, 2
    // Predicated region
    $region21: #{adverserial_forward.6} parent=5 // pred_check
      %p125 = pneg %p124
    $region22: #{adverserial_forward.6} parent=5 // pred_check_branch
      %127 = sbr.rel (%p125) target = $region24
    $region23: #{adverserial_forward.6} parent=5 // pred_region
      // Predicated region
      $region25: #{adverserial_forward.6} parent=23 // pred_check
        %p128 = pneg %p71
      $region26: #{adverserial_forward.6} parent=23 // pred_check_branch
        %130 = sbr.rel (%p128) target = $region28
      $region27: #{adverserial_forward.6} parent=23 // pred_region
        %p131 = scmp.lt.s32.totalorder %s9, 1
        %s132 = scalar_select %p131, %s9, 1
        %s133 = smul.addr %s132, 128
        %s134 = smul.addr %s133, 4
        %s135 = scalar_lea.vmem %s2, %s134
      $region28: #{adverserial_forward.6} parent=23 // pred_fallthru
        _
    $region24: #{adverserial_forward.6} parent=5 // pred_fallthru
      _
    %p136 = scmp.le.s32.totalorder 1, %s9
    %p137 = scmp.lt.s32.totalorder %s9, 3
    %p138 = pnand %p136, %p137
    %p139 = pneg %p138
    // Predicated region
    $region29: #{adverserial_forward.6} parent=5 // pred_check
      _
    $region30: #{adverserial_forward.6} parent=5 // pred_check_branch
      %141 = sbr.rel (%p138) target = $region32
    $region31: #{adverserial_forward.6} parent=5 // pred_region
      %s142 = ssub.s32 %s9, 1
      %p143 = pneg %p30
      %p144 = pneg %p27
      %p145 = pneg %p51
      %p146 = pneg %p48
      %p147 = scmp.lt.s32.totalorder %s14, 1
      %s148 = scalar_select %p147, %s14, 1
      %s149 = smul.addr %s148, 128
      %s150 = smul.addr %s149, 4
      %s151 = scalar_lea.vmem %s2, %s150
      %p152 = pneg %p77
      %p153 = pneg %p74
      %p154 = pneg %p103
      %p155 = pneg %p100
      %p156 = scmp.lt.s32.totalorder %s14, 1
      %s157 = scalar_select %p156, %s14, 1
      %s158 = smul.addr %s157, 4
      %s159 = smul.addr %s158, 8
      %s160 = scalar_lea.vmem %s3, %s159
      %p161 = scmp.lt.s32.totalorder %s14, 1
      %s162 = scalar_select %p161, %s14, 1
      %s163 = smul.addr %s162, 128
      %s164 = smul.addr %s163, 4
      %s165 = scalar_lea.vmem %s2, %s164
      %p166 = scmp.lt.s32.totalorder %s14, 1
      %s167 = scalar_select %p166, %s14, 1
      %s168 = smul.addr %s167, 4
      %s169 = smul.addr %s168, 8
      %s170 = scalar_lea.vmem %s3, %s169
      %v171 = vld [vmem:[%s0] sm:$0xff]
      %v172 = vld [vmem:[%s0 + $0x8] sm:$0xff]
      %v173 = vld [vmem:[%s0 + $0x10] sm:$0xff]
      %v174 = vld [vmem:[%s0 + $0x18] sm:$0xff]
      %v175 = vld [vmem:[%s0 + $0x20] sm:$0xff]
      %v176 = vld [vmem:[%s0 + $0x28] sm:$0xff]
      %v177 = vld [vmem:[%s0 + $0x30] sm:$0xff]
      %v178 = vld [vmem:[%s0 + $0x38] sm:$0xff]
      %v179 = vld [vmem:[%s0 + $0x40] sm:$0xff]
      %v180 = vld [vmem:[%s0 + $0x48] sm:$0xff]
      %v181 = vld [vmem:[%s0 + $0x50] sm:$0xff]
      %v182 = vld [vmem:[%s0 + $0x58] sm:$0xff]
      %v183 = vld [vmem:[%s0 + $0x60] sm:$0xff]
      %v184 = vld [vmem:[%s0 + $0x68] sm:$0xff]
      %v185 = vld [vmem:[%s0 + $0x70] sm:$0xff]
      %v186 = vld [vmem:[%s0 + $0x78] sm:$0xff]
      %v187 = vld [vmem:[%s165] sm:$0xf]
      %v188 = vld [vmem:[%s165 + $0x4] sm:$0xf]
      %v189 = vld [vmem:[%s165 + $0x8] sm:$0xf]
      %v190 = vld [vmem:[%s165 + $0xc] sm:$0xf]
      %v191 = vld [vmem:[%s165 + $0x10] sm:$0xf]
      %v192 = vld [vmem:[%s165 + $0x14] sm:$0xf]
      %v193 = vld [vmem:[%s165 + $0x18] sm:$0xf]
      %v194 = vld [vmem:[%s165 + $0x1c] sm:$0xf]
      %v195 = vld [vmem:[%s165 + $0x20] sm:$0xf]
      %v196 = vld [vmem:[%s165 + $0x24] sm:$0xf]
      %v197 = vld [vmem:[%s165 + $0x28] sm:$0xf]
      %v198 = vld [vmem:[%s165 + $0x2c] sm:$0xf]
      %v199 = vld [vmem:[%s165 + $0x30] sm:$0xf]
      %v200 = vld [vmem:[%s165 + $0x34] sm:$0xf]
      %v201 = vld [vmem:[%s165 + $0x38] sm:$0xf]
      %v202 = vld [vmem:[%s165 + $0x3c] sm:$0xf]
      %v203 = vld [vmem:[%s165 + $0x40] sm:$0xf]
      %v204 = vld [vmem:[%s165 + $0x44] sm:$0xf]
      %v205 = vld [vmem:[%s165 + $0x48] sm:$0xf]
      %v206 = vld [vmem:[%s165 + $0x4c] sm:$0xf]
      %v207 = vld [vmem:[%s165 + $0x50] sm:$0xf]
      %v208 = vld [vmem:[%s165 + $0x54] sm:$0xf]
      %v209 = vld [vmem:[%s165 + $0x58] sm:$0xf]
      %v210 = vld [vmem:[%s165 + $0x5c] sm:$0xf]
      %v211 = vld [vmem:[%s165 + $0x60] sm:$0xf]
      %v212 = vld [vmem:[%s165 + $0x64] sm:$0xf]
      %v213 = vld [vmem:[%s165 + $0x68] sm:$0xf]
      %v214 = vld [vmem:[%s165 + $0x6c] sm:$0xf]
      %v215 = vld [vmem:[%s165 + $0x70] sm:$0xf]
      %v216 = vld [vmem:[%s165 + $0x74] sm:$0xf]
      %v217 = vld [vmem:[%s165 + $0x78] sm:$0xf]
      %v218 = vld [vmem:[%s165 + $0x7c] sm:$0xf]
      %v219 = vld [vmem:[%s165 + $0x80] sm:$0xf]
      %v220 = vld [vmem:[%s165 + $0x84] sm:$0xf]
      %v221 = vld [vmem:[%s165 + $0x88] sm:$0xf]
      %v222 = vld [vmem:[%s165 + $0x8c] sm:$0xf]
      %v223 = vld [vmem:[%s165 + $0x90] sm:$0xf]
      %v224 = vld [vmem:[%s165 + $0x94] sm:$0xf]
      %v225 = vld [vmem:[%s165 + $0x98] sm:$0xf]
      %v226 = vld [vmem:[%s165 + $0x9c] sm:$0xf]
      %v227 = vld [vmem:[%s165 + $0xa0] sm:$0xf]
      %v228 = vld [vmem:[%s165 + $0xa4] sm:$0xf]
      %v229 = vld [vmem:[%s165 + $0xa8] sm:$0xf]
      %v230 = vld [vmem:[%s165 + $0xac] sm:$0xf]
      %v231 = vld [vmem:[%s165 + $0xb0] sm:$0xf]
      %v232 = vld [vmem:[%s165 + $0xb4] sm:$0xf]
      %v233 = vld [vmem:[%s165 + $0xb8] sm:$0xf]
      %v234 = vld [vmem:[%s165 + $0xbc] sm:$0xf]
      %v235 = vld [vmem:[%s165 + $0xc0] sm:$0xf]
      %v236 = vld [vmem:[%s165 + $0xc4] sm:$0xf]
      %v237 = vld [vmem:[%s165 + $0xc8] sm:$0xf]
      %v238 = vld [vmem:[%s165 + $0xcc] sm:$0xf]
      %v239 = vld [vmem:[%s165 + $0xd0] sm:$0xf]
      %v240 = vld [vmem:[%s165 + $0xd4] sm:$0xf]
      %v241 = vld [vmem:[%s165 + $0xd8] sm:$0xf]
      %v242 = vld [vmem:[%s165 + $0xdc] sm:$0xf]
      %v243 = vld [vmem:[%s165 + $0xe0] sm:$0xf]
      %v244 = vld [vmem:[%s165 + $0xe4] sm:$0xf]
      %v245 = vld [vmem:[%s165 + $0xe8] sm:$0xf]
      %v246 = vld [vmem:[%s165 + $0xec] sm:$0xf]
      %v247 = vld [vmem:[%s165 + $0xf0] sm:$0xf]
      %v248 = vld [vmem:[%s165 + $0xf4] sm:$0xf]
      %v249 = vld [vmem:[%s165 + $0xf8] sm:$0xf]
      %v250 = vld [vmem:[%s165 + $0xfc] sm:$0xf]
      %v251 = vld [vmem:[%s165 + $0x100] sm:$0xf]
      %v252 = vld [vmem:[%s165 + $0x104] sm:$0xf]
      %v253 = vld [vmem:[%s165 + $0x108] sm:$0xf]
      %v254 = vld [vmem:[%s165 + $0x10c] sm:$0xf]
      %v255 = vld [vmem:[%s165 + $0x110] sm:$0xf]
      %v256 = vld [vmem:[%s165 + $0x114] sm:$0xf]
      %v257 = vld [vmem:[%s165 + $0x118] sm:$0xf]
      %v258 = vld [vmem:[%s165 + $0x11c] sm:$0xf]
      %v259 = vld [vmem:[%s165 + $0x120] sm:$0xf]
      %v260 = vld [vmem:[%s165 + $0x124] sm:$0xf]
      %v261 = vld [vmem:[%s165 + $0x128] sm:$0xf]
      %v262 = vld [vmem:[%s165 + $0x12c] sm:$0xf]
      %v263 = vld [vmem:[%s165 + $0x130] sm:$0xf]
      %v264 = vld [vmem:[%s165 + $0x134] sm:$0xf]
      %v265 = vld [vmem:[%s165 + $0x138] sm:$0xf]
      %v266 = vld [vmem:[%s165 + $0x13c] sm:$0xf]
      %v267 = vld [vmem:[%s165 + $0x140] sm:$0xf]
      %v268 = vld [vmem:[%s165 + $0x144] sm:$0xf]
      %v269 = vld [vmem:[%s165 + $0x148] sm:$0xf]
      %v270 = vld [vmem:[%s165 + $0x14c] sm:$0xf]
      %v271 = vld [vmem:[%s165 + $0x150] sm:$0xf]
      %v272 = vld [vmem:[%s165 + $0x154] sm:$0xf]
      %v273 = vld [vmem:[%s165 + $0x158] sm:$0xf]
      %v274 = vld [vmem:[%s165 + $0x15c] sm:$0xf]
      %v275 = vld [vmem:[%s165 + $0x160] sm:$0xf]
      %v276 = vld [vmem:[%s165 + $0x164] sm:$0xf]
      %v277 = vld [vmem:[%s165 + $0x168] sm:$0xf]
      %v278 = vld [vmem:[%s165 + $0x16c] sm:$0xf]
      %v279 = vld [vmem:[%s165 + $0x170] sm:$0xf]
      %v280 = vld [vmem:[%s165 + $0x174] sm:$0xf]
      %v281 = vld [vmem:[%s165 + $0x178] sm:$0xf]
      %v282 = vld [vmem:[%s165 + $0x17c] sm:$0xf]
      %v283 = vld [vmem:[%s165 + $0x180] sm:$0xf]
      %v284 = vld [vmem:[%s165 + $0x184] sm:$0xf]
      %v285 = vld [vmem:[%s165 + $0x188] sm:$0xf]
      %v286 = vld [vmem:[%s165 + $0x18c] sm:$0xf]
      %v287 = vld [vmem:[%s165 + $0x190] sm:$0xf]
      %v288 = vld [vmem:[%s165 + $0x194] sm:$0xf]
      %v289 = vld [vmem:[%s165 + $0x198] sm:$0xf]
      %v290 = vld [vmem:[%s165 + $0x19c] sm:$0xf]
      %v291 = vld [vmem:[%s165 + $0x1a0] sm:$0xf]
      %v292 = vld [vmem:[%s165 + $0x1a4] sm:$0xf]
      %v293 = vld [vmem:[%s165 + $0x1a8] sm:$0xf]
      %v294 = vld [vmem:[%s165 + $0x1ac] sm:$0xf]
      %v295 = vld [vmem:[%s165 + $0x1b0] sm:$0xf]
      %v296 = vld [vmem:[%s165 + $0x1b4] sm:$0xf]
      %v297 = vld [vmem:[%s165 + $0x1b8] sm:$0xf]
      %v298 = vld [vmem:[%s165 + $0x1bc] sm:$0xf]
      %v299 = vld [vmem:[%s165 + $0x1c0] sm:$0xf]
      %v300 = vld [vmem:[%s165 + $0x1c4] sm:$0xf]
      %v301 = vld [vmem:[%s165 + $0x1c8] sm:$0xf]
      %v302 = vld [vmem:[%s165 + $0x1cc] sm:$0xf]
      %v303 = vld [vmem:[%s165 + $0x1d0] sm:$0xf]
      %v304 = vld [vmem:[%s165 + $0x1d4] sm:$0xf]
      %v305 = vld [vmem:[%s165 + $0x1d8] sm:$0xf]
      %v306 = vld [vmem:[%s165 + $0x1dc] sm:$0xf]
      %v307 = vld [vmem:[%s165 + $0x1e0] sm:$0xf]
      %v308 = vld [vmem:[%s165 + $0x1e4] sm:$0xf]
      %v309 = vld [vmem:[%s165 + $0x1e8] sm:$0xf]
      %v310 = vld [vmem:[%s165 + $0x1ec] sm:$0xf]
      %v311 = vld [vmem:[%s165 + $0x1f0] sm:$0xf]
      %v312 = vld [vmem:[%s165 + $0x1f4] sm:$0xf]
      %v313 = vld [vmem:[%s165 + $0x1f8] sm:$0xf]
      %v314 = vld [vmem:[%s165 + $0x1fc] sm:$0xf]
      %v331 = vunpack.c.l.b16 %v171
      %v332 = vunpack.c.h.b16 %v171
      %v333 = vunpack.c.l.b16 %v172
      %v334 = vunpack.c.h.b16 %v172
      %v335 = vunpack.c.l.b16 %v173
      %v336 = vunpack.c.h.b16 %v173
      %v337 = vunpack.c.l.b16 %v174
      %v338 = vunpack.c.h.b16 %v174
      %v339 = vunpack.c.l.b16 %v175
      %v340 = vunpack.c.h.b16 %v175
      %v341 = vunpack.c.l.b16 %v176
      %v342 = vunpack.c.h.b16 %v176
      %v343 = vunpack.c.l.b16 %v177
      %v344 = vunpack.c.h.b16 %v177
      %v345 = vunpack.c.l.b16 %v178
      %v346 = vunpack.c.h.b16 %v178
      %v347 = vunpack.c.l.b16 %v179
      %v348 = vunpack.c.h.b16 %v179
      %v349 = vunpack.c.l.b16 %v180
      %v350 = vunpack.c.h.b16 %v180
      %v351 = vunpack.c.l.b16 %v181
      %v352 = vunpack.c.h.b16 %v181
      %v353 = vunpack.c.l.b16 %v182
      %v354 = vunpack.c.h.b16 %v182
      %v355 = vunpack.c.l.b16 %v183
      %v356 = vunpack.c.h.b16 %v183
      %v357 = vunpack.c.l.b16 %v184
      %v358 = vunpack.c.h.b16 %v184
      %v359 = vunpack.c.l.b16 %v185
      %v360 = vunpack.c.h.b16 %v185
      %v361 = vunpack.c.l.b16 %v186
      %v362 = vunpack.c.h.b16 %v186
      %v363 = vpack.c.b16 %v339, %v331
      %v364 = vpack.c.b16 %v340, %v332
      %v365 = vpack.c.b16 %v341, %v333
      %v366 = vpack.c.b16 %v342, %v334
      %v367 = vpack.c.b16 %v343, %v335
      %v368 = vpack.c.b16 %v344, %v336
      %v369 = vpack.c.b16 %v345, %v337
      %v370 = vpack.c.b16 %v346, %v338
      %v371 = vpack.c.b16 %v355, %v347
      %v372 = vpack.c.b16 %v356, %v348
      %v373 = vpack.c.b16 %v357, %v349
      %v374 = vpack.c.b16 %v358, %v350
      %v375 = vpack.c.b16 %v359, %v351
      %v376 = vpack.c.b16 %v360, %v352
      %v377 = vpack.c.b16 %v361, %v353
      %v378 = vpack.c.b16 %v362, %v354
      %v523 = vunpack.c.l.b16 %v187
      %v524 = vunpack.c.l.b16 %v188
      %v525 = vunpack.c.l.b16 %v189
      %v526 = vunpack.c.l.b16 %v190
      %v527 = vunpack.c.l.b16 %v191
      %v528 = vunpack.c.l.b16 %v192
      %v529 = vunpack.c.l.b16 %v193
      %v530 = vunpack.c.l.b16 %v194
      %v531 = vunpack.c.l.b16 %v195
      %v532 = vunpack.c.l.b16 %v196
      %v533 = vunpack.c.l.b16 %v197
      %v534 = vunpack.c.l.b16 %v198
      %v535 = vunpack.c.l.b16 %v199
      %v536 = vunpack.c.l.b16 %v200
      %v537 = vunpack.c.l.b16 %v201
      %v538 = vunpack.c.l.b16 %v202
      %v539 = vunpack.c.l.b16 %v203
      %v540 = vunpack.c.l.b16 %v204
      %v541 = vunpack.c.l.b16 %v205
      %v542 = vunpack.c.l.b16 %v206
      %v543 = vunpack.c.l.b16 %v207
      %v544 = vunpack.c.l.b16 %v208
      %v545 = vunpack.c.l.b16 %v209
      %v546 = vunpack.c.l.b16 %v210
      %v547 = vunpack.c.l.b16 %v211
      %v548 = vunpack.c.l.b16 %v212
      %v549 = vunpack.c.l.b16 %v213
      %v550 = vunpack.c.l.b16 %v214
      %v551 = vunpack.c.l.b16 %v215
      %v552 = vunpack.c.l.b16 %v216
      %v553 = vunpack.c.l.b16 %v217
      %v554 = vunpack.c.l.b16 %v218
      %v555 = vunpack.c.l.b16 %v219
      %v556 = vunpack.c.l.b16 %v220
      %v557 = vunpack.c.l.b16 %v221
      %v558 = vunpack.c.l.b16 %v222
      %v559 = vunpack.c.l.b16 %v223
      %v560 = vunpack.c.l.b16 %v224
      %v561 = vunpack.c.l.b16 %v225
      %v562 = vunpack.c.l.b16 %v226
      %v563 = vunpack.c.l.b16 %v227
      %v564 = vunpack.c.l.b16 %v228
      %v565 = vunpack.c.l.b16 %v229
      %v566 = vunpack.c.l.b16 %v230
      %v567 = vunpack.c.l.b16 %v231
      %v568 = vunpack.c.l.b16 %v232
      %v569 = vunpack.c.l.b16 %v233
      %v570 = vunpack.c.l.b16 %v234
      %v571 = vunpack.c.l.b16 %v235
      %v572 = vunpack.c.l.b16 %v236
      %v573 = vunpack.c.l.b16 %v237
      %v574 = vunpack.c.l.b16 %v238
      %v575 = vunpack.c.l.b16 %v239
      %v576 = vunpack.c.l.b16 %v240
      %v577 = vunpack.c.l.b16 %v241
      %v578 = vunpack.c.l.b16 %v242
      %v579 = vunpack.c.l.b16 %v243
      %v580 = vunpack.c.l.b16 %v244
      %v581 = vunpack.c.l.b16 %v245
      %v582 = vunpack.c.l.b16 %v246
      %v583 = vunpack.c.l.b16 %v247
      %v584 = vunpack.c.l.b16 %v248
      %v585 = vunpack.c.l.b16 %v249
      %v586 = vunpack.c.l.b16 %v250
      %v587 = vunpack.c.l.b16 %v251
      %v588 = vunpack.c.l.b16 %v252
      %v589 = vunpack.c.l.b16 %v253
      %v590 = vunpack.c.l.b16 %v254
      %v591 = vunpack.c.l.b16 %v255
      %v592 = vunpack.c.l.b16 %v256
      %v593 = vunpack.c.l.b16 %v257
      %v594 = vunpack.c.l.b16 %v258
      %v595 = vunpack.c.l.b16 %v259
      %v596 = vunpack.c.l.b16 %v260
      %v597 = vunpack.c.l.b16 %v261
      %v598 = vunpack.c.l.b16 %v262
      %v599 = vunpack.c.l.b16 %v263
      %v600 = vunpack.c.l.b16 %v264
      %v601 = vunpack.c.l.b16 %v265
      %v602 = vunpack.c.l.b16 %v266
      %v603 = vunpack.c.l.b16 %v267
      %v604 = vunpack.c.l.b16 %v268
      %v605 = vunpack.c.l.b16 %v269
      %v606 = vunpack.c.l.b16 %v270
      %v607 = vunpack.c.l.b16 %v271
      %v608 = vunpack.c.l.b16 %v272
      %v609 = vunpack.c.l.b16 %v273
      %v610 = vunpack.c.l.b16 %v274
      %v611 = vunpack.c.l.b16 %v275
      %v612 = vunpack.c.l.b16 %v276
      %v613 = vunpack.c.l.b16 %v277
      %v614 = vunpack.c.l.b16 %v278
      %v615 = vunpack.c.l.b16 %v279
      %v616 = vunpack.c.l.b16 %v280
      %v617 = vunpack.c.l.b16 %v281
      %v618 = vunpack.c.l.b16 %v282
      %v619 = vunpack.c.l.b16 %v283
      %v620 = vunpack.c.l.b16 %v284
      %v621 = vunpack.c.l.b16 %v285
      %v622 = vunpack.c.l.b16 %v286
      %v623 = vunpack.c.l.b16 %v287
      %v624 = vunpack.c.l.b16 %v288
      %v625 = vunpack.c.l.b16 %v289
      %v626 = vunpack.c.l.b16 %v290
      %v627 = vunpack.c.l.b16 %v291
      %v628 = vunpack.c.l.b16 %v292
      %v629 = vunpack.c.l.b16 %v293
      %v630 = vunpack.c.l.b16 %v294
      %v631 = vunpack.c.l.b16 %v295
      %v632 = vunpack.c.l.b16 %v296
      %v633 = vunpack.c.l.b16 %v297
      %v634 = vunpack.c.l.b16 %v298
      %v635 = vunpack.c.l.b16 %v299
      %v636 = vunpack.c.l.b16 %v300
      %v637 = vunpack.c.l.b16 %v301
      %v638 = vunpack.c.l.b16 %v302
      %v639 = vunpack.c.l.b16 %v303
      %v640 = vunpack.c.l.b16 %v304
      %v641 = vunpack.c.l.b16 %v305
      %v642 = vunpack.c.l.b16 %v306
      %v643 = vunpack.c.l.b16 %v307
      %v644 = vunpack.c.l.b16 %v308
      %v645 = vunpack.c.l.b16 %v309
      %v646 = vunpack.c.l.b16 %v310
      %v647 = vunpack.c.l.b16 %v311
      %v648 = vunpack.c.l.b16 %v312
      %v649 = vunpack.c.l.b16 %v313
      %v650 = vunpack.c.l.b16 %v314
      %v651 = vpack.c.b16 %v524, %v523
      %v652 = vpack.c.b16 %v526, %v525
      %v653 = vpack.c.b16 %v528, %v527
      %v654 = vpack.c.b16 %v530, %v529
      %v655 = vpack.c.b16 %v532, %v531
      %v656 = vpack.c.b16 %v534, %v533
      %v657 = vpack.c.b16 %v536, %v535
      %v658 = vpack.c.b16 %v538, %v537
      %v659 = vpack.c.b16 %v540, %v539
      %v660 = vpack.c.b16 %v542, %v541
      %v661 = vpack.c.b16 %v544, %v543
      %v662 = vpack.c.b16 %v546, %v545
      %v663 = vpack.c.b16 %v548, %v547
      %v664 = vpack.c.b16 %v550, %v549
      %v665 = vpack.c.b16 %v552, %v551
      %v666 = vpack.c.b16 %v554, %v553
      %v667 = vpack.c.b16 %v556, %v555
      %v668 = vpack.c.b16 %v558, %v557
      %v669 = vpack.c.b16 %v560, %v559
      %v670 = vpack.c.b16 %v562, %v561
      %v671 = vpack.c.b16 %v564, %v563
      %v672 = vpack.c.b16 %v566, %v565
      %v673 = vpack.c.b16 %v568, %v567
      %v674 = vpack.c.b16 %v570, %v569
      %v675 = vpack.c.b16 %v572, %v571
      %v676 = vpack.c.b16 %v574, %v573
      %v677 = vpack.c.b16 %v576, %v575
      %v678 = vpack.c.b16 %v578, %v577
      %v679 = vpack.c.b16 %v580, %v579
      %v680 = vpack.c.b16 %v582, %v581
      %v681 = vpack.c.b16 %v584, %v583
      %v682 = vpack.c.b16 %v586, %v585
      %v683 = vpack.c.b16 %v588, %v587
      %v684 = vpack.c.b16 %v590, %v589
      %v685 = vpack.c.b16 %v592, %v591
      %v686 = vpack.c.b16 %v594, %v593
      %v687 = vpack.c.b16 %v596, %v595
      %v688 = vpack.c.b16 %v598, %v597
      %v689 = vpack.c.b16 %v600, %v599
      %v690 = vpack.c.b16 %v602, %v601
      %v691 = vpack.c.b16 %v604, %v603
      %v692 = vpack.c.b16 %v606, %v605
      %v693 = vpack.c.b16 %v608, %v607
      %v694 = vpack.c.b16 %v610, %v609
      %v695 = vpack.c.b16 %v612, %v611
      %v696 = vpack.c.b16 %v614, %v613
      %v697 = vpack.c.b16 %v616, %v615
      %v698 = vpack.c.b16 %v618, %v617
      %v699 = vpack.c.b16 %v620, %v619
      %v700 = vpack.c.b16 %v622, %v621
      %v701 = vpack.c.b16 %v624, %v623
      %v702 = vpack.c.b16 %v626, %v625
      %v703 = vpack.c.b16 %v628, %v627
      %v704 = vpack.c.b16 %v630, %v629
      %v705 = vpack.c.b16 %v632, %v631
      %v706 = vpack.c.b16 %v634, %v633
      %v707 = vpack.c.b16 %v636, %v635
      %v708 = vpack.c.b16 %v638, %v637
      %v709 = vpack.c.b16 %v640, %v639
      %v710 = vpack.c.b16 %v642, %v641
      %v711 = vpack.c.b16 %v644, %v643
      %v712 = vpack.c.b16 %v646, %v645
      %v713 = vpack.c.b16 %v648, %v647
      %v714 = vpack.c.b16 %v650, %v649
      %779 = vmatpush.bf16.msra.mxu0 %v658
      %780 = vmatpush.bf16.msra.mxu0 %v657
      %781 = vmatpush.bf16.msra.mxu0 %v656
      %782 = vmatpush.bf16.msra.mxu0 %v655
      %783 = vmatpush.bf16.msra.mxu0 %v654
      %784 = vmatpush.bf16.msra.mxu0 %v653
      %785 = vmatpush.bf16.msra.mxu0 %v652
      %786 = vmatpush.bf16.msra.mxu0 %v651
      %787 = vmatmul.bf16.gmra.mxu0 %v363
      %v788 = vpop.f32.mrf.mxu0
      %v789 = vadd.f32 0.0, %v788
      %v790 = vpop.f32.mrf.mxu0
      %v791 = vadd.f32 0.0, %v790
      %792 = vmatmul.bf16.gmra.mxu0 %v371
      %v793 = vpop.f32.mrf.mxu0
      %v794 = vadd.f32 0.0, %v793
      %v795 = vpop.f32.mrf.mxu0
      %v796 = vadd.f32 0.0, %v795
      %797 = vdwg.mxu0
      %798 = vmatpush.bf16.msra.mxu0 %v666
      %799 = vmatpush.bf16.msra.mxu0 %v665
      %800 = vmatpush.bf16.msra.mxu0 %v664
      %801 = vmatpush.bf16.msra.mxu0 %v663
      %802 = vmatpush.bf16.msra.mxu0 %v662
      %803 = vmatpush.bf16.msra.mxu0 %v661
      %804 = vmatpush.bf16.msra.mxu0 %v660
      %805 = vmatpush.bf16.msra.mxu0 %v659
      %806 = vmatmul.bf16.gmra.mxu0 %v364
      %v807 = vpop.f32.mrf.mxu0
      %v808 = vadd.f32 %v789, %v807
      %v809 = vpop.f32.mrf.mxu0
      %v810 = vadd.f32 %v791, %v809
      %811 = vmatmul.bf16.gmra.mxu0 %v372
      %v812 = vpop.f32.mrf.mxu0
      %v813 = vadd.f32 %v794, %v812
      %v814 = vpop.f32.mrf.mxu0
      %v815 = vadd.f32 %v796, %v814
      %816 = vdwg.mxu0
      %817 = vmatpush.bf16.msra.mxu0 %v674
      %818 = vmatpush.bf16.msra.mxu0 %v673
      %819 = vmatpush.bf16.msra.mxu0 %v672
      %820 = vmatpush.bf16.msra.mxu0 %v671
      %821 = vmatpush.bf16.msra.mxu0 %v670
      %822 = vmatpush.bf16.msra.mxu0 %v669
      %823 = vmatpush.bf16.msra.mxu0 %v668
      %824 = vmatpush.bf16.msra.mxu0 %v667
      %825 = vmatmul.bf16.gmra.mxu0 %v365
      %v826 = vpop.f32.mrf.mxu0
      %v827 = vadd.f32 %v808, %v826
      %v828 = vpop.f32.mrf.mxu0
      %v829 = vadd.f32 %v810, %v828
      %830 = vmatmul.bf16.gmra.mxu0 %v373
      %v831 = vpop.f32.mrf.mxu0
      %v832 = vadd.f32 %v813, %v831
      %v833 = vpop.f32.mrf.mxu0
      %v834 = vadd.f32 %v815, %v833
      %835 = vdwg.mxu0
      %836 = vmatpush.bf16.msra.mxu0 %v682
      %837 = vmatpush.bf16.msra.mxu0 %v681
      %838 = vmatpush.bf16.msra.mxu0 %v680
      %839 = vmatpush.bf16.msra.mxu0 %v679
      %840 = vmatpush.bf16.msra.mxu0 %v678
      %841 = vmatpush.bf16.msra.mxu0 %v677
      %842 = vmatpush.bf16.msra.mxu0 %v676
      %843 = vmatpush.bf16.msra.mxu0 %v675
      %844 = vmatmul.bf16.gmra.mxu0 %v366
      %v845 = vpop.f32.mrf.mxu0
      %v846 = vadd.f32 %v827, %v845
      %v847 = vpop.f32.mrf.mxu0
      %v848 = vadd.f32 %v829, %v847
      %849 = vmatmul.bf16.gmra.mxu0 %v374
      %v850 = vpop.f32.mrf.mxu0
      %v851 = vadd.f32 %v832, %v850
      %v852 = vpop.f32.mrf.mxu0
      %v853 = vadd.f32 %v834, %v852
      %854 = vdwg.mxu0
      %855 = vmatpush.bf16.msra.mxu0 %v690
      %856 = vmatpush.bf16.msra.mxu0 %v689
      %857 = vmatpush.bf16.msra.mxu0 %v688
      %858 = vmatpush.bf16.msra.mxu0 %v687
      %859 = vmatpush.bf16.msra.mxu0 %v686
      %860 = vmatpush.bf16.msra.mxu0 %v685
      %861 = vmatpush.bf16.msra.mxu0 %v684
      %862 = vmatpush.bf16.msra.mxu0 %v683
      %863 = vmatmul.bf16.gmra.mxu0 %v367
      %v864 = vpop.f32.mrf.mxu0
      %v865 = vadd.f32 %v846, %v864
      %v866 = vpop.f32.mrf.mxu0
      %v867 = vadd.f32 %v848, %v866
      %868 = vmatmul.bf16.gmra.mxu0 %v375
      %v869 = vpop.f32.mrf.mxu0
      %v870 = vadd.f32 %v851, %v869
      %v871 = vpop.f32.mrf.mxu0
      %v872 = vadd.f32 %v853, %v871
      %873 = vdwg.mxu0
      %874 = vmatpush.bf16.msra.mxu0 %v698
      %875 = vmatpush.bf16.msra.mxu0 %v697
      %876 = vmatpush.bf16.msra.mxu0 %v696
      %877 = vmatpush.bf16.msra.mxu0 %v695
      %878 = vmatpush.bf16.msra.mxu0 %v694
      %879 = vmatpush.bf16.msra.mxu0 %v693
      %880 = vmatpush.bf16.msra.mxu0 %v692
      %881 = vmatpush.bf16.msra.mxu0 %v691
      %882 = vmatmul.bf16.gmra.mxu0 %v368
      %v883 = vpop.f32.mrf.mxu0
      %v884 = vadd.f32 %v865, %v883
      %v885 = vpop.f32.mrf.mxu0
      %v886 = vadd.f32 %v867, %v885
      %887 = vmatmul.bf16.gmra.mxu0 %v376
      %v888 = vpop.f32.mrf.mxu0
      %v889 = vadd.f32 %v870, %v888
      %v890 = vpop.f32.mrf.mxu0
      %v891 = vadd.f32 %v872, %v890
      %892 = vdwg.mxu0
      %893 = vmatpush.bf16.msra.mxu0 %v706
      %894 = vmatpush.bf16.msra.mxu0 %v705
      %895 = vmatpush.bf16.msra.mxu0 %v704
      %896 = vmatpush.bf16.msra.mxu0 %v703
      %897 = vmatpush.bf16.msra.mxu0 %v702
      %898 = vmatpush.bf16.msra.mxu0 %v701
      %899 = vmatpush.bf16.msra.mxu0 %v700
      %900 = vmatpush.bf16.msra.mxu0 %v699
      %901 = vmatmul.bf16.gmra.mxu0 %v369
      %v902 = vpop.f32.mrf.mxu0
      %v903 = vadd.f32 %v884, %v902
      %v904 = vpop.f32.mrf.mxu0
      %v905 = vadd.f32 %v886, %v904
      %906 = vmatmul.bf16.gmra.mxu0 %v377
      %v907 = vpop.f32.mrf.mxu0
      %v908 = vadd.f32 %v889, %v907
      %v909 = vpop.f32.mrf.mxu0
      %v910 = vadd.f32 %v891, %v909
      %911 = vdwg.mxu0
      %912 = vmatpush.bf16.msra.mxu0 %v714
      %913 = vmatpush.bf16.msra.mxu0 %v713
      %914 = vmatpush.bf16.msra.mxu0 %v712
      %915 = vmatpush.bf16.msra.mxu0 %v711
      %916 = vmatpush.bf16.msra.mxu0 %v710
      %917 = vmatpush.bf16.msra.mxu0 %v709
      %918 = vmatpush.bf16.msra.mxu0 %v708
      %919 = vmatpush.bf16.msra.mxu0 %v707
      %920 = vmatmul.bf16.gmra.mxu0 %v370
      %v921 = vpop.f32.mrf.mxu0
      %v922 = vadd.f32 %v903, %v921
      %v923 = vpop.f32.mrf.mxu0
      %v924 = vadd.f32 %v905, %v923
      %925 = vmatmul.bf16.gmra.mxu0 %v378
      %v926 = vpop.f32.mrf.mxu0
      %v927 = vadd.f32 %v908, %v926
      %v928 = vpop.f32.mrf.mxu0
      %v929 = vadd.f32 %v910, %v928
      %930 = vdwg.mxu0
      %931 = vadd.xlane.f32.xlu0 %v922
      %v932 = vpop.xlane.xlu0 %931
      %933 = vadd.xlane.f32.xlu0 %v924
      %v934 = vpop.xlane.xlu0 %933
      %935 = vadd.xlane.f32.xlu0 %v927
      %v936 = vpop.xlane.xlu0 %935
      %937 = vadd.xlane.f32.xlu0 %v929
      %v938 = vpop.xlane.xlu0 %937
      %v939 = vmul.f32 %v932, 0.037037037
      %v940 = vmul.f32 %v934, 0.037037037
      %v941 = vmul.f32 %v936, 0.037037037
      %v942 = vmul.f32 %v938, 0.037037037
      %v943 = vmul.f32 %v922, %v922
      %v944 = vmul.f32 %v924, %v924
      %v945 = vmul.f32 %v927, %v927
      %v946 = vmul.f32 %v929, %v929
      %947 = vadd.xlane.f32.xlu0 %v943
      %v948 = vpop.xlane.xlu0 %947
      %949 = vadd.xlane.f32.xlu0 %v944
      %v950 = vpop.xlane.xlu0 %949
      %951 = vadd.xlane.f32.xlu0 %v945
      %v952 = vpop.xlane.xlu0 %951
      %953 = vadd.xlane.f32.xlu0 %v946
      %v954 = vpop.xlane.xlu0 %953
      %v955 = vmul.f32 %v948, 0.037037037
      %v956 = vmul.f32 %v950, 0.037037037
      %v957 = vmul.f32 %v952, 0.037037037
      %v958 = vmul.f32 %v954, 0.037037037
      %v959 = vmul.f32 %v939, %v939
      %v960 = vmul.f32 %v940, %v940
      %v961 = vmul.f32 %v941, %v941
      %v962 = vmul.f32 %v942, %v942
      %v963 = vsub.f32 %v955, %v959
      %v964 = vsub.f32 %v956, %v960
      %v965 = vsub.f32 %v957, %v961
      %v966 = vsub.f32 %v958, %v962
      %v967 = vsub.f32 %v922, %v939
      %v968 = vsub.f32 %v924, %v940
      %v969 = vsub.f32 %v927, %v941
      %v970 = vsub.f32 %v929, %v942
      %v971 = vadd.f32 %v963, 1e-05
      %v972 = vadd.f32 %v964, 1e-05
      %v973 = vadd.f32 %v965, 1e-05
      %v974 = vadd.f32 %v966, 1e-05
      %v975 = vrsqrt.pop %v971
      %v976 = vmul.f32 %v975, %v971
      %v977 = vmul.f32 %v976, %v975
      %v978 = vmul.f32 0.5, %v977
      %v979 = vsub.f32 1.5, %v978
      %v980 = vmul.f32 %v975, %v979
      %vm981 = vweird.f32 %v971
      %vm982 = vweird.f32 %v975
      %vm983 = vmor %vm981, %vm982
      %v984 = vsel %vm983, %v975, %v980
      %v985 = vrsqrt.pop %v972
      %v986 = vmul.f32 %v985, %v972
      %v987 = vmul.f32 %v986, %v985
      %v988 = vmul.f32 0.5, %v987
      %v989 = vsub.f32 1.5, %v988
      %v990 = vmul.f32 %v985, %v989
      %vm991 = vweird.f32 %v972
      %vm992 = vweird.f32 %v985
      %vm993 = vmor %vm991, %vm992
      %v994 = vsel %vm993, %v985, %v990
      %v995 = vrsqrt.pop %v973
      %v996 = vmul.f32 %v995, %v973
      %v997 = vmul.f32 %v996, %v995
      %v998 = vmul.f32 0.5, %v997
      %v999 = vsub.f32 1.5, %v998
      %v1000 = vmul.f32 %v995, %v999
      %vm1001 = vweird.f32 %v973
      %vm1002 = vweird.f32 %v995
      %vm1003 = vmor %vm1001, %vm1002
      %v1004 = vsel %vm1003, %v995, %v1000
      %v1005 = vrsqrt.pop %v974
      %v1006 = vmul.f32 %v1005, %v974
      %v1007 = vmul.f32 %v1006, %v1005
      %v1008 = vmul.f32 0.5, %v1007
      %v1009 = vsub.f32 1.5, %v1008
      %v1010 = vmul.f32 %v1005, %v1009
      %vm1011 = vweird.f32 %v974
      %vm1012 = vweird.f32 %v1005
      %vm1013 = vmor %vm1011, %vm1012
      %v1014 = vsel %vm1013, %v1005, %v1010
      %v1015 = vmul.f32 %v967, %v984
      %v1016 = vmul.f32 %v968, %v994
      %v1017 = vmul.f32 %v969, %v1004
      %v1018 = vmul.f32 %v970, %v1014
      %v1019 = vmul.f32 %v1015, 0.01
      %v1020 = vmul.f32 %v1016, 0.01
      %v1021 = vmul.f32 %v1017, 0.01
      %v1022 = vmul.f32 %v1018, 0.01
      %v1023 = vmax.f32 %v1015, %v1019
      %v1024 = vmax.f32 %v1016, %v1020
      %v1025 = vmax.f32 %v1017, %v1021
      %v1026 = vmax.f32 %v1018, %v1022
      %1027 = vst [vmem:[%s170] sm:$0xff] %v1023
      %1028 = vst [vmem:[%s170 + $0x8] sm:$0xff] %v1024
      %1029 = vst [vmem:[%s170 + $0x10] sm:$0xff] %v1025
      %1030 = vst [vmem:[%s170 + $0x18] sm:$0xff] %v1026
      %p1031 = scmp.lt.s32.totalorder %s14, 1
      %s1032 = scalar_select %p1031, %s14, 1
      %s1033 = smul.addr %s1032, 4
      %s1034 = smul.addr %s1033, 8
      %s1035 = scalar_lea.vmem %s3, %s1034
      // Predicated region
      $region33: #{adverserial_forward.6} parent=31 // pred_check
        %p1036 = pneg %p100
      $region34: #{adverserial_forward.6} parent=31 // pred_check_branch
        %1038 = sbr.rel (%p1036) target = $region36
      $region35: #{adverserial_forward.6} parent=31 // pred_region
        _
      $region36: #{adverserial_forward.6} parent=31 // pred_fallthru
        _
    $region32: #{adverserial_forward.6} parent=5 // pred_fallthru
      _
    %p1039 = scmp.le.s32.totalorder 2, %s9
    // Predicated region
    $region37: #{adverserial_forward.6} parent=5 // pred_check
      %p1040 = pneg %p1039
    $region38: #{adverserial_forward.6} parent=5 // pred_check_branch
      %1042 = sbr.rel (%p1040) target = $region40
    $region39: #{adverserial_forward.6} parent=5 // pred_region
      %s1043 = ssub.s32 %s9, 2
      // Predicated region
      $region41: #{adverserial_forward.6} parent=39 // pred_check
        %p1044 = pneg %p106
      $region42: #{adverserial_forward.6} parent=39 // pred_check_branch
        %1046 = sbr.rel (%p1044) target = $region44
      $region43: #{adverserial_forward.6} parent=39 // pred_region
        %p1047 = scmp.lt.s32.totalorder %s15, 1
        %s1048 = scalar_select %p1047, %s15, 1
        %s1049 = smul.addr %s1048, 4
        %s1050 = smul.addr %s1049, 8
        %s1051 = scalar_lea.vmem %s3, %s1050
      $region44: #{adverserial_forward.6} parent=39 // pred_fallthru
        _
    $region40: #{adverserial_forward.6} parent=5 // pred_fallthru
      _
  $region6: #{adverserial_forward.6} parent=0 // loop_footer
    %s13 = sadd.s32 1, %s9
  $region7: #{adverserial_forward.6} parent=0 // loop_footer_branch
    %8 = sbr.rel target = $region3
  $region8: #{adverserial_forward.6} parent=0 // loop_exit
    _

// kernel: adverserial_forward.7
$region0: #{adverserial_forward.7}
  #allocation0 [shape = 'u32[]', space=smem, size = 0x4, offset = 0x4, fixed_abs, tag = 'smem constant byte address 0x4 - core index']
  #allocation1 [shape = 'u32[72,128]{1,0:T(1,128)}', space=vmem, size = 0x9000, scoped, tag = 'internal scratch']
  %s0 = inlined_call_operand.vmem [shape: bf16[8,2048], index: 0, kind: input, shape index: {}]
  %s1 = inlined_call_operand.vmem [shape: f32[8,1], index: 1, kind: input, shape index: {}]
  %s2 = inlined_call_operand.vmem [shape: bf16[2,2048,128], index: 2, kind: input, shape index: {}]
  %s3 = inlined_call_operand.vmem [shape: f32[2,8,128], index: 3, kind: output, shape index: {}]
  %s4 = sld [smem:[#allocation0]]
  $region45: #{adverserial_forward.7} parent=0
    _
  %s6 = ssub.s32 1, %s4
  %s7 = scalar_select 0, %s6, %s4
  loop: start=0, step=1, limit=4
  $region2: #{adverserial_forward.7} parent=0 // loop_pre_header
    _
  $region3: #{adverserial_forward.7} parent=0 // loop_header
    %s9 = sphi 0, %s13
    %p10 = scmp.ge.s32.totalorder %s9, 4
    %s17 = sphi 0, %s17
    %s19 = sphi 0, %s17
    %s20 = sphi 0, %s19
    %s34 = sphi 0, %s20
    %s38 = sphi 0, %s38
    %s40 = sphi 0, %s38
    %s41 = sphi 0, %s40
    %s55 = sphi 0, %s41
    %s61 = sphi 0, %s63
    %s64 = sphi 0, %s61
    %s65 = sphi 0, %s64
    %s81 = sphi 0, %s65
    %s87 = sphi 0, %s89
    %s90 = sphi 0, %s87
    %s91 = sphi 0, %s90
    %s107 = sphi 0, %s91
  $region4: #{adverserial_forward.7} parent=0 // loop_header_branch
    %12 = sbr.rel (%p10) target = $region8
  $region5: #{adverserial_forward.7} parent=0 // loop_body
    %s14 = ssub.s32 %s9, 1
    %s15 = ssub.s32 %s9, 2
    %s16 = sadd.s32 %s9, 1
    %s18 = sadd.s32 %s17, 1
    %p21 = scmp.eq.s32.totalorder %s9, 1
    %p22 = scmp.ne.s32.totalorder %s17, %s19
    %p23 = scmp.eq.s32.totalorder %s9, 0
    %p24 = por %p22, %p23
    %p25 = scmp.ne.s32.totalorder %s17, %s19
    %p26 = scmp.eq.s32.totalorder %s14, 1
    %p27 = por %p25, %p26
    %p28 = scmp.ne.s32.totalorder %s19, %s20
    %p29 = scmp.eq.s32.totalorder %s14, 0
    %p30 = por %p28, %p29
    %p31 = scmp.ne.s32.totalorder %s19, %s20
    %p32 = scmp.eq.s32.totalorder %s15, 1
    %p33 = por %p31, %p32
    %p35 = scmp.ne.s32.totalorder %s20, %s34
    %p36 = scmp.eq.s32.totalorder %s15, 0
    %p37 = por %p35, %p36
    %s39 = sadd.s32 %s38, 1
    %p42 = scmp.eq.s32.totalorder %s9, 1
    %p43 = scmp.ne.s32.totalorder %s38, %s40
    %p44 = scmp.eq.s32.totalorder %s9, 0
    %p45 = por %p43, %p44
    %p46 = scmp.ne.s32.totalorder %s38, %s40
    %p47 = scmp.eq.s32.totalorder %s14, 1
    %p48 = por %p46, %p47
    %p49 = scmp.ne.s32.totalorder %s40, %s41
    %p50 = scmp.eq.s32.totalorder %s14, 0
    %p51 = por %p49, %p50
    %p52 = scmp.ne.s32.totalorder %s40, %s41
    %p53 = scmp.eq.s32.totalorder %s15, 1
    %p54 = por %p52, %p53
    %p56 = scmp.ne.s32.totalorder %s41, %s55
    %p57 = scmp.eq.s32.totalorder %s15, 0
    %p58 = por %p56, %p57
    %s59 = ssub.s32 %s9, %s16
    %p60 = scmp.eq.s32.totalorder %s59, 0
    %s62 = sadd.s32 %s61, 1
    %s63 = scalar_select %p60, %s61, %s62
    %p66 = pneg %p60
    %p67 = scmp.eq.s32.totalorder %s9, 1
    %p68 = por %p66, %p67
    %p69 = scmp.ne.s32.totalorder %s61, %s64
    %p70 = scmp.eq.s32.totalorder %s9, 0
    %p71 = por %p69, %p70
    %p72 = scmp.ne.s32.totalorder %s61, %s64
    %p73 = scmp.eq.s32.totalorder %s14, 1
    %p74 = por %p72, %p73
    %p75 = scmp.ne.s32.totalorder %s64, %s65
    %p76 = scmp.eq.s32.totalorder %s14, 0
    %p77 = por %p75, %p76
    %p78 = scmp.ne.s32.totalorder %s64, %s65
    %p79 = scmp.eq.s32.totalorder %s15, 1
    %p80 = por %p78, %p79
    %p82 = scmp.ne.s32.totalorder %s65, %s81
    %p83 = scmp.eq.s32.totalorder %s15, 0
    %p84 = por %p82, %p83
    %s85 = ssub.s32 %s9, %s16
    %p86 = scmp.eq.s32.totalorder %s85, 0
    %s88 = sadd.s32 %s87, 1
    %s89 = scalar_select %p86, %s87, %s88
    %p92 = pneg %p86
    %p93 = scmp.eq.s32.totalorder %s9, 1
    %p94 = por %p92, %p93
    %p95 = scmp.ne.s32.totalorder %s87, %s90
    %p96 = scmp.eq.s32.totalorder %s9, 0
    %p97 = por %p95, %p96
    %p98 = scmp.ne.s32.totalorder %s87, %s90
    %p99 = scmp.eq.s32.totalorder %s14, 1
    %p100 = por %p98, %p99
    %p101 = scmp.ne.s32.totalorder %s90, %s91
    %p102 = scmp.eq.s32.totalorder %s14, 0
    %p103 = por %p101, %p102
    %p104 = scmp.ne.s32.totalorder %s90, %s91
    %p105 = scmp.eq.s32.totalorder %s15, 1
    %p106 = por %p104, %p105
    %p108 = scmp.ne.s32.totalorder %s91, %s107
    %p109 = scmp.eq.s32.totalorder %s15, 0
    %p110 = por %p108, %p109
    %p111 = scmp.le.s32.totalorder 1, %s9
    %p112 = scmp.lt.s32.totalorder %s9, 3
    %p113 = pnand %p111, %p112
    %p114 = pneg %p113
    // Predicated region
    $region9: #{adverserial_forward.7} parent=5 // pred_check
      _
    $region10: #{adverserial_forward.7} parent=5 // pred_check_branch
      %116 = sbr.rel (%p113) target = $region12
    $region11: #{adverserial_forward.7} parent=5 // pred_region
      %s117 = ssub.s32 %s9, 1
      // Predicated region
      $region13: #{adverserial_forward.7} parent=11 // pred_check
        %p118 = pneg %p30
      $region14: #{adverserial_forward.7} parent=11 // pred_check_branch
        %120 = sbr.rel (%p118) target = $region16
      $region15: #{adverserial_forward.7} parent=11 // pred_region
        _
      $region16: #{adverserial_forward.7} parent=11 // pred_fallthru
        _
      // Predicated region
      $region17: #{adverserial_forward.7} parent=11 // pred_check
        %p121 = pneg %p51
      $region18: #{adverserial_forward.7} parent=11 // pred_check_branch
        %123 = sbr.rel (%p121) target = $region20
      $region19: #{adverserial_forward.7} parent=11 // pred_region
        _
      $region20: #{adverserial_forward.7} parent=11 // pred_fallthru
        _
    $region12: #{adverserial_forward.7} parent=5 // pred_fallthru
      _
    %p124 = scmp.lt.s32.totalorder %s9, 2
    // Predicated region
    $region21: #{adverserial_forward.7} parent=5 // pred_check
      %p125 = pneg %p124
    $region22: #{adverserial_forward.7} parent=5 // pred_check_branch
      %127 = sbr.rel (%p125) target = $region24
    $region23: #{adverserial_forward.7} parent=5 // pred_region
      // Predicated region
      $region25: #{adverserial_forward.7} parent=23 // pred_check
        %p128 = pneg %p71
      $region26: #{adverserial_forward.7} parent=23 // pred_check_branch
        %130 = sbr.rel (%p128) target = $region28
      $region27: #{adverserial_forward.7} parent=23 // pred_region
        %p131 = scmp.lt.s32.totalorder %s9, 1
        %s132 = scalar_select %p131, %s9, 1
        %s133 = smul.addr %s132, 256
        %s134 = smul.addr %s133, 4
        %s135 = scalar_lea.vmem %s2, %s134
      $region28: #{adverserial_forward.7} parent=23 // pred_fallthru
        _
    $region24: #{adverserial_forward.7} parent=5 // pred_fallthru
      _
    %p136 = scmp.le.s32.totalorder 1, %s9
    %p137 = scmp.lt.s32.totalorder %s9, 3
    %p138 = pnand %p136, %p137
    %p139 = pneg %p138
    // Predicated region
    $region29: #{adverserial_forward.7} parent=5 // pred_check
      _
    $region30: #{adverserial_forward.7} parent=5 // pred_check_branch
      %141 = sbr.rel (%p138) target = $region32
    $region31: #{adverserial_forward.7} parent=5 // pred_region
      %s142 = ssub.s32 %s9, 1
      %p143 = pneg %p30
      %p144 = pneg %p27
      %p145 = pneg %p51
      %p146 = pneg %p48
      %p147 = scmp.lt.s32.totalorder %s14, 1
      %s148 = scalar_select %p147, %s14, 1
      %s149 = smul.addr %s148, 256
      %s150 = smul.addr %s149, 4
      %s151 = scalar_lea.vmem %s2, %s150
      %p152 = pneg %p77
      %p153 = pneg %p74
      %p154 = pneg %p103
      %p155 = pneg %p100
      %p156 = scmp.lt.s32.totalorder %s14, 1
      %s157 = scalar_select %p156, %s14, 1
      %s158 = smul.addr %s157, 8
      %s159 = scalar_lea.vmem %s3, %s158
      %p160 = scmp.lt.s32.totalorder %s14, 1
      %s161 = scalar_select %p160, %s14, 1
      %s162 = smul.addr %s161, 256
      %s163 = smul.addr %s162, 4
      %s164 = scalar_lea.vmem %s2, %s163
      %p165 = scmp.lt.s32.totalorder %s14, 1
      %s166 = scalar_select %p165, %s14, 1
      %s167 = smul.addr %s166, 8
      %s168 = scalar_lea.vmem %s3, %s167
      %v169 = vld [vmem:[%s0] sm:$0xff]
      %v170 = vld [vmem:[%s0 + $0x8] sm:$0xff]
      %v171 = vld [vmem:[%s0 + $0x10] sm:$0xff]
      %v172 = vld [vmem:[%s0 + $0x18] sm:$0xff]
      %v173 = vld [vmem:[%s0 + $0x20] sm:$0xff]
      %v174 = vld [vmem:[%s0 + $0x28] sm:$0xff]
      %v175 = vld [vmem:[%s0 + $0x30] sm:$0xff]
      %v176 = vld [vmem:[%s0 + $0x38] sm:$0xff]
      %v177 = vld [vmem:[%s164] sm:$0xf]
      %v178 = vld [vmem:[%s164 + $0x4] sm:$0xf]
      %v179 = vld [vmem:[%s164 + $0x8] sm:$0xf]
      %v180 = vld [vmem:[%s164 + $0xc] sm:$0xf]
      %v181 = vld [vmem:[%s164 + $0x10] sm:$0xf]
      %v182 = vld [vmem:[%s164 + $0x14] sm:$0xf]
      %v183 = vld [vmem:[%s164 + $0x18] sm:$0xf]
      %v184 = vld [vmem:[%s164 + $0x1c] sm:$0xf]
      %v185 = vld [vmem:[%s164 + $0x20] sm:$0xf]
      %v186 = vld [vmem:[%s164 + $0x24] sm:$0xf]
      %v187 = vld [vmem:[%s164 + $0x28] sm:$0xf]
      %v188 = vld [vmem:[%s164 + $0x2c] sm:$0xf]
      %v189 = vld [vmem:[%s164 + $0x30] sm:$0xf]
      %v190 = vld [vmem:[%s164 + $0x34] sm:$0xf]
      %v191 = vld [vmem:[%s164 + $0x38] sm:$0xf]
      %v192 = vld [vmem:[%s164 + $0x3c] sm:$0xf]
      %v193 = vld [vmem:[%s164 + $0x40] sm:$0xf]
      %v194 = vld [vmem:[%s164 + $0x44] sm:$0xf]
      %v195 = vld [vmem:[%s164 + $0x48] sm:$0xf]
      %v196 = vld [vmem:[%s164 + $0x4c] sm:$0xf]
      %v197 = vld [vmem:[%s164 + $0x50] sm:$0xf]
      %v198 = vld [vmem:[%s164 + $0x54] sm:$0xf]
      %v199 = vld [vmem:[%s164 + $0x58] sm:$0xf]
      %v200 = vld [vmem:[%s164 + $0x5c] sm:$0xf]
      %v201 = vld [vmem:[%s164 + $0x60] sm:$0xf]
      %v202 = vld [vmem:[%s164 + $0x64] sm:$0xf]
      %v203 = vld [vmem:[%s164 + $0x68] sm:$0xf]
      %v204 = vld [vmem:[%s164 + $0x6c] sm:$0xf]
      %v205 = vld [vmem:[%s164 + $0x70] sm:$0xf]
      %v206 = vld [vmem:[%s164 + $0x74] sm:$0xf]
      %v207 = vld [vmem:[%s164 + $0x78] sm:$0xf]
      %v208 = vld [vmem:[%s164 + $0x7c] sm:$0xf]
      %v209 = vld [vmem:[%s164 + $0x80] sm:$0xf]
      %v210 = vld [vmem:[%s164 + $0x84] sm:$0xf]
      %v211 = vld [vmem:[%s164 + $0x88] sm:$0xf]
      %v212 = vld [vmem:[%s164 + $0x8c] sm:$0xf]
      %v213 = vld [vmem:[%s164 + $0x90] sm:$0xf]
      %v214 = vld [vmem:[%s164 + $0x94] sm:$0xf]
      %v215 = vld [vmem:[%s164 + $0x98] sm:$0xf]
      %v216 = vld [vmem:[%s164 + $0x9c] sm:$0xf]
      %v217 = vld [vmem:[%s164 + $0xa0] sm:$0xf]
      %v218 = vld [vmem:[%s164 + $0xa4] sm:$0xf]
      %v219 = vld [vmem:[%s164 + $0xa8] sm:$0xf]
      %v220 = vld [vmem:[%s164 + $0xac] sm:$0xf]
      %v221 = vld [vmem:[%s164 + $0xb0] sm:$0xf]
      %v222 = vld [vmem:[%s164 + $0xb4] sm:$0xf]
      %v223 = vld [vmem:[%s164 + $0xb8] sm:$0xf]
      %v224 = vld [vmem:[%s164 + $0xbc] sm:$0xf]
      %v225 = vld [vmem:[%s164 + $0xc0] sm:$0xf]
      %v226 = vld [vmem:[%s164 + $0xc4] sm:$0xf]
      %v227 = vld [vmem:[%s164 + $0xc8] sm:$0xf]
      %v228 = vld [vmem:[%s164 + $0xcc] sm:$0xf]
      %v229 = vld [vmem:[%s164 + $0xd0] sm:$0xf]
      %v230 = vld [vmem:[%s164 + $0xd4] sm:$0xf]
      %v231 = vld [vmem:[%s164 + $0xd8] sm:$0xf]
      %v232 = vld [vmem:[%s164 + $0xdc] sm:$0xf]
      %v233 = vld [vmem:[%s164 + $0xe0] sm:$0xf]
      %v234 = vld [vmem:[%s164 + $0xe4] sm:$0xf]
      %v235 = vld [vmem:[%s164 + $0xe8] sm:$0xf]
      %v236 = vld [vmem:[%s164 + $0xec] sm:$0xf]
      %v237 = vld [vmem:[%s164 + $0xf0] sm:$0xf]
      %v238 = vld [vmem:[%s164 + $0xf4] sm:$0xf]
      %v239 = vld [vmem:[%s164 + $0xf8] sm:$0xf]
      %v240 = vld [vmem:[%s164 + $0xfc] sm:$0xf]
      %v241 = vld [vmem:[%s164 + $0x100] sm:$0xf]
      %v242 = vld [vmem:[%s164 + $0x104] sm:$0xf]
      %v243 = vld [vmem:[%s164 + $0x108] sm:$0xf]
      %v244 = vld [vmem:[%s164 + $0x10c] sm:$0xf]
      %v245 = vld [vmem:[%s164 + $0x110] sm:$0xf]
      %v246 = vld [vmem:[%s164 + $0x114] sm:$0xf]
      %v247 = vld [vmem:[%s164 + $0x118] sm:$0xf]
      %v248 = vld [vmem:[%s164 + $0x11c] sm:$0xf]
      %v249 = vld [vmem:[%s164 + $0x120] sm:$0xf]
      %v250 = vld [vmem:[%s164 + $0x124] sm:$0xf]
      %v251 = vld [vmem:[%s164 + $0x128] sm:$0xf]
      %v252 = vld [vmem:[%s164 + $0x12c] sm:$0xf]
      %v253 = vld [vmem:[%s164 + $0x130] sm:$0xf]
      %v254 = vld [vmem:[%s164 + $0x134] sm:$0xf]
      %v255 = vld [vmem:[%s164 + $0x138] sm:$0xf]
      %v256 = vld [vmem:[%s164 + $0x13c] sm:$0xf]
      %v257 = vld [vmem:[%s164 + $0x140] sm:$0xf]
      %v258 = vld [vmem:[%s164 + $0x144] sm:$0xf]
      %v259 = vld [vmem:[%s164 + $0x148] sm:$0xf]
      %v260 = vld [vmem:[%s164 + $0x14c] sm:$0xf]
      %v261 = vld [vmem:[%s164 + $0x150] sm:$0xf]
      %v262 = vld [vmem:[%s164 + $0x154] sm:$0xf]
      %v263 = vld [vmem:[%s164 + $0x158] sm:$0xf]
      %v264 = vld [vmem:[%s164 + $0x15c] sm:$0xf]
      %v265 = vld [vmem:[%s164 + $0x160] sm:$0xf]
      %v266 = vld [vmem:[%s164 + $0x164] sm:$0xf]
      %v267 = vld [vmem:[%s164 + $0x168] sm:$0xf]
      %v268 = vld [vmem:[%s164 + $0x16c] sm:$0xf]
      %v269 = vld [vmem:[%s164 + $0x170] sm:$0xf]
      %v270 = vld [vmem:[%s164 + $0x174] sm:$0xf]
      %v271 = vld [vmem:[%s164 + $0x178] sm:$0xf]
      %v272 = vld [vmem:[%s164 + $0x17c] sm:$0xf]
      %v273 = vld [vmem:[%s164 + $0x180] sm:$0xf]
      %v274 = vld [vmem:[%s164 + $0x184] sm:$0xf]
      %v275 = vld [vmem:[%s164 + $0x188] sm:$0xf]
      %v276 = vld [vmem:[%s164 + $0x18c] sm:$0xf]
      %v277 = vld [vmem:[%s164 + $0x190] sm:$0xf]
      %v278 = vld [vmem:[%s164 + $0x194] sm:$0xf]
      %v279 = vld [vmem:[%s164 + $0x198] sm:$0xf]
      %v280 = vld [vmem:[%s164 + $0x19c] sm:$0xf]
      %v281 = vld [vmem:[%s164 + $0x1a0] sm:$0xf]
      %v282 = vld [vmem:[%s164 + $0x1a4] sm:$0xf]
      %v283 = vld [vmem:[%s164 + $0x1a8] sm:$0xf]
      %v284 = vld [vmem:[%s164 + $0x1ac] sm:$0xf]
      %v285 = vld [vmem:[%s164 + $0x1b0] sm:$0xf]
      %v286 = vld [vmem:[%s164 + $0x1b4] sm:$0xf]
      %v287 = vld [vmem:[%s164 + $0x1b8] sm:$0xf]
      %v288 = vld [vmem:[%s164 + $0x1bc] sm:$0xf]
      %v289 = vld [vmem:[%s164 + $0x1c0] sm:$0xf]
      %v290 = vld [vmem:[%s164 + $0x1c4] sm:$0xf]
      %v291 = vld [vmem:[%s164 + $0x1c8] sm:$0xf]
      %v292 = vld [vmem:[%s164 + $0x1cc] sm:$0xf]
      %v293 = vld [vmem:[%s164 + $0x1d0] sm:$0xf]
      %v294 = vld [vmem:[%s164 + $0x1d4] sm:$0xf]
      %v295 = vld [vmem:[%s164 + $0x1d8] sm:$0xf]
      %v296 = vld [vmem:[%s164 + $0x1dc] sm:$0xf]
      %v297 = vld [vmem:[%s164 + $0x1e0] sm:$0xf]
      %v298 = vld [vmem:[%s164 + $0x1e4] sm:$0xf]
      %v299 = vld [vmem:[%s164 + $0x1e8] sm:$0xf]
      %v300 = vld [vmem:[%s164 + $0x1ec] sm:$0xf]
      %v301 = vld [vmem:[%s164 + $0x1f0] sm:$0xf]
      %v302 = vld [vmem:[%s164 + $0x1f4] sm:$0xf]
      %v303 = vld [vmem:[%s164 + $0x1f8] sm:$0xf]
      %v304 = vld [vmem:[%s164 + $0x1fc] sm:$0xf]
      %v305 = vld [vmem:[%s164 + $0x200] sm:$0xf]
      %v306 = vld [vmem:[%s164 + $0x204] sm:$0xf]
      %v307 = vld [vmem:[%s164 + $0x208] sm:$0xf]
      %v308 = vld [vmem:[%s164 + $0x20c] sm:$0xf]
      %v309 = vld [vmem:[%s164 + $0x210] sm:$0xf]
      %v310 = vld [vmem:[%s164 + $0x214] sm:$0xf]
      %v311 = vld [vmem:[%s164 + $0x218] sm:$0xf]
      %v312 = vld [vmem:[%s164 + $0x21c] sm:$0xf]
      %v313 = vld [vmem:[%s164 + $0x220] sm:$0xf]
      %v314 = vld [vmem:[%s164 + $0x224] sm:$0xf]
      %v315 = vld [vmem:[%s164 + $0x228] sm:$0xf]
      %v316 = vld [vmem:[%s164 + $0x22c] sm:$0xf]
      %v317 = vld [vmem:[%s164 + $0x230] sm:$0xf]
      %v318 = vld [vmem:[%s164 + $0x234] sm:$0xf]
      %v319 = vld [vmem:[%s164 + $0x238] sm:$0xf]
      %v320 = vld [vmem:[%s164 + $0x23c] sm:$0xf]
      %v321 = vld [vmem:[%s164 + $0x240] sm:$0xf]
      %v322 = vld [vmem:[%s164 + $0x244] sm:$0xf]
      %v323 = vld [vmem:[%s164 + $0x248] sm:$0xf]
      %v324 = vld [vmem:[%s164 + $0x24c] sm:$0xf]
      %v325 = vld [vmem:[%s164 + $0x250] sm:$0xf]
      %v326 = vld [vmem:[%s164 + $0x254] sm:$0xf]
      %v327 = vld [vmem:[%s164 + $0x258] sm:$0xf]
      %v328 = vld [vmem:[%s164 + $0x25c] sm:$0xf]
      %v329 = vld [vmem:[%s164 + $0x260] sm:$0xf]
      %v330 = vld [vmem:[%s164 + $0x264] sm:$0xf]
      %v331 = vld [vmem:[%s164 + $0x268] sm:$0xf]
      %v332 = vld [vmem:[%s164 + $0x26c] sm:$0xf]
      %v333 = vld [vmem:[%s164 + $0x270] sm:$0xf]
      %v334 = vld [vmem:[%s164 + $0x274] sm:$0xf]
      %v335 = vld [vmem:[%s164 + $0x278] sm:$0xf]
      %v336 = vld [vmem:[%s164 + $0x27c] sm:$0xf]
      %v337 = vld [vmem:[%s164 + $0x280] sm:$0xf]
      %v338 = vld [vmem:[%s164 + $0x284] sm:$0xf]
      %v339 = vld [vmem:[%s164 + $0x288] sm:$0xf]
      %v340 = vld [vmem:[%s164 + $0x28c] sm:$0xf]
      %v341 = vld [vmem:[%s164 + $0x290] sm:$0xf]
      %v342 = vld [vmem:[%s164 + $0x294] sm:$0xf]
      %v343 = vld [vmem:[%s164 + $0x298] sm:$0xf]
      %v344 = vld [vmem:[%s164 + $0x29c] sm:$0xf]
      %v345 = vld [vmem:[%s164 + $0x2a0] sm:$0xf]
      %v346 = vld [vmem:[%s164 + $0x2a4] sm:$0xf]
      %v347 = vld [vmem:[%s164 + $0x2a8] sm:$0xf]
      %v348 = vld [vmem:[%s164 + $0x2ac] sm:$0xf]
      %v349 = vld [vmem:[%s164 + $0x2b0] sm:$0xf]
      %v350 = vld [vmem:[%s164 + $0x2b4] sm:$0xf]
      %v351 = vld [vmem:[%s164 + $0x2b8] sm:$0xf]
      %v352 = vld [vmem:[%s164 + $0x2bc] sm:$0xf]
      %v353 = vld [vmem:[%s164 + $0x2c0] sm:$0xf]
      %v354 = vld [vmem:[%s164 + $0x2c4] sm:$0xf]
      %v355 = vld [vmem:[%s164 + $0x2c8] sm:$0xf]
      %v356 = vld [vmem:[%s164 + $0x2cc] sm:$0xf]
      %v357 = vld [vmem:[%s164 + $0x2d0] sm:$0xf]
      %v358 = vld [vmem:[%s164 + $0x2d4] sm:$0xf]
      %v359 = vld [vmem:[%s164 + $0x2d8] sm:$0xf]
      %v360 = vld [vmem:[%s164 + $0x2dc] sm:$0xf]
      %v361 = vld [vmem:[%s164 + $0x2e0] sm:$0xf]
      %v362 = vld [vmem:[%s164 + $0x2e4] sm:$0xf]
      %v363 = vld [vmem:[%s164 + $0x2e8] sm:$0xf]
      %v364 = vld [vmem:[%s164 + $0x2ec] sm:$0xf]
      %v365 = vld [vmem:[%s164 + $0x2f0] sm:$0xf]
      %v366 = vld [vmem:[%s164 + $0x2f4] sm:$0xf]
      %v367 = vld [vmem:[%s164 + $0x2f8] sm:$0xf]
      %v368 = vld [vmem:[%s164 + $0x2fc] sm:$0xf]
      %v369 = vld [vmem:[%s164 + $0x300] sm:$0xf]
      %v370 = vld [vmem:[%s164 + $0x304] sm:$0xf]
      %v371 = vld [vmem:[%s164 + $0x308] sm:$0xf]
      %v372 = vld [vmem:[%s164 + $0x30c] sm:$0xf]
      %v373 = vld [vmem:[%s164 + $0x310] sm:$0xf]
      %v374 = vld [vmem:[%s164 + $0x314] sm:$0xf]
      %v375 = vld [vmem:[%s164 + $0x318] sm:$0xf]
      %v376 = vld [vmem:[%s164 + $0x31c] sm:$0xf]
      %v377 = vld [vmem:[%s164 + $0x320] sm:$0xf]
      %v378 = vld [vmem:[%s164 + $0x324] sm:$0xf]
      %v379 = vld [vmem:[%s164 + $0x328] sm:$0xf]
      %v380 = vld [vmem:[%s164 + $0x32c] sm:$0xf]
      %v381 = vld [vmem:[%s164 + $0x330] sm:$0xf]
      %v382 = vld [vmem:[%s164 + $0x334] sm:$0xf]
      %v383 = vld [vmem:[%s164 + $0x338] sm:$0xf]
      %v384 = vld [vmem:[%s164 + $0x33c] sm:$0xf]
      %v385 = vld [vmem:[%s164 + $0x340] sm:$0xf]
      %v386 = vld [vmem:[%s164 + $0x344] sm:$0xf]
      %v387 = vld [vmem:[%s164 + $0x348] sm:$0xf]
      %v388 = vld [vmem:[%s164 + $0x34c] sm:$0xf]
      %v389 = vld [vmem:[%s164 + $0x350] sm:$0xf]
      %v390 = vld [vmem:[%s164 + $0x354] sm:$0xf]
      %v391 = vld [vmem:[%s164 + $0x358] sm:$0xf]
      %v392 = vld [vmem:[%s164 + $0x35c] sm:$0xf]
      %v393 = vld [vmem:[%s164 + $0x360] sm:$0xf]
      %v394 = vld [vmem:[%s164 + $0x364] sm:$0xf]
      %v395 = vld [vmem:[%s164 + $0x368] sm:$0xf]
      %v396 = vld [vmem:[%s164 + $0x36c] sm:$0xf]
      %v397 = vld [vmem:[%s164 + $0x370] sm:$0xf]
      %v398 = vld [vmem:[%s164 + $0x374] sm:$0xf]
      %v399 = vld [vmem:[%s164 + $0x378] sm:$0xf]
      %v400 = vld [vmem:[%s164 + $0x37c] sm:$0xf]
      %v401 = vld [vmem:[%s164 + $0x380] sm:$0xf]
      %v402 = vld [vmem:[%s164 + $0x384] sm:$0xf]
      %v403 = vld [vmem:[%s164 + $0x388] sm:$0xf]
      %v404 = vld [vmem:[%s164 + $0x38c] sm:$0xf]
      %v405 = vld [vmem:[%s164 + $0x390] sm:$0xf]
      %v406 = vld [vmem:[%s164 + $0x394] sm:$0xf]
      %v407 = vld [vmem:[%s164 + $0x398] sm:$0xf]
      %v408 = vld [vmem:[%s164 + $0x39c] sm:$0xf]
      %v409 = vld [vmem:[%s164 + $0x3a0] sm:$0xf]
      %v410 = vld [vmem:[%s164 + $0x3a4] sm:$0xf]
      %v411 = vld [vmem:[%s164 + $0x3a8] sm:$0xf]
      %v412 = vld [vmem:[%s164 + $0x3ac] sm:$0xf]
      %v413 = vld [vmem:[%s164 + $0x3b0] sm:$0xf]
      %v414 = vld [vmem:[%s164 + $0x3b4] sm:$0xf]
      %v415 = vld [vmem:[%s164 + $0x3b8] sm:$0xf]
      %v416 = vld [vmem:[%s164 + $0x3bc] sm:$0xf]
      %v417 = vld [vmem:[%s164 + $0x3c0] sm:$0xf]
      %v418 = vld [vmem:[%s164 + $0x3c4] sm:$0xf]
      %v419 = vld [vmem:[%s164 + $0x3c8] sm:$0xf]
      %v420 = vld [vmem:[%s164 + $0x3cc] sm:$0xf]
      %v421 = vld [vmem:[%s164 + $0x3d0] sm:$0xf]
      %v422 = vld [vmem:[%s164 + $0x3d4] sm:$0xf]
      %v423 = vld [vmem:[%s164 + $0x3d8] sm:$0xf]
      %v424 = vld [vmem:[%s164 + $0x3dc] sm:$0xf]
      %v425 = vld [vmem:[%s164 + $0x3e0] sm:$0xf]
      %v426 = vld [vmem:[%s164 + $0x3e4] sm:$0xf]
      %v427 = vld [vmem:[%s164 + $0x3e8] sm:$0xf]
      %v428 = vld [vmem:[%s164 + $0x3ec] sm:$0xf]
      %v429 = vld [vmem:[%s164 + $0x3f0] sm:$0xf]
      %v430 = vld [vmem:[%s164 + $0x3f4] sm:$0xf]
      %v431 = vld [vmem:[%s164 + $0x3f8] sm:$0xf]
      %v432 = vld [vmem:[%s164 + $0x3fc] sm:$0xf]
      %v433 = vld [vmem:[%s1] sm:$0xff]
      %435 = vset.pattern.permute.xlu0 0
      %436 = vperm.xlu0 %435, %v433
      %v437 = vpop.permute.xlu0 %436
      %v447 = vunpack.c.l.b16 %v169
      %v448 = vunpack.c.h.b16 %v169
      %v449 = vunpack.c.l.b16 %v170
      %v450 = vunpack.c.h.b16 %v170
      %v451 = vunpack.c.l.b16 %v171
      %v452 = vunpack.c.h.b16 %v171
      %v453 = vunpack.c.l.b16 %v172
      %v454 = vunpack.c.h.b16 %v172
      %v455 = vunpack.c.l.b16 %v173
      %v456 = vunpack.c.h.b16 %v173
      %v457 = vunpack.c.l.b16 %v174
      %v458 = vunpack.c.h.b16 %v174
      %v459 = vunpack.c.l.b16 %v175
      %v460 = vunpack.c.h.b16 %v175
      %v461 = vunpack.c.l.b16 %v176
      %v462 = vunpack.c.h.b16 %v176
      %v463 = vpack.c.b16 %v447, %v447
      %v464 = vpack.c.b16 %v448, %v448
      %v465 = vpack.c.b16 %v449, %v449
      %v466 = vpack.c.b16 %v450, %v450
      %v467 = vpack.c.b16 %v451, %v451
      %v468 = vpack.c.b16 %v452, %v452
      %v469 = vpack.c.b16 %v453, %v453
      %v470 = vpack.c.b16 %v454, %v454
      %v471 = vpack.c.b16 %v455, %v455
      %v472 = vpack.c.b16 %v456, %v456
      %v473 = vpack.c.b16 %v457, %v457
      %v474 = vpack.c.b16 %v458, %v458
      %v475 = vpack.c.b16 %v459, %v459
      %v476 = vpack.c.b16 %v460, %v460
      %v477 = vpack.c.b16 %v461, %v461
      %v478 = vpack.c.b16 %v462, %v462
      %v751 = vunpack.c.l.b16 %v177
      %v752 = vunpack.c.l.b16 %v178
      %v753 = vunpack.c.l.b16 %v179
      %v754 = vunpack.c.l.b16 %v180
      %v755 = vunpack.c.l.b16 %v181
      %v756 = vunpack.c.l.b16 %v182
      %v757 = vunpack.c.l.b16 %v183
      %v758 = vunpack.c.l.b16 %v184
      %v759 = vunpack.c.l.b16 %v185
      %v760 = vunpack.c.l.b16 %v186
      %v761 = vunpack.c.l.b16 %v187
      %v762 = vunpack.c.l.b16 %v188
      %v763 = vunpack.c.l.b16 %v189
      %v764 = vunpack.c.l.b16 %v190
      %v765 = vunpack.c.l.b16 %v191
      %v766 = vunpack.c.l.b16 %v192
      %v767 = vunpack.c.l.b16 %v193
      %v768 = vunpack.c.l.b16 %v194
      %v769 = vunpack.c.l.b16 %v195
      %v770 = vunpack.c.l.b16 %v196
      %v771 = vunpack.c.l.b16 %v197
      %v772 = vunpack.c.l.b16 %v198
      %v773 = vunpack.c.l.b16 %v199
      %v774 = vunpack.c.l.b16 %v200
      %v775 = vunpack.c.l.b16 %v201
      %v776 = vunpack.c.l.b16 %v202
      %v777 = vunpack.c.l.b16 %v203
      %v778 = vunpack.c.l.b16 %v204
      %v779 = vunpack.c.l.b16 %v205
      %v780 = vunpack.c.l.b16 %v206
      %v781 = vunpack.c.l.b16 %v207
      %v782 = vunpack.c.l.b16 %v208
      %v783 = vunpack.c.l.b16 %v209
      %v784 = vunpack.c.l.b16 %v210
      %v785 = vunpack.c.l.b16 %v211
      %v786 = vunpack.c.l.b16 %v212
      %v787 = vunpack.c.l.b16 %v213
      %v788 = vunpack.c.l.b16 %v214
      %v789 = vunpack.c.l.b16 %v215
      %v790 = vunpack.c.l.b16 %v216
      %v791 = vunpack.c.l.b16 %v217
      %v792 = vunpack.c.l.b16 %v218
      %v793 = vunpack.c.l.b16 %v219
      %v794 = vunpack.c.l.b16 %v220
      %v795 = vunpack.c.l.b16 %v221
      %v796 = vunpack.c.l.b16 %v222
      %v797 = vunpack.c.l.b16 %v223
      %v798 = vunpack.c.l.b16 %v224
      %v799 = vunpack.c.l.b16 %v225
      %v800 = vunpack.c.l.b16 %v226
      %v801 = vunpack.c.l.b16 %v227
      %v802 = vunpack.c.l.b16 %v228
      %v803 = vunpack.c.l.b16 %v229
      %v804 = vunpack.c.l.b16 %v230
      %v805 = vunpack.c.l.b16 %v231
      %v806 = vunpack.c.l.b16 %v232
      %v807 = vunpack.c.l.b16 %v233
      %v808 = vunpack.c.l.b16 %v234
      %v809 = vunpack.c.l.b16 %v235
      %v810 = vunpack.c.l.b16 %v236
      %v811 = vunpack.c.l.b16 %v237
      %v812 = vunpack.c.l.b16 %v238
      %v813 = vunpack.c.l.b16 %v239
      %v814 = vunpack.c.l.b16 %v240
      %v815 = vunpack.c.l.b16 %v241
      %v816 = vunpack.c.l.b16 %v242
      %v817 = vunpack.c.l.b16 %v243
      %v818 = vunpack.c.l.b16 %v244
      %v819 = vunpack.c.l.b16 %v245
      %v820 = vunpack.c.l.b16 %v246
      %v821 = vunpack.c.l.b16 %v247
      %v822 = vunpack.c.l.b16 %v248
      %v823 = vunpack.c.l.b16 %v249
      %v824 = vunpack.c.l.b16 %v250
      %v825 = vunpack.c.l.b16 %v251
      %v826 = vunpack.c.l.b16 %v252
      %v827 = vunpack.c.l.b16 %v253
      %v828 = vunpack.c.l.b16 %v254
      %v829 = vunpack.c.l.b16 %v255
      %v830 = vunpack.c.l.b16 %v256
      %v831 = vunpack.c.l.b16 %v257
      %v832 = vunpack.c.l.b16 %v258
      %v833 = vunpack.c.l.b16 %v259
      %v834 = vunpack.c.l.b16 %v260
      %v835 = vunpack.c.l.b16 %v261
      %v836 = vunpack.c.l.b16 %v262
      %v837 = vunpack.c.l.b16 %v263
      %v838 = vunpack.c.l.b16 %v264
      %v839 = vunpack.c.l.b16 %v265
      %v840 = vunpack.c.l.b16 %v266
      %v841 = vunpack.c.l.b16 %v267
      %v842 = vunpack.c.l.b16 %v268
      %v843 = vunpack.c.l.b16 %v269
      %v844 = vunpack.c.l.b16 %v270
      %v845 = vunpack.c.l.b16 %v271
      %v846 = vunpack.c.l.b16 %v272
      %v847 = vunpack.c.l.b16 %v273
      %v848 = vunpack.c.l.b16 %v274
      %v849 = vunpack.c.l.b16 %v275
      %v850 = vunpack.c.l.b16 %v276
      %v851 = vunpack.c.l.b16 %v277
      %v852 = vunpack.c.l.b16 %v278
      %v853 = vunpack.c.l.b16 %v279
      %v854 = vunpack.c.l.b16 %v280
      %v855 = vunpack.c.l.b16 %v281
      %v856 = vunpack.c.l.b16 %v282
      %v857 = vunpack.c.l.b16 %v283
      %v858 = vunpack.c.l.b16 %v284
      %v859 = vunpack.c.l.b16 %v285
      %v860 = vunpack.c.l.b16 %v286
      %v861 = vunpack.c.l.b16 %v287
      %v862 = vunpack.c.l.b16 %v288
      %v863 = vunpack.c.l.b16 %v289
      %v864 = vunpack.c.l.b16 %v290
      %v865 = vunpack.c.l.b16 %v291
      %v866 = vunpack.c.l.b16 %v292
      %v867 = vunpack.c.l.b16 %v293
      %v868 = vunpack.c.l.b16 %v294
      %v869 = vunpack.c.l.b16 %v295
      %v870 = vunpack.c.l.b16 %v296
      %v871 = vunpack.c.l.b16 %v297
      %v872 = vunpack.c.l.b16 %v298
      %v873 = vunpack.c.l.b16 %v299
      %v874 = vunpack.c.l.b16 %v300
      %v875 = vunpack.c.l.b16 %v301
      %v876 = vunpack.c.l.b16 %v302
      %v877 = vunpack.c.l.b16 %v303
      %v878 = vunpack.c.l.b16 %v304
      %v879 = vunpack.c.l.b16 %v305
      %v880 = vunpack.c.l.b16 %v306
      %v881 = vunpack.c.l.b16 %v307
      %v882 = vunpack.c.l.b16 %v308
      %v883 = vunpack.c.l.b16 %v309
      %v884 = vunpack.c.l.b16 %v310
      %v885 = vunpack.c.l.b16 %v311
      %v886 = vunpack.c.l.b16 %v312
      %v887 = vunpack.c.l.b16 %v313
      %v888 = vunpack.c.l.b16 %v314
      %v889 = vunpack.c.l.b16 %v315
      %v890 = vunpack.c.l.b16 %v316
      %v891 = vunpack.c.l.b16 %v317
      %v892 = vunpack.c.l.b16 %v318
      %v893 = vunpack.c.l.b16 %v319
      %v894 = vunpack.c.l.b16 %v320
      %v895 = vunpack.c.l.b16 %v321
      %v896 = vunpack.c.l.b16 %v322
      %v897 = vunpack.c.l.b16 %v323
      %v898 = vunpack.c.l.b16 %v324
      %v899 = vunpack.c.l.b16 %v325
      %v900 = vunpack.c.l.b16 %v326
      %v901 = vunpack.c.l.b16 %v327
      %v902 = vunpack.c.l.b16 %v328
      %v903 = vunpack.c.l.b16 %v329
      %v904 = vunpack.c.l.b16 %v330
      %v905 = vunpack.c.l.b16 %v331
      %v906 = vunpack.c.l.b16 %v332
      %v907 = vunpack.c.l.b16 %v333
      %v908 = vunpack.c.l.b16 %v334
      %v909 = vunpack.c.l.b16 %v335
      %v910 = vunpack.c.l.b16 %v336
      %v911 = vunpack.c.l.b16 %v337
      %v912 = vunpack.c.l.b16 %v338
      %v913 = vunpack.c.l.b16 %v339
      %v914 = vunpack.c.l.b16 %v340
      %v915 = vunpack.c.l.b16 %v341
      %v916 = vunpack.c.l.b16 %v342
      %v917 = vunpack.c.l.b16 %v343
      %v918 = vunpack.c.l.b16 %v344
      %v919 = vunpack.c.l.b16 %v345
      %v920 = vunpack.c.l.b16 %v346
      %v921 = vunpack.c.l.b16 %v347
      %v922 = vunpack.c.l.b16 %v348
      %v923 = vunpack.c.l.b16 %v349
      %v924 = vunpack.c.l.b16 %v350
      %v925 = vunpack.c.l.b16 %v351
      %v926 = vunpack.c.l.b16 %v352
      %v927 = vunpack.c.l.b16 %v353
      %v928 = vunpack.c.l.b16 %v354
      %v929 = vunpack.c.l.b16 %v355
      %v930 = vunpack.c.l.b16 %v356
      %v931 = vunpack.c.l.b16 %v357
      %v932 = vunpack.c.l.b16 %v358
      %v933 = vunpack.c.l.b16 %v359
      %v934 = vunpack.c.l.b16 %v360
      %v935 = vunpack.c.l.b16 %v361
      %v936 = vunpack.c.l.b16 %v362
      %v937 = vunpack.c.l.b16 %v363
      %v938 = vunpack.c.l.b16 %v364
      %v939 = vunpack.c.l.b16 %v365
      %v940 = vunpack.c.l.b16 %v366
      %v941 = vunpack.c.l.b16 %v367
      %v942 = vunpack.c.l.b16 %v368
      %v943 = vunpack.c.l.b16 %v369
      %v944 = vunpack.c.l.b16 %v370
      %v945 = vunpack.c.l.b16 %v371
      %v946 = vunpack.c.l.b16 %v372
      %v947 = vunpack.c.l.b16 %v373
      %v948 = vunpack.c.l.b16 %v374
      %v949 = vunpack.c.l.b16 %v375
      %v950 = vunpack.c.l.b16 %v376
      %v951 = vunpack.c.l.b16 %v377
      %v952 = vunpack.c.l.b16 %v378
      %v953 = vunpack.c.l.b16 %v379
      %v954 = vunpack.c.l.b16 %v380
      %v955 = vunpack.c.l.b16 %v381
      %v956 = vunpack.c.l.b16 %v382
      %v957 = vunpack.c.l.b16 %v383
      %v958 = vunpack.c.l.b16 %v384
      %v959 = vunpack.c.l.b16 %v385
      %v960 = vunpack.c.l.b16 %v386
      %v961 = vunpack.c.l.b16 %v387
      %v962 = vunpack.c.l.b16 %v388
      %v963 = vunpack.c.l.b16 %v389
      %v964 = vunpack.c.l.b16 %v390
      %v965 = vunpack.c.l.b16 %v391
      %v966 = vunpack.c.l.b16 %v392
      %v967 = vunpack.c.l.b16 %v393
      %v968 = vunpack.c.l.b16 %v394
      %v969 = vunpack.c.l.b16 %v395
      %v970 = vunpack.c.l.b16 %v396
      %v971 = vunpack.c.l.b16 %v397
      %v972 = vunpack.c.l.b16 %v398
      %v973 = vunpack.c.l.b16 %v399
      %v974 = vunpack.c.l.b16 %v400
      %v975 = vunpack.c.l.b16 %v401
      %v976 = vunpack.c.l.b16 %v402
      %v977 = vunpack.c.l.b16 %v403
      %v978 = vunpack.c.l.b16 %v404
      %v979 = vunpack.c.l.b16 %v405
      %v980 = vunpack.c.l.b16 %v406
      %v981 = vunpack.c.l.b16 %v407
      %v982 = vunpack.c.l.b16 %v408
      %v983 = vunpack.c.l.b16 %v409
      %v984 = vunpack.c.l.b16 %v410
      %v985 = vunpack.c.l.b16 %v411
      %v986 = vunpack.c.l.b16 %v412
      %v987 = vunpack.c.l.b16 %v413
      %v988 = vunpack.c.l.b16 %v414
      %v989 = vunpack.c.l.b16 %v415
      %v990 = vunpack.c.l.b16 %v416
      %v991 = vunpack.c.l.b16 %v417
      %v992 = vunpack.c.l.b16 %v418
      %v993 = vunpack.c.l.b16 %v419
      %v994 = vunpack.c.l.b16 %v420
      %v995 = vunpack.c.l.b16 %v421
      %v996 = vunpack.c.l.b16 %v422
      %v997 = vunpack.c.l.b16 %v423
      %v998 = vunpack.c.l.b16 %v424
      %v999 = vunpack.c.l.b16 %v425
      %v1000 = vunpack.c.l.b16 %v426
      %v1001 = vunpack.c.l.b16 %v427
      %v1002 = vunpack.c.l.b16 %v428
      %v1003 = vunpack.c.l.b16 %v429
      %v1004 = vunpack.c.l.b16 %v430
      %v1005 = vunpack.c.l.b16 %v431
      %v1006 = vunpack.c.l.b16 %v432
      %v1007 = vpack.c.b16 %v752, %v751
      %v1008 = vpack.c.b16 %v754, %v753
      %v1009 = vpack.c.b16 %v756, %v755
      %v1010 = vpack.c.b16 %v758, %v757
      %v1011 = vpack.c.b16 %v760, %v759
      %v1012 = vpack.c.b16 %v762, %v761
      %v1013 = vpack.c.b16 %v764, %v763
      %v1014 = vpack.c.b16 %v766, %v765
      %v1015 = vpack.c.b16 %v768, %v767
      %v1016 = vpack.c.b16 %v770, %v769
      %v1017 = vpack.c.b16 %v772, %v771
      %v1018 = vpack.c.b16 %v774, %v773
      %v1019 = vpack.c.b16 %v776, %v775
      %v1020 = vpack.c.b16 %v778, %v777
      %v1021 = vpack.c.b16 %v780, %v779
      %v1022 = vpack.c.b16 %v782, %v781
      %v1023 = vpack.c.b16 %v784, %v783
      %v1024 = vpack.c.b16 %v786, %v785
      %v1025 = vpack.c.b16 %v788, %v787
      %v1026 = vpack.c.b16 %v790, %v789
      %v1027 = vpack.c.b16 %v792, %v791
      %v1028 = vpack.c.b16 %v794, %v793
      %v1029 = vpack.c.b16 %v796, %v795
      %v1030 = vpack.c.b16 %v798, %v797
      %v1031 = vpack.c.b16 %v800, %v799
      %v1032 = vpack.c.b16 %v802, %v801
      %v1033 = vpack.c.b16 %v804, %v803
      %v1034 = vpack.c.b16 %v806, %v805
      %v1035 = vpack.c.b16 %v808, %v807
      %v1036 = vpack.c.b16 %v810, %v809
      %v1037 = vpack.c.b16 %v812, %v811
      %v1038 = vpack.c.b16 %v814, %v813
      %v1039 = vpack.c.b16 %v816, %v815
      %v1040 = vpack.c.b16 %v818, %v817
      %v1041 = vpack.c.b16 %v820, %v819
      %v1042 = vpack.c.b16 %v822, %v821
      %v1043 = vpack.c.b16 %v824, %v823
      %v1044 = vpack.c.b16 %v826, %v825
      %v1045 = vpack.c.b16 %v828, %v827
      %v1046 = vpack.c.b16 %v830, %v829
      %v1047 = vpack.c.b16 %v832, %v831
      %v1048 = vpack.c.b16 %v834, %v833
      %v1049 = vpack.c.b16 %v836, %v835
      %v1050 = vpack.c.b16 %v838, %v837
      %v1051 = vpack.c.b16 %v840, %v839
      %v1052 = vpack.c.b16 %v842, %v841
      %v1053 = vpack.c.b16 %v844, %v843
      %v1054 = vpack.c.b16 %v846, %v845
      %v1055 = vpack.c.b16 %v848, %v847
      %v1056 = vpack.c.b16 %v850, %v849
      %v1057 = vpack.c.b16 %v852, %v851
      %v1058 = vpack.c.b16 %v854, %v853
      %v1059 = vpack.c.b16 %v856, %v855
      %v1060 = vpack.c.b16 %v858, %v857
      %v1061 = vpack.c.b16 %v860, %v859
      %v1062 = vpack.c.b16 %v862, %v861
      %v1063 = vpack.c.b16 %v864, %v863
      %v1064 = vpack.c.b16 %v866, %v865
      %v1065 = vpack.c.b16 %v868, %v867
      %v1066 = vpack.c.b16 %v870, %v869
      %v1067 = vpack.c.b16 %v872, %v871
      %v1068 = vpack.c.b16 %v874, %v873
      %v1069 = vpack.c.b16 %v876, %v875
      %v1070 = vpack.c.b16 %v878, %v877
      %v1071 = vpack.c.b16 %v880, %v879
      %v1072 = vpack.c.b16 %v882, %v881
      %v1073 = vpack.c.b16 %v884, %v883
      %v1074 = vpack.c.b16 %v886, %v885
      %v1075 = vpack.c.b16 %v888, %v887
      %v1076 = vpack.c.b16 %v890, %v889
      %v1077 = vpack.c.b16 %v892, %v891
      %v1078 = vpack.c.b16 %v894, %v893
      %v1079 = vpack.c.b16 %v896, %v895
      %v1080 = vpack.c.b16 %v898, %v897
      %v1081 = vpack.c.b16 %v900, %v899
      %v1082 = vpack.c.b16 %v902, %v901
      %v1083 = vpack.c.b16 %v904, %v903
      %v1084 = vpack.c.b16 %v906, %v905
      %v1085 = vpack.c.b16 %v908, %v907
      %v1086 = vpack.c.b16 %v910, %v909
      %v1087 = vpack.c.b16 %v912, %v911
      %v1088 = vpack.c.b16 %v914, %v913
      %v1089 = vpack.c.b16 %v916, %v915
      %v1090 = vpack.c.b16 %v918, %v917
      %v1091 = vpack.c.b16 %v920, %v919
      %v1092 = vpack.c.b16 %v922, %v921
      %v1093 = vpack.c.b16 %v924, %v923
      %v1094 = vpack.c.b16 %v926, %v925
      %v1095 = vpack.c.b16 %v928, %v927
      %v1096 = vpack.c.b16 %v930, %v929
      %v1097 = vpack.c.b16 %v932, %v931
      %v1098 = vpack.c.b16 %v934, %v933
      %v1099 = vpack.c.b16 %v936, %v935
      %v1100 = vpack.c.b16 %v938, %v937
      %v1101 = vpack.c.b16 %v940, %v939
      %v1102 = vpack.c.b16 %v942, %v941
      %v1103 = vpack.c.b16 %v944, %v943
      %v1104 = vpack.c.b16 %v946, %v945
      %v1105 = vpack.c.b16 %v948, %v947
      %v1106 = vpack.c.b16 %v950, %v949
      %v1107 = vpack.c.b16 %v952, %v951
      %v1108 = vpack.c.b16 %v954, %v953
      %v1109 = vpack.c.b16 %v956, %v955
      %v1110 = vpack.c.b16 %v958, %v957
      %v1111 = vpack.c.b16 %v960, %v959
      %v1112 = vpack.c.b16 %v962, %v961
      %v1113 = vpack.c.b16 %v964, %v963
      %v1114 = vpack.c.b16 %v966, %v965
      %v1115 = vpack.c.b16 %v968, %v967
      %v1116 = vpack.c.b16 %v970, %v969
      %v1117 = vpack.c.b16 %v972, %v971
      %v1118 = vpack.c.b16 %v974, %v973
      %v1119 = vpack.c.b16 %v976, %v975
      %v1120 = vpack.c.b16 %v978, %v977
      %v1121 = vpack.c.b16 %v980, %v979
      %v1122 = vpack.c.b16 %v982, %v981
      %v1123 = vpack.c.b16 %v984, %v983
      %v1124 = vpack.c.b16 %v986, %v985
      %v1125 = vpack.c.b16 %v988, %v987
      %v1126 = vpack.c.b16 %v990, %v989
      %v1127 = vpack.c.b16 %v992, %v991
      %v1128 = vpack.c.b16 %v994, %v993
      %v1129 = vpack.c.b16 %v996, %v995
      %v1130 = vpack.c.b16 %v998, %v997
      %v1131 = vpack.c.b16 %v1000, %v999
      %v1132 = vpack.c.b16 %v1002, %v1001
      %v1133 = vpack.c.b16 %v1004, %v1003
      %v1134 = vpack.c.b16 %v1006, %v1005
      %1263 = vmatpush.bf16.msra.mxu0 %v1014
      %1264 = vmatpush.bf16.msra.mxu0 %v1013
      %1265 = vmatpush.bf16.msra.mxu0 %v1012
      %1266 = vmatpush.bf16.msra.mxu0 %v1011
      %1267 = vmatpush.bf16.msra.mxu0 %v1010
      %1268 = vmatpush.bf16.msra.mxu0 %v1009
      %1269 = vmatpush.bf16.msra.mxu0 %v1008
      %1270 = vmatpush.bf16.msra.mxu0 %v1007
      %1271 = vmatmul.bf16.gmra.mxu0 %v463
      %v1272 = vpop.f32.mrf.mxu0
      %v1273 = vadd.f32 %v437, %v1272
      %v1274 = vpop.f32.mrf.mxu0
      %1275 = vdwg.mxu0
      %1276 = vmatpush.bf16.msra.mxu0 %v1022
      %1277 = vmatpush.bf16.msra.mxu0 %v1021
      %1278 = vmatpush.bf16.msra.mxu0 %v1020
      %1279 = vmatpush.bf16.msra.mxu0 %v1019
      %1280 = vmatpush.bf16.msra.mxu0 %v1018
      %1281 = vmatpush.bf16.msra.mxu0 %v1017
      %1282 = vmatpush.bf16.msra.mxu0 %v1016
      %1283 = vmatpush.bf16.msra.mxu0 %v1015
      %1284 = vmatmul.bf16.gmra.mxu0 %v464
      %v1285 = vpop.f32.mrf.mxu0
      %v1286 = vadd.f32 %v1273, %v1285
      %v1287 = vpop.f32.mrf.mxu0
      %1288 = vdwg.mxu0
      %1289 = vmatpush.bf16.msra.mxu0 %v1030
      %1290 = vmatpush.bf16.msra.mxu0 %v1029
      %1291 = vmatpush.bf16.msra.mxu0 %v1028
      %1292 = vmatpush.bf16.msra.mxu0 %v1027
      %1293 = vmatpush.bf16.msra.mxu0 %v1026
      %1294 = vmatpush.bf16.msra.mxu0 %v1025
      %1295 = vmatpush.bf16.msra.mxu0 %v1024
      %1296 = vmatpush.bf16.msra.mxu0 %v1023
      %1297 = vmatmul.bf16.gmra.mxu0 %v465
      %v1298 = vpop.f32.mrf.mxu0
      %v1299 = vadd.f32 %v1286, %v1298
      %v1300 = vpop.f32.mrf.mxu0
      %1301 = vdwg.mxu0
      %1302 = vmatpush.bf16.msra.mxu0 %v1038
      %1303 = vmatpush.bf16.msra.mxu0 %v1037
      %1304 = vmatpush.bf16.msra.mxu0 %v1036
      %1305 = vmatpush.bf16.msra.mxu0 %v1035
      %1306 = vmatpush.bf16.msra.mxu0 %v1034
      %1307 = vmatpush.bf16.msra.mxu0 %v1033
      %1308 = vmatpush.bf16.msra.mxu0 %v1032
      %1309 = vmatpush.bf16.msra.mxu0 %v1031
      %1310 = vmatmul.bf16.gmra.mxu0 %v466
      %v1311 = vpop.f32.mrf.mxu0
      %v1312 = vadd.f32 %v1299, %v1311
      %v1313 = vpop.f32.mrf.mxu0
      %1314 = vdwg.mxu0
      %1315 = vmatpush.bf16.msra.mxu0 %v1046
      %1316 = vmatpush.bf16.msra.mxu0 %v1045
      %1317 = vmatpush.bf16.msra.mxu0 %v1044
      %1318 = vmatpush.bf16.msra.mxu0 %v1043
      %1319 = vmatpush.bf16.msra.mxu0 %v1042
      %1320 = vmatpush.bf16.msra.mxu0 %v1041
      %1321 = vmatpush.bf16.msra.mxu0 %v1040
      %1322 = vmatpush.bf16.msra.mxu0 %v1039
      %1323 = vmatmul.bf16.gmra.mxu0 %v467
      %v1324 = vpop.f32.mrf.mxu0
      %v1325 = vadd.f32 %v1312, %v1324
      %v1326 = vpop.f32.mrf.mxu0
      %1327 = vdwg.mxu0
      %1328 = vmatpush.bf16.msra.mxu0 %v1054
      %1329 = vmatpush.bf16.msra.mxu0 %v1053
      %1330 = vmatpush.bf16.msra.mxu0 %v1052
      %1331 = vmatpush.bf16.msra.mxu0 %v1051
      %1332 = vmatpush.bf16.msra.mxu0 %v1050
      %1333 = vmatpush.bf16.msra.mxu0 %v1049
      %1334 = vmatpush.bf16.msra.mxu0 %v1048
      %1335 = vmatpush.bf16.msra.mxu0 %v1047
      %1336 = vmatmul.bf16.gmra.mxu0 %v468
      %v1337 = vpop.f32.mrf.mxu0
      %v1338 = vadd.f32 %v1325, %v1337
      %v1339 = vpop.f32.mrf.mxu0
      %1340 = vdwg.mxu0
      %1341 = vmatpush.bf16.msra.mxu0 %v1062
      %1342 = vmatpush.bf16.msra.mxu0 %v1061
      %1343 = vmatpush.bf16.msra.mxu0 %v1060
      %1344 = vmatpush.bf16.msra.mxu0 %v1059
      %1345 = vmatpush.bf16.msra.mxu0 %v1058
      %1346 = vmatpush.bf16.msra.mxu0 %v1057
      %1347 = vmatpush.bf16.msra.mxu0 %v1056
      %1348 = vmatpush.bf16.msra.mxu0 %v1055
      %1349 = vmatmul.bf16.gmra.mxu0 %v469
      %v1350 = vpop.f32.mrf.mxu0
      %v1351 = vadd.f32 %v1338, %v1350
      %v1352 = vpop.f32.mrf.mxu0
      %1353 = vdwg.mxu0
      %1354 = vmatpush.bf16.msra.mxu0 %v1070
      %1355 = vmatpush.bf16.msra.mxu0 %v1069
      %1356 = vmatpush.bf16.msra.mxu0 %v1068
      %1357 = vmatpush.bf16.msra.mxu0 %v1067
      %1358 = vmatpush.bf16.msra.mxu0 %v1066
      %1359 = vmatpush.bf16.msra.mxu0 %v1065
      %1360 = vmatpush.bf16.msra.mxu0 %v1064
      %1361 = vmatpush.bf16.msra.mxu0 %v1063
      %1362 = vmatmul.bf16.gmra.mxu0 %v470
      %v1363 = vpop.f32.mrf.mxu0
      %v1364 = vadd.f32 %v1351, %v1363
      %v1365 = vpop.f32.mrf.mxu0
      %1366 = vdwg.mxu0
      %1367 = vmatpush.bf16.msra.mxu0 %v1078
      %1368 = vmatpush.bf16.msra.mxu0 %v1077
      %1369 = vmatpush.bf16.msra.mxu0 %v1076
      %1370 = vmatpush.bf16.msra.mxu0 %v1075
      %1371 = vmatpush.bf16.msra.mxu0 %v1074
      %1372 = vmatpush.bf16.msra.mxu0 %v1073
      %1373 = vmatpush.bf16.msra.mxu0 %v1072
      %1374 = vmatpush.bf16.msra.mxu0 %v1071
      %1375 = vmatmul.bf16.gmra.mxu0 %v471
      %v1376 = vpop.f32.mrf.mxu0
      %v1377 = vadd.f32 %v1364, %v1376
      %v1378 = vpop.f32.mrf.mxu0
      %1379 = vdwg.mxu0
      %1380 = vmatpush.bf16.msra.mxu0 %v1086
      %1381 = vmatpush.bf16.msra.mxu0 %v1085
      %1382 = vmatpush.bf16.msra.mxu0 %v1084
      %1383 = vmatpush.bf16.msra.mxu0 %v1083
      %1384 = vmatpush.bf16.msra.mxu0 %v1082
      %1385 = vmatpush.bf16.msra.mxu0 %v1081
      %1386 = vmatpush.bf16.msra.mxu0 %v1080
      %1387 = vmatpush.bf16.msra.mxu0 %v1079
      %1388 = vmatmul.bf16.gmra.mxu0 %v472
      %v1389 = vpop.f32.mrf.mxu0
      %v1390 = vadd.f32 %v1377, %v1389
      %v1391 = vpop.f32.mrf.mxu0
      %1392 = vdwg.mxu0
      %1393 = vmatpush.bf16.msra.mxu0 %v1094
      %1394 = vmatpush.bf16.msra.mxu0 %v1093
      %1395 = vmatpush.bf16.msra.mxu0 %v1092
      %1396 = vmatpush.bf16.msra.mxu0 %v1091
      %1397 = vmatpush.bf16.msra.mxu0 %v1090
      %1398 = vmatpush.bf16.msra.mxu0 %v1089
      %1399 = vmatpush.bf16.msra.mxu0 %v1088
      %1400 = vmatpush.bf16.msra.mxu0 %v1087
      %1401 = vmatmul.bf16.gmra.mxu0 %v473
      %v1402 = vpop.f32.mrf.mxu0
      %v1403 = vadd.f32 %v1390, %v1402
      %v1404 = vpop.f32.mrf.mxu0
      %1405 = vdwg.mxu0
      %1406 = vmatpush.bf16.msra.mxu0 %v1102
      %1407 = vmatpush.bf16.msra.mxu0 %v1101
      %1408 = vmatpush.bf16.msra.mxu0 %v1100
      %1409 = vmatpush.bf16.msra.mxu0 %v1099
      %1410 = vmatpush.bf16.msra.mxu0 %v1098
      %1411 = vmatpush.bf16.msra.mxu0 %v1097
      %1412 = vmatpush.bf16.msra.mxu0 %v1096
      %1413 = vmatpush.bf16.msra.mxu0 %v1095
      %1414 = vmatmul.bf16.gmra.mxu0 %v474
      %v1415 = vpop.f32.mrf.mxu0
      %v1416 = vadd.f32 %v1403, %v1415
      %v1417 = vpop.f32.mrf.mxu0
      %1418 = vdwg.mxu0
      %1419 = vmatpush.bf16.msra.mxu0 %v1110
      %1420 = vmatpush.bf16.msra.mxu0 %v1109
      %1421 = vmatpush.bf16.msra.mxu0 %v1108
      %1422 = vmatpush.bf16.msra.mxu0 %v1107
      %1423 = vmatpush.bf16.msra.mxu0 %v1106
      %1424 = vmatpush.bf16.msra.mxu0 %v1105
      %1425 = vmatpush.bf16.msra.mxu0 %v1104
      %1426 = vmatpush.bf16.msra.mxu0 %v1103
      %1427 = vmatmul.bf16.gmra.mxu0 %v475
      %v1428 = vpop.f32.mrf.mxu0
      %v1429 = vadd.f32 %v1416, %v1428
      %v1430 = vpop.f32.mrf.mxu0
      %1431 = vdwg.mxu0
      %1432 = vmatpush.bf16.msra.mxu0 %v1118
      %1433 = vmatpush.bf16.msra.mxu0 %v1117
      %1434 = vmatpush.bf16.msra.mxu0 %v1116
      %1435 = vmatpush.bf16.msra.mxu0 %v1115
      %1436 = vmatpush.bf16.msra.mxu0 %v1114
      %1437 = vmatpush.bf16.msra.mxu0 %v1113
      %1438 = vmatpush.bf16.msra.mxu0 %v1112
      %1439 = vmatpush.bf16.msra.mxu0 %v1111
      %1440 = vmatmul.bf16.gmra.mxu0 %v476
      %v1441 = vpop.f32.mrf.mxu0
      %v1442 = vadd.f32 %v1429, %v1441
      %v1443 = vpop.f32.mrf.mxu0
      %1444 = vdwg.mxu0
      %1445 = vmatpush.bf16.msra.mxu0 %v1126
      %1446 = vmatpush.bf16.msra.mxu0 %v1125
      %1447 = vmatpush.bf16.msra.mxu0 %v1124
      %1448 = vmatpush.bf16.msra.mxu0 %v1123
      %1449 = vmatpush.bf16.msra.mxu0 %v1122
      %1450 = vmatpush.bf16.msra.mxu0 %v1121
      %1451 = vmatpush.bf16.msra.mxu0 %v1120
      %1452 = vmatpush.bf16.msra.mxu0 %v1119
      %1453 = vmatmul.bf16.gmra.mxu0 %v477
      %v1454 = vpop.f32.mrf.mxu0
      %v1455 = vadd.f32 %v1442, %v1454
      %v1456 = vpop.f32.mrf.mxu0
      %1457 = vdwg.mxu0
      %1458 = vmatpush.bf16.msra.mxu0 %v1134
      %1459 = vmatpush.bf16.msra.mxu0 %v1133
      %1460 = vmatpush.bf16.msra.mxu0 %v1132
      %1461 = vmatpush.bf16.msra.mxu0 %v1131
      %1462 = vmatpush.bf16.msra.mxu0 %v1130
      %1463 = vmatpush.bf16.msra.mxu0 %v1129
      %1464 = vmatpush.bf16.msra.mxu0 %v1128
      %1465 = vmatpush.bf16.msra.mxu0 %v1127
      %1466 = vmatmul.bf16.gmra.mxu0 %v478
      %v1467 = vpop.f32.mrf.mxu0
      %v1468 = vadd.f32 %v1455, %v1467
      %v1469 = vpop.f32.mrf.mxu0
      %1470 = vdwg.mxu0
      %1471 = vst [vmem:[%s168] sm:$0xff] %v1468
      %p1472 = scmp.lt.s32.totalorder %s14, 1
      %s1473 = scalar_select %p1472, %s14, 1
      %s1474 = smul.addr %s1473, 8
      %s1475 = scalar_lea.vmem %s3, %s1474
      // Predicated region
      $region33: #{adverserial_forward.7} parent=31 // pred_check
        %p1476 = pneg %p100
      $region34: #{adverserial_forward.7} parent=31 // pred_check_branch
        %1478 = sbr.rel (%p1476) target = $region36
      $region35: #{adverserial_forward.7} parent=31 // pred_region
        _
      $region36: #{adverserial_forward.7} parent=31 // pred_fallthru
        _
    $region32: #{adverserial_forward.7} parent=5 // pred_fallthru
      _
    %p1479 = scmp.le.s32.totalorder 2, %s9
    // Predicated region
    $region37: #{adverserial_forward.7} parent=5 // pred_check
      %p1480 = pneg %p1479
    $region38: #{adverserial_forward.7} parent=5 // pred_check_branch
      %1482 = sbr.rel (%p1480) target = $region40
    $region39: #{adverserial_forward.7} parent=5 // pred_region
      %s1483 = ssub.s32 %s9, 2
      // Predicated region
      $region41: #{adverserial_forward.7} parent=39 // pred_check
        %p1484 = pneg %p106
      $region42: #{adverserial_forward.7} parent=39 // pred_check_branch
        %1486 = sbr.rel (%p1484) target = $region44
      $region43: #{adverserial_forward.7} parent=39 // pred_region
        %p1487 = scmp.lt.s32.totalorder %s15, 1
        %s1488 = scalar_select %p1487, %s15, 1
        %s1489 = smul.addr %s1488, 8
        %s1490 = scalar_lea.vmem %s3, %s1489
      $region44: #{adverserial_forward.7} parent=39 // pred_fallthru
        _
    $region40: #{adverserial_forward.7} parent=5 // pred_fallthru
      _
  $region6: #{adverserial_forward.7} parent=0 // loop_footer
    %s13 = sadd.s32 1, %s9
  $region7: #{adverserial_forward.7} parent=0 // loop_footer_branch
    %8 = sbr.rel target = $region3
  $region8: #{adverserial_forward.7} parent=0 // loop_exit
    _

</llo_original>
